<compile_context>
chip_gen: v6e
topology: v6e:2x2x1
jax: 0.10.0
libtpu: 0.0.40
codegen_flags: <defaults>
</compile_context>

<pallas_src>
import jax
import jax.numpy as jnp
from jax.experimental import pallas as pl
from jax.experimental.pallas import tpu as pltpu

# Small, module-consistent synthetic dims.
VOCAB = 128     # vocab_size (synthetic stand-in for BERT's 30522)
EMB = 32        # embedding_dim
HID = 32        # hidden_dim
OUT = 7         # output_dim (7 emotions)
LAYERS = 2      # n_layers
BATCH = 2
SEQ = 8

OUT_PAD = 128   # lane-dense FC output width
BATCH_PAD = 8   # full sublanes

assert 4 * HID == OUT_PAD  # packed bias slab / gate block share the 128-lane width


def _emotion_rnn_kernel(ids_ref,      # SMEM (BP, SEQ) int32 token ids (scalar-prefetched)
                        table0_ref,   # VMEM (VOCAB, 4H) f32: gate-prescaled (emb@Wih0 + b0)
                        w_ref,        # VMEM (4, H, 4H) bf16: [whh0, wih1, whh1, fcw_pad]
                        b_ref,        # VMEM (2, 4H) f32: [b1 (prescaled), fcb_pad]
                        out_ref,      # VMEM (BP, OUT_PAD) f32
                        xg_ref):      # VMEM scratch (BP, 4H) f32: gathered gate pre-acts
    bp, seq = ids_ref.shape
    H = w_ref.shape[1]

    whh0 = w_ref[0]
    wih1 = w_ref[1]
    whh1 = w_ref[2]
    fcw = w_ref[3]
    # Hoist bias broadcasts out of the unrolled time loop (no CSE of broadcasts).
    b_all = b_ref[...]
    b1 = jnp.broadcast_to(b_all[0:1, :], (bp, 4 * H))
    fcb = jnp.broadcast_to(b_all[1:2, :], (bp, out_ref.shape[1]))

    def gate_math(gates, c):
        # Gate pre-activations arrive pre-scaled by [1/2, 1/2, 1, 1/2] per 32-lane
        # gate group, so sigmoid(x) = 0.5*tanh(x/2) + 0.5 costs ONE full-width
        # tanh push; gate order is PyTorch's i, f, g, o.
        th = jnp.tanh(gates)
        sg = 0.5 * th + 0.5
        i = sg[:, 0 * H:1 * H]
        f = sg[:, 1 * H:2 * H]
        g = th[:, 2 * H:3 * H]
        o = sg[:, 3 * H:4 * H]
        c_new = f * c + i * g
        h_new = o * jnp.tanh(c_new)
        return h_new, c_new

    def dot_bf16(x, w):
        # bf16 MXU operands, f32 accumulation; c/h state stays f32.
        return jnp.dot(x.astype(jnp.bfloat16), w, preferred_element_type=jnp.float32)

    zeros = jnp.zeros((bp, H), jnp.float32)
    h0, c0, h1, c1 = zeros, zeros, zeros, zeros

    # SEQ is small & static: full unroll keeps every slice/index static.
    for t in range(seq):
        # In-kernel embedding gather: BP scalar-indexed (1, 4H) row loads from the
        # folded layer-0 table -> (BP, 4H) gate pre-activations for this step.
        # Padded batch rows gather token 0 and carry junk state; harmless (no
        # batch reduction) and sliced off in the wrapper.
        for b in range(bp):
            tok = ids_ref[b, t]
            xg_ref[pl.ds(b, 1), :] = table0_ref[pl.ds(tok, 1), :]
        xg = xg_ref[...]

        if t == 0:
            # h_prev == 0: both recurrent dots vanish.
            h0, c0 = gate_math(xg, c0)
            gates1 = dot_bf16(h0, wih1) + b1
            h1, c1 = gate_math(gates1, c1)
        else:
            # h1_prev @ whh1 depends only on previous-step carries -> sits OFF the
            # critical dependency chain (overlaps with layer-0 work).
            rec1 = dot_bf16(h1, whh1)
            gates0 = xg + dot_bf16(h0, whh0)
            h0, c0 = gate_math(gates0, c0)
            gates1 = dot_bf16(h0, wih1) + rec1 + b1
            h1, c1 = gate_math(gates1, c1)

    # output = fc(dropout(hidden[-1])); dropout is identity in eval mode.
    # Lane-dense (BP, 128) unmasked store; real 7 columns sliced in the wrapper.
    out_ref[...] = dot_bf16(h1, fcw) + fcb


def init_params(key):
    ks = jax.random.split(key, 10)
    scale = 0.1
    return {
        "embedding": scale * jax.random.normal(ks[0], (VOCAB, EMB), jnp.float32),
        # LSTM layer 0 (weights stored transposed: x @ W form)
        "w_ih0": scale * jax.random.normal(ks[1], (EMB, 4 * HID), jnp.float32),
        "w_hh0": scale * jax.random.normal(ks[2], (HID, 4 * HID), jnp.float32),
        "b0": scale * jax.random.normal(ks[3], (1, 4 * HID), jnp.float32),  # b_ih + b_hh folded
        # LSTM layer 1
        "w_ih1": scale * jax.random.normal(ks[4], (HID, 4 * HID), jnp.float32),
        "w_hh1": scale * jax.random.normal(ks[5], (HID, 4 * HID), jnp.float32),
        "b1": scale * jax.random.normal(ks[6], (1, 4 * HID), jnp.float32),
        # FC head
        "fc_w": scale * jax.random.normal(ks[7], (HID, OUT), jnp.float32),
        "fc_b": scale * jax.random.normal(ks[8], (1, OUT), jnp.float32),
    }


def prepare_params(params):
    """One-time fold/pack: everything constant w.r.t. the input tokens."""
    H = HID
    # Per-gate-column prescale so sigmoid(x) == 0.5*tanh(x/2) + 0.5 needs no /2
    # inside the kernel:  [i, f] -> 0.5, [g] -> 1.0, [o] -> 0.5.
    gate_scale = jnp.concatenate(
        [jnp.full((1, H), 0.5, jnp.float32),
         jnp.full((1, H), 0.5, jnp.float32),
         jnp.ones((1, H), jnp.float32),
         jnp.full((1, H), 0.5, jnp.float32)], axis=1)                    # (1, 4H)

    # Fold layer-0 input projection + bias + prescale into the embedding table:
    # a single (VOCAB,EMB)@(EMB,4H) matmul done once, off the recurrent chain.
    table0 = (params["embedding"] @ params["w_ih0"] + params["b0"]) * gate_scale

    def prescale_bf16(w):
        return (w * gate_scale).astype(jnp.bfloat16)

    fcw = jnp.pad(params["fc_w"], ((0, 0), (0, OUT_PAD - OUT)))
    fcb = jnp.pad(params["fc_b"], ((0, 0), (0, OUT_PAD - OUT)))

    # Pack the small constants into two slabs (one bf16, one f32) to cut entry
    # DMA descriptors for a few-microsecond kernel.
    w_slab = jnp.stack([prescale_bf16(params["w_hh0"]),
                        prescale_bf16(params["w_ih1"]),
                        prescale_bf16(params["w_hh1"]),
                        fcw.astype(jnp.bfloat16)], axis=0)               # (4, H, 4H) bf16
    b_slab = jnp.concatenate([params["b1"] * gate_scale, fcb], axis=0)   # (2, 4H) f32

    return {"table0": table0.astype(jnp.float32),
            "w_slab": w_slab,
            "b_slab": b_slab}


@jax.jit
def emotion_rnn_forward(text, prepped):
    B, S = text.shape
    bp = max(BATCH_PAD, ((B + 7) // 8) * 8)
    # Pad batch rows (sublanes) to a full tile of 8; padded rows read token 0.
    ids = jnp.pad(text.astype(jnp.int32), ((0, bp - B), (0, 0)))

    vmem = pl.BlockSpec(memory_space=pltpu.MemorySpace.VMEM)
    out = pl.pallas_call(
        _emotion_rnn_kernel,
        out_shape=jax.ShapeDtypeStruct((bp, OUT_PAD), jnp.float32),
        grid_spec=pltpu.PrefetchScalarGridSpec(
            num_scalar_prefetch=1,          # token ids -> SMEM
            grid=(),                        # grid-less: everything VMEM-resident
            in_specs=[vmem, vmem, vmem],
            out_specs=vmem,
            scratch_shapes=[pltpu.VMEM((bp, 4 * HID), jnp.float32)],
        ),
    )(ids, prepped["table0"], prepped["w_slab"], prepped["b_slab"])
    return out[:B, :OUT]


def emotion_rnn_reference(text, params):
    """Pure-JAX f32 reference with the original PyTorch-module semantics."""
    embedded = jnp.take(params["embedding"], text, axis=0)  # (B, S, E)
    H = HID

    def cell(x, h, c, wih, whh, b):
        gates = x @ wih + h @ whh + b
        i = jax.nn.sigmoid(gates[:, 0 * H:1 * H])
        f = jax.nn.sigmoid(gates[:, 1 * H:2 * H])
        g = jnp.tanh(gates[:, 2 * H:3 * H])
        o = jax.nn.sigmoid(gates[:, 3 * H:4 * H])
        c_new = f * c + i * g
        return o * jnp.tanh(c_new), c_new

    B = text.shape[0]
    h0 = c0 = h1 = c1 = jnp.zeros((B, H), jnp.float32)
    for t in range(text.shape[1]):
        x_t = embedded[:, t, :]
        h0, c0 = cell(x_t, h0, c0, params["w_ih0"], params["w_hh0"], params["b0"])
        h1, c1 = cell(h0, h1, c1, params["w_ih1"], params["w_hh1"], params["b1"])
    return h1 @ params["fc_w"] + params["fc_b"]


if __name__ == "__main__":
    key = jax.random.PRNGKey(0)
    k_param, k_text = jax.random.split(key)
    params = init_params(k_param)
    prepped = prepare_params(params)  # one-time constant folding / packing
    text = jax.random.randint(k_text, (BATCH, SEQ), 0, VOCAB, dtype=jnp.int32)

    out = emotion_rnn_forward(text, prepped)
    out = jax.block_until_ready(out)

    ref = emotion_rnn_reference(text, params)
    assert out.shape == (BATCH, OUT)
    # Tolerance loosened vs. the all-f32 version: MXU operands are bf16
    # (f32 accumulation / f32 state), per the perf review.
    if not jnp.allclose(out, ref, rtol=2e-2, atol=1e-2):
        raise AssertionError("Pallas kernel output does not match reference")

    print("KERNEL_OK")
</pallas_src>

<mosaic_0001>
module attributes {stable_mosaic.version = 11 : i64} {
  func.func @_emotion_rnn_kernel(%arg0: memref<8x8xi32, #tpu.memory_space<smem>>, %arg1: memref<128x128xf32, #tpu.memory_space<vmem>>, %arg2: memref<4x32x128xbf16, #tpu.memory_space<vmem>>, %arg3: memref<2x128xf32, #tpu.memory_space<vmem>>, %arg4: memref<8x128xf32, #tpu.memory_space<vmem>>, %arg5: memref<8x128xf32, #tpu.memory_space<vmem>>) attributes {dimension_semantics = [], scalar_prefetch = 1 : i64, scratch_operands = 1 : i64, tpu.core_type = #tpu.core_type<tc>} {
    %c0 = arith.constant 0 : index
    %c0_0 = arith.constant 0 : index
    %c0_1 = arith.constant 0 : index
    %0 = vector.load %arg2[%c0, %c0_0, %c0_1] : memref<4x32x128xbf16, #tpu.memory_space<vmem>>, vector<1x32x128xbf16>
    %1 = vector.shape_cast %0 : vector<1x32x128xbf16> to vector<32x128xbf16>
    %c1 = arith.constant 1 : index
    %c0_2 = arith.constant 0 : index
    %c0_3 = arith.constant 0 : index
    %2 = vector.load %arg2[%c1, %c0_2, %c0_3] : memref<4x32x128xbf16, #tpu.memory_space<vmem>>, vector<1x32x128xbf16>
    %3 = vector.shape_cast %2 : vector<1x32x128xbf16> to vector<32x128xbf16>
    %c2 = arith.constant 2 : index
    %c0_4 = arith.constant 0 : index
    %c0_5 = arith.constant 0 : index
    %4 = vector.load %arg2[%c2, %c0_4, %c0_5] : memref<4x32x128xbf16, #tpu.memory_space<vmem>>, vector<1x32x128xbf16>
    %5 = vector.shape_cast %4 : vector<1x32x128xbf16> to vector<32x128xbf16>
    %c3 = arith.constant 3 : index
    %c0_6 = arith.constant 0 : index
    %c0_7 = arith.constant 0 : index
    %6 = vector.load %arg2[%c3, %c0_6, %c0_7] : memref<4x32x128xbf16, #tpu.memory_space<vmem>>, vector<1x32x128xbf16>
    %7 = vector.shape_cast %6 : vector<1x32x128xbf16> to vector<32x128xbf16>
    %c0_8 = arith.constant 0 : index
    %c0_9 = arith.constant 0 : index
    %8 = vector.load %arg3[%c0_8, %c0_9] : memref<2x128xf32, #tpu.memory_space<vmem>>, vector<2x128xf32>
    %9 = vector.extract_strided_slice %8 {offsets = [0, 0], sizes = [1, 128], strides = [1, 1]} : vector<2x128xf32> to vector<1x128xf32>
    %10 = vector.shape_cast %9 : vector<1x128xf32> to vector<1x128xf32>
    %11 = vector.broadcast %10 : vector<1x128xf32> to vector<8x128xf32>
    %12 = vector.extract_strided_slice %8 {offsets = [1, 0], sizes = [1, 128], strides = [1, 1]} : vector<2x128xf32> to vector<1x128xf32>
    %13 = vector.shape_cast %12 : vector<1x128xf32> to vector<1x128xf32>
    %14 = vector.broadcast %13 : vector<1x128xf32> to vector<8x128xf32>
    %cst = arith.constant 0.000000e+00 : f32
    %15 = vector.broadcast %cst : f32 to vector<8x32xf32>
    %c0_10 = arith.constant 0 : index
    %c0_11 = arith.constant 0 : index
    %16 = memref.load %arg0[%c0_10, %c0_11] : memref<8x8xi32, #tpu.memory_space<smem>>
    %17 = arith.index_cast %16 : i32 to index
    %c0_12 = arith.constant 0 : index
    %18 = vector.load %arg1[%17, %c0_12] : memref<128x128xf32, #tpu.memory_space<vmem>>, vector<1x128xf32>
    %c0_13 = arith.constant 0 : index
    %c0_14 = arith.constant 0 : index
    %19 = vector.load %arg5[%c0_13, %c0_14] : memref<8x128xf32, #tpu.memory_space<vmem>>, vector<1x128xf32>
    tpu.vector_store %arg5[%c0_13, %c0_14], %18 {strides = array<i32>} : memref<8x128xf32, #tpu.memory_space<vmem>>, vector<1x128xf32>,
    %c1_15 = arith.constant 1 : index
    %c0_16 = arith.constant 0 : index
    %20 = memref.load %arg0[%c1_15, %c0_16] : memref<8x8xi32, #tpu.memory_space<smem>>
    %21 = arith.index_cast %20 : i32 to index
    %c0_17 = arith.constant 0 : index
    %22 = vector.load %arg1[%21, %c0_17] : memref<128x128xf32, #tpu.memory_space<vmem>>, vector<1x128xf32>
    %c1_18 = arith.constant 1 : index
    %c0_19 = arith.constant 0 : index
    %23 = vector.load %arg5[%c1_18, %c0_19] : memref<8x128xf32, #tpu.memory_space<vmem>>, vector<1x128xf32>
    tpu.vector_store %arg5[%c1_18, %c0_19], %22 {strides = array<i32>} : memref<8x128xf32, #tpu.memory_space<vmem>>, vector<1x128xf32>,
    %c2_20 = arith.constant 2 : index
    %c0_21 = arith.constant 0 : index
    %24 = memref.load %arg0[%c2_20, %c0_21] : memref<8x8xi32, #tpu.memory_space<smem>>
    %25 = arith.index_cast %24 : i32 to index
    %c0_22 = arith.constant 0 : index
    %26 = vector.load %arg1[%25, %c0_22] : memref<128x128xf32, #tpu.memory_space<vmem>>, vector<1x128xf32>
    %c2_23 = arith.constant 2 : index
    %c0_24 = arith.constant 0 : index
    %27 = vector.load %arg5[%c2_23, %c0_24] : memref<8x128xf32, #tpu.memory_space<vmem>>, vector<1x128xf32>
    tpu.vector_store %arg5[%c2_23, %c0_24], %26 {strides = array<i32>} : memref<8x128xf32, #tpu.memory_space<vmem>>, vector<1x128xf32>,
    %c3_25 = arith.constant 3 : index
    %c0_26 = arith.constant 0 : index
    %28 = memref.load %arg0[%c3_25, %c0_26] : memref<8x8xi32, #tpu.memory_space<smem>>
    %29 = arith.index_cast %28 : i32 to index
    %c0_27 = arith.constant 0 : index
    %30 = vector.load %arg1[%29, %c0_27] : memref<128x128xf32, #tpu.memory_space<vmem>>, vector<1x128xf32>
    %c3_28 = arith.constant 3 : index
    %c0_29 = arith.constant 0 : index
    %31 = vector.load %arg5[%c3_28, %c0_29] : memref<8x128xf32, #tpu.memory_space<vmem>>, vector<1x128xf32>
    tpu.vector_store %arg5[%c3_28, %c0_29], %30 {strides = array<i32>} : memref<8x128xf32, #tpu.memory_space<vmem>>, vector<1x128xf32>,
    %c4 = arith.constant 4 : index
    %c0_30 = arith.constant 0 : index
    %32 = memref.load %arg0[%c4, %c0_30] : memref<8x8xi32, #tpu.memory_space<smem>>
    %33 = arith.index_cast %32 : i32 to index
    %c0_31 = arith.constant 0 : index
    %34 = vector.load %arg1[%33, %c0_31] : memref<128x128xf32, #tpu.memory_space<vmem>>, vector<1x128xf32>
    %c4_32 = arith.constant 4 : index
    %c0_33 = arith.constant 0 : index
    %35 = vector.load %arg5[%c4_32, %c0_33] : memref<8x128xf32, #tpu.memory_space<vmem>>, vector<1x128xf32>
    tpu.vector_store %arg5[%c4_32, %c0_33], %34 {strides = array<i32>} : memref<8x128xf32, #tpu.memory_space<vmem>>, vector<1x128xf32>,
    %c5 = arith.constant 5 : index
    %c0_34 = arith.constant 0 : index
    %36 = memref.load %arg0[%c5, %c0_34] : memref<8x8xi32, #tpu.memory_space<smem>>
    %37 = arith.index_cast %36 : i32 to index
    %c0_35 = arith.constant 0 : index
    %38 = vector.load %arg1[%37, %c0_35] : memref<128x128xf32, #tpu.memory_space<vmem>>, vector<1x128xf32>
    %c5_36 = arith.constant 5 : index
    %c0_37 = arith.constant 0 : index
    %39 = vector.load %arg5[%c5_36, %c0_37] : memref<8x128xf32, #tpu.memory_space<vmem>>, vector<1x128xf32>
    tpu.vector_store %arg5[%c5_36, %c0_37], %38 {strides = array<i32>} : memref<8x128xf32, #tpu.memory_space<vmem>>, vector<1x128xf32>,
    %c6 = arith.constant 6 : index
    %c0_38 = arith.constant 0 : index
    %40 = memref.load %arg0[%c6, %c0_38] : memref<8x8xi32, #tpu.memory_space<smem>>
    %41 = arith.index_cast %40 : i32 to index
    %c0_39 = arith.constant 0 : index
    %42 = vector.load %arg1[%41, %c0_39] : memref<128x128xf32, #tpu.memory_space<vmem>>, vector<1x128xf32>
    %c6_40 = arith.constant 6 : index
    %c0_41 = arith.constant 0 : index
    %43 = vector.load %arg5[%c6_40, %c0_41] : memref<8x128xf32, #tpu.memory_space<vmem>>, vector<1x128xf32>
    tpu.vector_store %arg5[%c6_40, %c0_41], %42 {strides = array<i32>} : memref<8x128xf32, #tpu.memory_space<vmem>>, vector<1x128xf32>,
    %c7 = arith.constant 7 : index
    %c0_42 = arith.constant 0 : index
    %44 = memref.load %arg0[%c7, %c0_42] : memref<8x8xi32, #tpu.memory_space<smem>>
    %45 = arith.index_cast %44 : i32 to index
    %c0_43 = arith.constant 0 : index
    %46 = vector.load %arg1[%45, %c0_43] : memref<128x128xf32, #tpu.memory_space<vmem>>, vector<1x128xf32>
    %c7_44 = arith.constant 7 : index
    %c0_45 = arith.constant 0 : index
    %47 = vector.load %arg5[%c7_44, %c0_45] : memref<8x128xf32, #tpu.memory_space<vmem>>, vector<1x128xf32>
    tpu.vector_store %arg5[%c7_44, %c0_45], %46 {strides = array<i32>} : memref<8x128xf32, #tpu.memory_space<vmem>>, vector<1x128xf32>,
    %c0_46 = arith.constant 0 : index
    %c0_47 = arith.constant 0 : index
    %48 = vector.load %arg5[%c0_46, %c0_47] : memref<8x128xf32, #tpu.memory_space<vmem>>, vector<8x128xf32>
    %49 = math.tanh %48 : vector<8x128xf32>
    %cst_48 = arith.constant 5.000000e-01 : f32
    %50 = vector.broadcast %cst_48 : f32 to vector<8x128xf32>
    %51 = arith.mulf %50, %49 : vector<8x128xf32>
    %cst_49 = arith.constant 5.000000e-01 : f32
    %52 = vector.broadcast %cst_49 : f32 to vector<8x128xf32>
    %53 = arith.addf %51, %52 : vector<8x128xf32>
    %54 = vector.extract_strided_slice %53 {offsets = [0, 0], sizes = [8, 32], strides = [1, 1]} : vector<8x128xf32> to vector<8x32xf32>
    %55 = vector.extract_strided_slice %53 {offsets = [0, 32], sizes = [8, 32], strides = [1, 1]} : vector<8x128xf32> to vector<8x32xf32>
    %56 = vector.extract_strided_slice %49 {offsets = [0, 64], sizes = [8, 32], strides = [1, 1]} : vector<8x128xf32> to vector<8x32xf32>
    %57 = vector.extract_strided_slice %53 {offsets = [0, 96], sizes = [8, 32], strides = [1, 1]} : vector<8x128xf32> to vector<8x32xf32>
    %58 = arith.mulf %55, %15 : vector<8x32xf32>
    %59 = arith.mulf %54, %56 : vector<8x32xf32>
    %60 = arith.addf %58, %59 : vector<8x32xf32>
    %61 = math.tanh %60 : vector<8x32xf32>
    %62 = arith.mulf %57, %61 : vector<8x32xf32>
    %63 = arith.truncf %62 : vector<8x32xf32> to vector<8x32xbf16>
    %cst_50 = arith.constant dense<0.000000e+00> : vector<8x128xf32>
    %64 = tpu.matmul %63, %3, %cst_50 {dimension_numbers = #tpu.dot_dimension_numbers<[1], [0], [0], [1], [0, 0, 1, 1], [], []>} : vector<8x32xbf16>, vector<32x128xbf16>, vector<8x128xf32> -> vector<8x128xf32>
    %65 = arith.addf %64, %11 : vector<8x128xf32>
    %66 = math.tanh %65 : vector<8x128xf32>
    %cst_51 = arith.constant 5.000000e-01 : f32
    %67 = vector.broadcast %cst_51 : f32 to vector<8x128xf32>
    %68 = arith.mulf %67, %66 : vector<8x128xf32>
    %cst_52 = arith.constant 5.000000e-01 : f32
    %69 = vector.broadcast %cst_52 : f32 to vector<8x128xf32>
    %70 = arith.addf %68, %69 : vector<8x128xf32>
    %71 = vector.extract_strided_slice %70 {offsets = [0, 0], sizes = [8, 32], strides = [1, 1]} : vector<8x128xf32> to vector<8x32xf32>
    %72 = vector.extract_strided_slice %70 {offsets = [0, 32], sizes = [8, 32], strides = [1, 1]} : vector<8x128xf32> to vector<8x32xf32>
    %73 = vector.extract_strided_slice %66 {offsets = [0, 64], sizes = [8, 32], strides = [1, 1]} : vector<8x128xf32> to vector<8x32xf32>
    %74 = vector.extract_strided_slice %70 {offsets = [0, 96], sizes = [8, 32], strides = [1, 1]} : vector<8x128xf32> to vector<8x32xf32>
    %75 = arith.mulf %72, %15 : vector<8x32xf32>
    %76 = arith.mulf %71, %73 : vector<8x32xf32>
    %77 = arith.addf %75, %76 : vector<8x32xf32>
    %78 = math.tanh %77 : vector<8x32xf32>
    %79 = arith.mulf %74, %78 : vector<8x32xf32>
    %c0_53 = arith.constant 0 : index
    %c1_54 = arith.constant 1 : index
    %80 = memref.load %arg0[%c0_53, %c1_54] : memref<8x8xi32, #tpu.memory_space<smem>>
    %81 = arith.index_cast %80 : i32 to index
    %c0_55 = arith.constant 0 : index
    %82 = vector.load %arg1[%81, %c0_55] : memref<128x128xf32, #tpu.memory_space<vmem>>, vector<1x128xf32>
    %c0_56 = arith.constant 0 : index
    %c0_57 = arith.constant 0 : index
    %83 = vector.load %arg5[%c0_56, %c0_57] : memref<8x128xf32, #tpu.memory_space<vmem>>, vector<1x128xf32>
    tpu.vector_store %arg5[%c0_56, %c0_57], %82 {strides = array<i32>} : memref<8x128xf32, #tpu.memory_space<vmem>>, vector<1x128xf32>,
    %c1_58 = arith.constant 1 : index
    %c1_59 = arith.constant 1 : index
    %84 = memref.load %arg0[%c1_58, %c1_59] : memref<8x8xi32, #tpu.memory_space<smem>>
    %85 = arith.index_cast %84 : i32 to index
    %c0_60 = arith.constant 0 : index
    %86 = vector.load %arg1[%85, %c0_60] : memref<128x128xf32, #tpu.memory_space<vmem>>, vector<1x128xf32>
    %c1_61 = arith.constant 1 : index
    %c0_62 = arith.constant 0 : index
    %87 = vector.load %arg5[%c1_61, %c0_62] : memref<8x128xf32, #tpu.memory_space<vmem>>, vector<1x128xf32>
    tpu.vector_store %arg5[%c1_61, %c0_62], %86 {strides = array<i32>} : memref<8x128xf32, #tpu.memory_space<vmem>>, vector<1x128xf32>,
    %c2_63 = arith.constant 2 : index
    %c1_64 = arith.constant 1 : index
    %88 = memref.load %arg0[%c2_63, %c1_64] : memref<8x8xi32, #tpu.memory_space<smem>>
    %89 = arith.index_cast %88 : i32 to index
    %c0_65 = arith.constant 0 : index
    %90 = vector.load %arg1[%89, %c0_65] : memref<128x128xf32, #tpu.memory_space<vmem>>, vector<1x128xf32>
    %c2_66 = arith.constant 2 : index
    %c0_67 = arith.constant 0 : index
    %91 = vector.load %arg5[%c2_66, %c0_67] : memref<8x128xf32, #tpu.memory_space<vmem>>, vector<1x128xf32>
    tpu.vector_store %arg5[%c2_66, %c0_67], %90 {strides = array<i32>} : memref<8x128xf32, #tpu.memory_space<vmem>>, vector<1x128xf32>,
    %c3_68 = arith.constant 3 : index
    %c1_69 = arith.constant 1 : index
    %92 = memref.load %arg0[%c3_68, %c1_69] : memref<8x8xi32, #tpu.memory_space<smem>>
    %93 = arith.index_cast %92 : i32 to index
    %c0_70 = arith.constant 0 : index
    %94 = vector.load %arg1[%93, %c0_70] : memref<128x128xf32, #tpu.memory_space<vmem>>, vector<1x128xf32>
    %c3_71 = arith.constant 3 : index
    %c0_72 = arith.constant 0 : index
    %95 = vector.load %arg5[%c3_71, %c0_72] : memref<8x128xf32, #tpu.memory_space<vmem>>, vector<1x128xf32>
    tpu.vector_store %arg5[%c3_71, %c0_72], %94 {strides = array<i32>} : memref<8x128xf32, #tpu.memory_space<vmem>>, vector<1x128xf32>,
    %c4_73 = arith.constant 4 : index
    %c1_74 = arith.constant 1 : index
    %96 = memref.load %arg0[%c4_73, %c1_74] : memref<8x8xi32, #tpu.memory_space<smem>>
    %97 = arith.index_cast %96 : i32 to index
    %c0_75 = arith.constant 0 : index
    %98 = vector.load %arg1[%97, %c0_75] : memref<128x128xf32, #tpu.memory_space<vmem>>, vector<1x128xf32>
    %c4_76 = arith.constant 4 : index
    %c0_77 = arith.constant 0 : index
    %99 = vector.load %arg5[%c4_76, %c0_77] : memref<8x128xf32, #tpu.memory_space<vmem>>, vector<1x128xf32>
    tpu.vector_store %arg5[%c4_76, %c0_77], %98 {strides = array<i32>} : memref<8x128xf32, #tpu.memory_space<vmem>>, vector<1x128xf32>,
    %c5_78 = arith.constant 5 : index
    %c1_79 = arith.constant 1 : index
    %100 = memref.load %arg0[%c5_78, %c1_79] : memref<8x8xi32, #tpu.memory_space<smem>>
    %101 = arith.index_cast %100 : i32 to index
    %c0_80 = arith.constant 0 : index
    %102 = vector.load %arg1[%101, %c0_80] : memref<128x128xf32, #tpu.memory_space<vmem>>, vector<1x128xf32>
    %c5_81 = arith.constant 5 : index
    %c0_82 = arith.constant 0 : index
    %103 = vector.load %arg5[%c5_81, %c0_82] : memref<8x128xf32, #tpu.memory_space<vmem>>, vector<1x128xf32>
    tpu.vector_store %arg5[%c5_81, %c0_82], %102 {strides = array<i32>} : memref<8x128xf32, #tpu.memory_space<vmem>>, vector<1x128xf32>,
    %c6_83 = arith.constant 6 : index
    %c1_84 = arith.constant 1 : index
    %104 = memref.load %arg0[%c6_83, %c1_84] : memref<8x8xi32, #tpu.memory_space<smem>>
    %105 = arith.index_cast %104 : i32 to index
    %c0_85 = arith.constant 0 : index
    %106 = vector.load %arg1[%105, %c0_85] : memref<128x128xf32, #tpu.memory_space<vmem>>, vector<1x128xf32>
    %c6_86 = arith.constant 6 : index
    %c0_87 = arith.constant 0 : index
    %107 = vector.load %arg5[%c6_86, %c0_87] : memref<8x128xf32, #tpu.memory_space<vmem>>, vector<1x128xf32>
    tpu.vector_store %arg5[%c6_86, %c0_87], %106 {strides = array<i32>} : memref<8x128xf32, #tpu.memory_space<vmem>>, vector<1x128xf32>,
    %c7_88 = arith.constant 7 : index
    %c1_89 = arith.constant 1 : index
    %108 = memref.load %arg0[%c7_88, %c1_89] : memref<8x8xi32, #tpu.memory_space<smem>>
    %109 = arith.index_cast %108 : i32 to index
    %c0_90 = arith.constant 0 : index
    %110 = vector.load %arg1[%109, %c0_90] : memref<128x128xf32, #tpu.memory_space<vmem>>, vector<1x128xf32>
    %c7_91 = arith.constant 7 : index
    %c0_92 = arith.constant 0 : index
    %111 = vector.load %arg5[%c7_91, %c0_92] : memref<8x128xf32, #tpu.memory_space<vmem>>, vector<1x128xf32>
    tpu.vector_store %arg5[%c7_91, %c0_92], %110 {strides = array<i32>} : memref<8x128xf32, #tpu.memory_space<vmem>>, vector<1x128xf32>,
    %c0_93 = arith.constant 0 : index
    %c0_94 = arith.constant 0 : index
    %112 = vector.load %arg5[%c0_93, %c0_94] : memref<8x128xf32, #tpu.memory_space<vmem>>, vector<8x128xf32>
    %113 = arith.truncf %79 : vector<8x32xf32> to vector<8x32xbf16>
    %cst_95 = arith.constant dense<0.000000e+00> : vector<8x128xf32>
    %114 = tpu.matmul %113, %5, %cst_95 {dimension_numbers = #tpu.dot_dimension_numbers<[1], [0], [0], [1], [0, 0, 1, 1], [], []>} : vector<8x32xbf16>, vector<32x128xbf16>, vector<8x128xf32> -> vector<8x128xf32>
    %115 = arith.truncf %62 : vector<8x32xf32> to vector<8x32xbf16>
    %cst_96 = arith.constant dense<0.000000e+00> : vector<8x128xf32>
    %116 = tpu.matmul %115, %1, %cst_96 {dimension_numbers = #tpu.dot_dimension_numbers<[1], [0], [0], [1], [0, 0, 1, 1], [], []>} : vector<8x32xbf16>, vector<32x128xbf16>, vector<8x128xf32> -> vector<8x128xf32>
    %117 = arith.addf %112, %116 : vector<8x128xf32>
    %118 = math.tanh %117 : vector<8x128xf32>
    %cst_97 = arith.constant 5.000000e-01 : f32
    %119 = vector.broadcast %cst_97 : f32 to vector<8x128xf32>
    %120 = arith.mulf %119, %118 : vector<8x128xf32>
    %cst_98 = arith.constant 5.000000e-01 : f32
    %121 = vector.broadcast %cst_98 : f32 to vector<8x128xf32>
    %122 = arith.addf %120, %121 : vector<8x128xf32>
    %123 = vector.extract_strided_slice %122 {offsets = [0, 0], sizes = [8, 32], strides = [1, 1]} : vector<8x128xf32> to vector<8x32xf32>
    %124 = vector.extract_strided_slice %122 {offsets = [0, 32], sizes = [8, 32], strides = [1, 1]} : vector<8x128xf32> to vector<8x32xf32>
    %125 = vector.extract_strided_slice %118 {offsets = [0, 64], sizes = [8, 32], strides = [1, 1]} : vector<8x128xf32> to vector<8x32xf32>
    %126 = vector.extract_strided_slice %122 {offsets = [0, 96], sizes = [8, 32], strides = [1, 1]} : vector<8x128xf32> to vector<8x32xf32>
    %127 = arith.mulf %124, %60 : vector<8x32xf32>
    %128 = arith.mulf %123, %125 : vector<8x32xf32>
    %129 = arith.addf %127, %128 : vector<8x32xf32>
    %130 = math.tanh %129 : vector<8x32xf32>
    %131 = arith.mulf %126, %130 : vector<8x32xf32>
    %132 = arith.truncf %131 : vector<8x32xf32> to vector<8x32xbf16>
    %cst_99 = arith.constant dense<0.000000e+00> : vector<8x128xf32>
    %133 = tpu.matmul %132, %3, %cst_99 {dimension_numbers = #tpu.dot_dimension_numbers<[1], [0], [0], [1], [0, 0, 1, 1], [], []>} : vector<8x32xbf16>, vector<32x128xbf16>, vector<8x128xf32> -> vector<8x128xf32>
    %134 = arith.addf %133, %114 : vector<8x128xf32>
    %135 = arith.addf %134, %11 : vector<8x128xf32>
    %136 = math.tanh %135 : vector<8x128xf32>
    %cst_100 = arith.constant 5.000000e-01 : f32
    %137 = vector.broadcast %cst_100 : f32 to vector<8x128xf32>
    %138 = arith.mulf %137, %136 : vector<8x128xf32>
    %cst_101 = arith.constant 5.000000e-01 : f32
    %139 = vector.broadcast %cst_101 : f32 to vector<8x128xf32>
    %140 = arith.addf %138, %139 : vector<8x128xf32>
    %141 = vector.extract_strided_slice %140 {offsets = [0, 0], sizes = [8, 32], strides = [1, 1]} : vector<8x128xf32> to vector<8x32xf32>
    %142 = vector.extract_strided_slice %140 {offsets = [0, 32], sizes = [8, 32], strides = [1, 1]} : vector<8x128xf32> to vector<8x32xf32>
    %143 = vector.extract_strided_slice %136 {offsets = [0, 64], sizes = [8, 32], strides = [1, 1]} : vector<8x128xf32> to vector<8x32xf32>
    %144 = vector.extract_strided_slice %140 {offsets = [0, 96], sizes = [8, 32], strides = [1, 1]} : vector<8x128xf32> to vector<8x32xf32>
    %145 = arith.mulf %142, %77 : vector<8x32xf32>
    %146 = arith.mulf %141, %143 : vector<8x32xf32>
    %147 = arith.addf %145, %146 : vector<8x32xf32>
    %148 = math.tanh %147 : vector<8x32xf32>
    %149 = arith.mulf %144, %148 : vector<8x32xf32>
    %c0_102 = arith.constant 0 : index
    %c2_103 = arith.constant 2 : index
    %150 = memref.load %arg0[%c0_102, %c2_103] : memref<8x8xi32, #tpu.memory_space<smem>>
    %151 = arith.index_cast %150 : i32 to index
    %c0_104 = arith.constant 0 : index
    %152 = vector.load %arg1[%151, %c0_104] : memref<128x128xf32, #tpu.memory_space<vmem>>, vector<1x128xf32>
    %c0_105 = arith.constant 0 : index
    %c0_106 = arith.constant 0 : index
    %153 = vector.load %arg5[%c0_105, %c0_106] : memref<8x128xf32, #tpu.memory_space<vmem>>, vector<1x128xf32>
    tpu.vector_store %arg5[%c0_105, %c0_106], %152 {strides = array<i32>} : memref<8x128xf32, #tpu.memory_space<vmem>>, vector<1x128xf32>,
    %c1_107 = arith.constant 1 : index
    %c2_108 = arith.constant 2 : index
    %154 = memref.load %arg0[%c1_107, %c2_108] : memref<8x8xi32, #tpu.memory_space<smem>>
    %155 = arith.index_cast %154 : i32 to index
    %c0_109 = arith.constant 0 : index
    %156 = vector.load %arg1[%155, %c0_109] : memref<128x128xf32, #tpu.memory_space<vmem>>, vector<1x128xf32>
    %c1_110 = arith.constant 1 : index
    %c0_111 = arith.constant 0 : index
    %157 = vector.load %arg5[%c1_110, %c0_111] : memref<8x128xf32, #tpu.memory_space<vmem>>, vector<1x128xf32>
    tpu.vector_store %arg5[%c1_110, %c0_111], %156 {strides = array<i32>} : memref<8x128xf32, #tpu.memory_space<vmem>>, vector<1x128xf32>,
    %c2_112 = arith.constant 2 : index
    %c2_113 = arith.constant 2 : index
    %158 = memref.load %arg0[%c2_112, %c2_113] : memref<8x8xi32, #tpu.memory_space<smem>>
    %159 = arith.index_cast %158 : i32 to index
    %c0_114 = arith.constant 0 : index
    %160 = vector.load %arg1[%159, %c0_114] : memref<128x128xf32, #tpu.memory_space<vmem>>, vector<1x128xf32>
    %c2_115 = arith.constant 2 : index
    %c0_116 = arith.constant 0 : index
    %161 = vector.load %arg5[%c2_115, %c0_116] : memref<8x128xf32, #tpu.memory_space<vmem>>, vector<1x128xf32>
    tpu.vector_store %arg5[%c2_115, %c0_116], %160 {strides = array<i32>} : memref<8x128xf32, #tpu.memory_space<vmem>>, vector<1x128xf32>,
    %c3_117 = arith.constant 3 : index
    %c2_118 = arith.constant 2 : index
    %162 = memref.load %arg0[%c3_117, %c2_118] : memref<8x8xi32, #tpu.memory_space<smem>>
    %163 = arith.index_cast %162 : i32 to index
    %c0_119 = arith.constant 0 : index
    %164 = vector.load %arg1[%163, %c0_119] : memref<128x128xf32, #tpu.memory_space<vmem>>, vector<1x128xf32>
    %c3_120 = arith.constant 3 : index
    %c0_121 = arith.constant 0 : index
    %165 = vector.load %arg5[%c3_120, %c0_121] : memref<8x128xf32, #tpu.memory_space<vmem>>, vector<1x128xf32>
    tpu.vector_store %arg5[%c3_120, %c0_121], %164 {strides = array<i32>} : memref<8x128xf32, #tpu.memory_space<vmem>>, vector<1x128xf32>,
    %c4_122 = arith.constant 4 : index
    %c2_123 = arith.constant 2 : index
    %166 = memref.load %arg0[%c4_122, %c2_123] : memref<8x8xi32, #tpu.memory_space<smem>>
    %167 = arith.index_cast %166 : i32 to index
    %c0_124 = arith.constant 0 : index
    %168 = vector.load %arg1[%167, %c0_124] : memref<128x128xf32, #tpu.memory_space<vmem>>, vector<1x128xf32>
    %c4_125 = arith.constant 4 : index
    %c0_126 = arith.constant 0 : index
    %169 = vector.load %arg5[%c4_125, %c0_126] : memref<8x128xf32, #tpu.memory_space<vmem>>, vector<1x128xf32>
    tpu.vector_store %arg5[%c4_125, %c0_126], %168 {strides = array<i32>} : memref<8x128xf32, #tpu.memory_space<vmem>>, vector<1x128xf32>,
    %c5_127 = arith.constant 5 : index
    %c2_128 = arith.constant 2 : index
    %170 = memref.load %arg0[%c5_127, %c2_128] : memref<8x8xi32, #tpu.memory_space<smem>>
    %171 = arith.index_cast %170 : i32 to index
    %c0_129 = arith.constant 0 : index
    %172 = vector.load %arg1[%171, %c0_129] : memref<128x128xf32, #tpu.memory_space<vmem>>, vector<1x128xf32>
    %c5_130 = arith.constant 5 : index
    %c0_131 = arith.constant 0 : index
    %173 = vector.load %arg5[%c5_130, %c0_131] : memref<8x128xf32, #tpu.memory_space<vmem>>, vector<1x128xf32>
    tpu.vector_store %arg5[%c5_130, %c0_131], %172 {strides = array<i32>} : memref<8x128xf32, #tpu.memory_space<vmem>>, vector<1x128xf32>,
    %c6_132 = arith.constant 6 : index
    %c2_133 = arith.constant 2 : index
    %174 = memref.load %arg0[%c6_132, %c2_133] : memref<8x8xi32, #tpu.memory_space<smem>>
    %175 = arith.index_cast %174 : i32 to index
    %c0_134 = arith.constant 0 : index
    %176 = vector.load %arg1[%175, %c0_134] : memref<128x128xf32, #tpu.memory_space<vmem>>, vector<1x128xf32>
    %c6_135 = arith.constant 6 : index
    %c0_136 = arith.constant 0 : index
    %177 = vector.load %arg5[%c6_135, %c0_136] : memref<8x128xf32, #tpu.memory_space<vmem>>, vector<1x128xf32>
    tpu.vector_store %arg5[%c6_135, %c0_136], %176 {strides = array<i32>} : memref<8x128xf32, #tpu.memory_space<vmem>>, vector<1x128xf32>,
    %c7_137 = arith.constant 7 : index
    %c2_138 = arith.constant 2 : index
    %178 = memref.load %arg0[%c7_137, %c2_138] : memref<8x8xi32, #tpu.memory_space<smem>>
    %179 = arith.index_cast %178 : i32 to index
    %c0_139 = arith.constant 0 : index
    %180 = vector.load %arg1[%179, %c0_139] : memref<128x128xf32, #tpu.memory_space<vmem>>, vector<1x128xf32>
    %c7_140 = arith.constant 7 : index
    %c0_141 = arith.constant 0 : index
    %181 = vector.load %arg5[%c7_140, %c0_141] : memref<8x128xf32, #tpu.memory_space<vmem>>, vector<1x128xf32>
    tpu.vector_store %arg5[%c7_140, %c0_141], %180 {strides = array<i32>} : memref<8x128xf32, #tpu.memory_space<vmem>>, vector<1x128xf32>,
    %c0_142 = arith.constant 0 : index
    %c0_143 = arith.constant 0 : index
    %182 = vector.load %arg5[%c0_142, %c0_143] : memref<8x128xf32, #tpu.memory_space<vmem>>, vector<8x128xf32>
    %183 = arith.truncf %149 : vector<8x32xf32> to vector<8x32xbf16>
    %cst_144 = arith.constant dense<0.000000e+00> : vector<8x128xf32>
    %184 = tpu.matmul %183, %5, %cst_144 {dimension_numbers = #tpu.dot_dimension_numbers<[1], [0], [0], [1], [0, 0, 1, 1], [], []>} : vector<8x32xbf16>, vector<32x128xbf16>, vector<8x128xf32> -> vector<8x128xf32>
    %185 = arith.truncf %131 : vector<8x32xf32> to vector<8x32xbf16>
    %cst_145 = arith.constant dense<0.000000e+00> : vector<8x128xf32>
    %186 = tpu.matmul %185, %1, %cst_145 {dimension_numbers = #tpu.dot_dimension_numbers<[1], [0], [0], [1], [0, 0, 1, 1], [], []>} : vector<8x32xbf16>, vector<32x128xbf16>, vector<8x128xf32> -> vector<8x128xf32>
    %187 = arith.addf %182, %186 : vector<8x128xf32>
    %188 = math.tanh %187 : vector<8x128xf32>
    %cst_146 = arith.constant 5.000000e-01 : f32
    %189 = vector.broadcast %cst_146 : f32 to vector<8x128xf32>
    %190 = arith.mulf %189, %188 : vector<8x128xf32>
    %cst_147 = arith.constant 5.000000e-01 : f32
    %191 = vector.broadcast %cst_147 : f32 to vector<8x128xf32>
    %192 = arith.addf %190, %191 : vector<8x128xf32>
    %193 = vector.extract_strided_slice %192 {offsets = [0, 0], sizes = [8, 32], strides = [1, 1]} : vector<8x128xf32> to vector<8x32xf32>
    %194 = vector.extract_strided_slice %192 {offsets = [0, 32], sizes = [8, 32], strides = [1, 1]} : vector<8x128xf32> to vector<8x32xf32>
    %195 = vector.extract_strided_slice %188 {offsets = [0, 64], sizes = [8, 32], strides = [1, 1]} : vector<8x128xf32> to vector<8x32xf32>
    %196 = vector.extract_strided_slice %192 {offsets = [0, 96], sizes = [8, 32], strides = [1, 1]} : vector<8x128xf32> to vector<8x32xf32>
    %197 = arith.mulf %194, %129 : vector<8x32xf32>
    %198 = arith.mulf %193, %195 : vector<8x32xf32>
    %199 = arith.addf %197, %198 : vector<8x32xf32>
    %200 = math.tanh %199 : vector<8x32xf32>
    %201 = arith.mulf %196, %200 : vector<8x32xf32>
    %202 = arith.truncf %201 : vector<8x32xf32> to vector<8x32xbf16>
    %cst_148 = arith.constant dense<0.000000e+00> : vector<8x128xf32>
    %203 = tpu.matmul %202, %3, %cst_148 {dimension_numbers = #tpu.dot_dimension_numbers<[1], [0], [0], [1], [0, 0, 1, 1], [], []>} : vector<8x32xbf16>, vector<32x128xbf16>, vector<8x128xf32> -> vector<8x128xf32>
    %204 = arith.addf %203, %184 : vector<8x128xf32>
    %205 = arith.addf %204, %11 : vector<8x128xf32>
    %206 = math.tanh %205 : vector<8x128xf32>
    %cst_149 = arith.constant 5.000000e-01 : f32
    %207 = vector.broadcast %cst_149 : f32 to vector<8x128xf32>
    %208 = arith.mulf %207, %206 : vector<8x128xf32>
    %cst_150 = arith.constant 5.000000e-01 : f32
    %209 = vector.broadcast %cst_150 : f32 to vector<8x128xf32>
    %210 = arith.addf %208, %209 : vector<8x128xf32>
    %211 = vector.extract_strided_slice %210 {offsets = [0, 0], sizes = [8, 32], strides = [1, 1]} : vector<8x128xf32> to vector<8x32xf32>
    %212 = vector.extract_strided_slice %210 {offsets = [0, 32], sizes = [8, 32], strides = [1, 1]} : vector<8x128xf32> to vector<8x32xf32>
    %213 = vector.extract_strided_slice %206 {offsets = [0, 64], sizes = [8, 32], strides = [1, 1]} : vector<8x128xf32> to vector<8x32xf32>
    %214 = vector.extract_strided_slice %210 {offsets = [0, 96], sizes = [8, 32], strides = [1, 1]} : vector<8x128xf32> to vector<8x32xf32>
    %215 = arith.mulf %212, %147 : vector<8x32xf32>
    %216 = arith.mulf %211, %213 : vector<8x32xf32>
    %217 = arith.addf %215, %216 : vector<8x32xf32>
    %218 = math.tanh %217 : vector<8x32xf32>
    %219 = arith.mulf %214, %218 : vector<8x32xf32>
    %c0_151 = arith.constant 0 : index
    %c3_152 = arith.constant 3 : index
    %220 = memref.load %arg0[%c0_151, %c3_152] : memref<8x8xi32, #tpu.memory_space<smem>>
    %221 = arith.index_cast %220 : i32 to index
    %c0_153 = arith.constant 0 : index
    %222 = vector.load %arg1[%221, %c0_153] : memref<128x128xf32, #tpu.memory_space<vmem>>, vector<1x128xf32>
    %c0_154 = arith.constant 0 : index
    %c0_155 = arith.constant 0 : index
    %223 = vector.load %arg5[%c0_154, %c0_155] : memref<8x128xf32, #tpu.memory_space<vmem>>, vector<1x128xf32>
    tpu.vector_store %arg5[%c0_154, %c0_155], %222 {strides = array<i32>} : memref<8x128xf32, #tpu.memory_space<vmem>>, vector<1x128xf32>,
    %c1_156 = arith.constant 1 : index
    %c3_157 = arith.constant 3 : index
    %224 = memref.load %arg0[%c1_156, %c3_157] : memref<8x8xi32, #tpu.memory_space<smem>>
    %225 = arith.index_cast %224 : i32 to index
    %c0_158 = arith.constant 0 : index
    %226 = vector.load %arg1[%225, %c0_158] : memref<128x128xf32, #tpu.memory_space<vmem>>, vector<1x128xf32>
    %c1_159 = arith.constant 1 : index
    %c0_160 = arith.constant 0 : index
    %227 = vector.load %arg5[%c1_159, %c0_160] : memref<8x128xf32, #tpu.memory_space<vmem>>, vector<1x128xf32>
    tpu.vector_store %arg5[%c1_159, %c0_160], %226 {strides = array<i32>} : memref<8x128xf32, #tpu.memory_space<vmem>>, vector<1x128xf32>,
    %c2_161 = arith.constant 2 : index
    %c3_162 = arith.constant 3 : index
    %228 = memref.load %arg0[%c2_161, %c3_162] : memref<8x8xi32, #tpu.memory_space<smem>>
    %229 = arith.index_cast %228 : i32 to index
    %c0_163 = arith.constant 0 : index
    %230 = vector.load %arg1[%229, %c0_163] : memref<128x128xf32, #tpu.memory_space<vmem>>, vector<1x128xf32>
    %c2_164 = arith.constant 2 : index
    %c0_165 = arith.constant 0 : index
    %231 = vector.load %arg5[%c2_164, %c0_165] : memref<8x128xf32, #tpu.memory_space<vmem>>, vector<1x128xf32>
    tpu.vector_store %arg5[%c2_164, %c0_165], %230 {strides = array<i32>} : memref<8x128xf32, #tpu.memory_space<vmem>>, vector<1x128xf32>,
    %c3_166 = arith.constant 3 : index
    %c3_167 = arith.constant 3 : index
    %232 = memref.load %arg0[%c3_166, %c3_167] : memref<8x8xi32, #tpu.memory_space<smem>>
    %233 = arith.index_cast %232 : i32 to index
    %c0_168 = arith.constant 0 : index
    %234 = vector.load %arg1[%233, %c0_168] : memref<128x128xf32, #tpu.memory_space<vmem>>, vector<1x128xf32>
    %c3_169 = arith.constant 3 : index
    %c0_170 = arith.constant 0 : index
    %235 = vector.load %arg5[%c3_169, %c0_170] : memref<8x128xf32, #tpu.memory_space<vmem>>, vector<1x128xf32>
    tpu.vector_store %arg5[%c3_169, %c0_170], %234 {strides = array<i32>} : memref<8x128xf32, #tpu.memory_space<vmem>>, vector<1x128xf32>,
    %c4_171 = arith.constant 4 : index
    %c3_172 = arith.constant 3 : index
    %236 = memref.load %arg0[%c4_171, %c3_172] : memref<8x8xi32, #tpu.memory_space<smem>>
    %237 = arith.index_cast %236 : i32 to index
    %c0_173 = arith.constant 0 : index
    %238 = vector.load %arg1[%237, %c0_173] : memref<128x128xf32, #tpu.memory_space<vmem>>, vector<1x128xf32>
    %c4_174 = arith.constant 4 : index
    %c0_175 = arith.constant 0 : index
    %239 = vector.load %arg5[%c4_174, %c0_175] : memref<8x128xf32, #tpu.memory_space<vmem>>, vector<1x128xf32>
    tpu.vector_store %arg5[%c4_174, %c0_175], %238 {strides = array<i32>} : memref<8x128xf32, #tpu.memory_space<vmem>>, vector<1x128xf32>,
    %c5_176 = arith.constant 5 : index
    %c3_177 = arith.constant 3 : index
    %240 = memref.load %arg0[%c5_176, %c3_177] : memref<8x8xi32, #tpu.memory_space<smem>>
    %241 = arith.index_cast %240 : i32 to index
    %c0_178 = arith.constant 0 : index
    %242 = vector.load %arg1[%241, %c0_178] : memref<128x128xf32, #tpu.memory_space<vmem>>, vector<1x128xf32>
    %c5_179 = arith.constant 5 : index
    %c0_180 = arith.constant 0 : index
    %243 = vector.load %arg5[%c5_179, %c0_180] : memref<8x128xf32, #tpu.memory_space<vmem>>, vector<1x128xf32>
    tpu.vector_store %arg5[%c5_179, %c0_180], %242 {strides = array<i32>} : memref<8x128xf32, #tpu.memory_space<vmem>>, vector<1x128xf32>,
    %c6_181 = arith.constant 6 : index
    %c3_182 = arith.constant 3 : index
    %244 = memref.load %arg0[%c6_181, %c3_182] : memref<8x8xi32, #tpu.memory_space<smem>>
    %245 = arith.index_cast %244 : i32 to index
    %c0_183 = arith.constant 0 : index
    %246 = vector.load %arg1[%245, %c0_183] : memref<128x128xf32, #tpu.memory_space<vmem>>, vector<1x128xf32>
    %c6_184 = arith.constant 6 : index
    %c0_185 = arith.constant 0 : index
    %247 = vector.load %arg5[%c6_184, %c0_185] : memref<8x128xf32, #tpu.memory_space<vmem>>, vector<1x128xf32>
    tpu.vector_store %arg5[%c6_184, %c0_185], %246 {strides = array<i32>} : memref<8x128xf32, #tpu.memory_space<vmem>>, vector<1x128xf32>,
    %c7_186 = arith.constant 7 : index
    %c3_187 = arith.constant 3 : index
    %248 = memref.load %arg0[%c7_186, %c3_187] : memref<8x8xi32, #tpu.memory_space<smem>>
    %249 = arith.index_cast %248 : i32 to index
    %c0_188 = arith.constant 0 : index
    %250 = vector.load %arg1[%249, %c0_188] : memref<128x128xf32, #tpu.memory_space<vmem>>, vector<1x128xf32>
    %c7_189 = arith.constant 7 : index
    %c0_190 = arith.constant 0 : index
    %251 = vector.load %arg5[%c7_189, %c0_190] : memref<8x128xf32, #tpu.memory_space<vmem>>, vector<1x128xf32>
    tpu.vector_store %arg5[%c7_189, %c0_190], %250 {strides = array<i32>} : memref<8x128xf32, #tpu.memory_space<vmem>>, vector<1x128xf32>,
    %c0_191 = arith.constant 0 : index
    %c0_192 = arith.constant 0 : index
    %252 = vector.load %arg5[%c0_191, %c0_192] : memref<8x128xf32, #tpu.memory_space<vmem>>, vector<8x128xf32>
    %253 = arith.truncf %219 : vector<8x32xf32> to vector<8x32xbf16>
    %cst_193 = arith.constant dense<0.000000e+00> : vector<8x128xf32>
    %254 = tpu.matmul %253, %5, %cst_193 {dimension_numbers = #tpu.dot_dimension_numbers<[1], [0], [0], [1], [0, 0, 1, 1], [], []>} : vector<8x32xbf16>, vector<32x128xbf16>, vector<8x128xf32> -> vector<8x128xf32>
    %255 = arith.truncf %201 : vector<8x32xf32> to vector<8x32xbf16>
    %cst_194 = arith.constant dense<0.000000e+00> : vector<8x128xf32>
    %256 = tpu.matmul %255, %1, %cst_194 {dimension_numbers = #tpu.dot_dimension_numbers<[1], [0], [0], [1], [0, 0, 1, 1], [], []>} : vector<8x32xbf16>, vector<32x128xbf16>, vector<8x128xf32> -> vector<8x128xf32>
    %257 = arith.addf %252, %256 : vector<8x128xf32>
    %258 = math.tanh %257 : vector<8x128xf32>
    %cst_195 = arith.constant 5.000000e-01 : f32
    %259 = vector.broadcast %cst_195 : f32 to vector<8x128xf32>
    %260 = arith.mulf %259, %258 : vector<8x128xf32>
    %cst_196 = arith.constant 5.000000e-01 : f32
    %261 = vector.broadcast %cst_196 : f32 to vector<8x128xf32>
    %262 = arith.addf %260, %261 : vector<8x128xf32>
    %263 = vector.extract_strided_slice %262 {offsets = [0, 0], sizes = [8, 32], strides = [1, 1]} : vector<8x128xf32> to vector<8x32xf32>
    %264 = vector.extract_strided_slice %262 {offsets = [0, 32], sizes = [8, 32], strides = [1, 1]} : vector<8x128xf32> to vector<8x32xf32>
    %265 = vector.extract_strided_slice %258 {offsets = [0, 64], sizes = [8, 32], strides = [1, 1]} : vector<8x128xf32> to vector<8x32xf32>
    %266 = vector.extract_strided_slice %262 {offsets = [0, 96], sizes = [8, 32], strides = [1, 1]} : vector<8x128xf32> to vector<8x32xf32>
    %267 = arith.mulf %264, %199 : vector<8x32xf32>
    %268 = arith.mulf %263, %265 : vector<8x32xf32>
    %269 = arith.addf %267, %268 : vector<8x32xf32>
    %270 = math.tanh %269 : vector<8x32xf32>
    %271 = arith.mulf %266, %270 : vector<8x32xf32>
    %272 = arith.truncf %271 : vector<8x32xf32> to vector<8x32xbf16>
    %cst_197 = arith.constant dense<0.000000e+00> : vector<8x128xf32>
    %273 = tpu.matmul %272, %3, %cst_197 {dimension_numbers = #tpu.dot_dimension_numbers<[1], [0], [0], [1], [0, 0, 1, 1], [], []>} : vector<8x32xbf16>, vector<32x128xbf16>, vector<8x128xf32> -> vector<8x128xf32>
    %274 = arith.addf %273, %254 : vector<8x128xf32>
    %275 = arith.addf %274, %11 : vector<8x128xf32>
    %276 = math.tanh %275 : vector<8x128xf32>
    %cst_198 = arith.constant 5.000000e-01 : f32
    %277 = vector.broadcast %cst_198 : f32 to vector<8x128xf32>
    %278 = arith.mulf %277, %276 : vector<8x128xf32>
    %cst_199 = arith.constant 5.000000e-01 : f32
    %279 = vector.broadcast %cst_199 : f32 to vector<8x128xf32>
    %280 = arith.addf %278, %279 : vector<8x128xf32>
    %281 = vector.extract_strided_slice %280 {offsets = [0, 0], sizes = [8, 32], strides = [1, 1]} : vector<8x128xf32> to vector<8x32xf32>
    %282 = vector.extract_strided_slice %280 {offsets = [0, 32], sizes = [8, 32], strides = [1, 1]} : vector<8x128xf32> to vector<8x32xf32>
    %283 = vector.extract_strided_slice %276 {offsets = [0, 64], sizes = [8, 32], strides = [1, 1]} : vector<8x128xf32> to vector<8x32xf32>
    %284 = vector.extract_strided_slice %280 {offsets = [0, 96], sizes = [8, 32], strides = [1, 1]} : vector<8x128xf32> to vector<8x32xf32>
    %285 = arith.mulf %282, %217 : vector<8x32xf32>
    %286 = arith.mulf %281, %283 : vector<8x32xf32>
    %287 = arith.addf %285, %286 : vector<8x32xf32>
    %288 = math.tanh %287 : vector<8x32xf32>
    %289 = arith.mulf %284, %288 : vector<8x32xf32>
    %c0_200 = arith.constant 0 : index
    %c4_201 = arith.constant 4 : index
    %290 = memref.load %arg0[%c0_200, %c4_201] : memref<8x8xi32, #tpu.memory_space<smem>>
    %291 = arith.index_cast %290 : i32 to index
    %c0_202 = arith.constant 0 : index
    %292 = vector.load %arg1[%291, %c0_202] : memref<128x128xf32, #tpu.memory_space<vmem>>, vector<1x128xf32>
    %c0_203 = arith.constant 0 : index
    %c0_204 = arith.constant 0 : index
    %293 = vector.load %arg5[%c0_203, %c0_204] : memref<8x128xf32, #tpu.memory_space<vmem>>, vector<1x128xf32>
    tpu.vector_store %arg5[%c0_203, %c0_204], %292 {strides = array<i32>} : memref<8x128xf32, #tpu.memory_space<vmem>>, vector<1x128xf32>,
    %c1_205 = arith.constant 1 : index
    %c4_206 = arith.constant 4 : index
    %294 = memref.load %arg0[%c1_205, %c4_206] : memref<8x8xi32, #tpu.memory_space<smem>>
    %295 = arith.index_cast %294 : i32 to index
    %c0_207 = arith.constant 0 : index
    %296 = vector.load %arg1[%295, %c0_207] : memref<128x128xf32, #tpu.memory_space<vmem>>, vector<1x128xf32>
    %c1_208 = arith.constant 1 : index
    %c0_209 = arith.constant 0 : index
    %297 = vector.load %arg5[%c1_208, %c0_209] : memref<8x128xf32, #tpu.memory_space<vmem>>, vector<1x128xf32>
    tpu.vector_store %arg5[%c1_208, %c0_209], %296 {strides = array<i32>} : memref<8x128xf32, #tpu.memory_space<vmem>>, vector<1x128xf32>,
    %c2_210 = arith.constant 2 : index
    %c4_211 = arith.constant 4 : index
    %298 = memref.load %arg0[%c2_210, %c4_211] : memref<8x8xi32, #tpu.memory_space<smem>>
    %299 = arith.index_cast %298 : i32 to index
    %c0_212 = arith.constant 0 : index
    %300 = vector.load %arg1[%299, %c0_212] : memref<128x128xf32, #tpu.memory_space<vmem>>, vector<1x128xf32>
    %c2_213 = arith.constant 2 : index
    %c0_214 = arith.constant 0 : index
    %301 = vector.load %arg5[%c2_213, %c0_214] : memref<8x128xf32, #tpu.memory_space<vmem>>, vector<1x128xf32>
    tpu.vector_store %arg5[%c2_213, %c0_214], %300 {strides = array<i32>} : memref<8x128xf32, #tpu.memory_space<vmem>>, vector<1x128xf32>,
    %c3_215 = arith.constant 3 : index
    %c4_216 = arith.constant 4 : index
    %302 = memref.load %arg0[%c3_215, %c4_216] : memref<8x8xi32, #tpu.memory_space<smem>>
    %303 = arith.index_cast %302 : i32 to index
    %c0_217 = arith.constant 0 : index
    %304 = vector.load %arg1[%303, %c0_217] : memref<128x128xf32, #tpu.memory_space<vmem>>, vector<1x128xf32>
    %c3_218 = arith.constant 3 : index
    %c0_219 = arith.constant 0 : index
    %305 = vector.load %arg5[%c3_218, %c0_219] : memref<8x128xf32, #tpu.memory_space<vmem>>, vector<1x128xf32>
    tpu.vector_store %arg5[%c3_218, %c0_219], %304 {strides = array<i32>} : memref<8x128xf32, #tpu.memory_space<vmem>>, vector<1x128xf32>,
    %c4_220 = arith.constant 4 : index
    %c4_221 = arith.constant 4 : index
    %306 = memref.load %arg0[%c4_220, %c4_221] : memref<8x8xi32, #tpu.memory_space<smem>>
    %307 = arith.index_cast %306 : i32 to index
    %c0_222 = arith.constant 0 : index
    %308 = vector.load %arg1[%307, %c0_222] : memref<128x128xf32, #tpu.memory_space<vmem>>, vector<1x128xf32>
    %c4_223 = arith.constant 4 : index
    %c0_224 = arith.constant 0 : index
    %309 = vector.load %arg5[%c4_223, %c0_224] : memref<8x128xf32, #tpu.memory_space<vmem>>, vector<1x128xf32>
    tpu.vector_store %arg5[%c4_223, %c0_224], %308 {strides = array<i32>} : memref<8x128xf32, #tpu.memory_space<vmem>>, vector<1x128xf32>,
    %c5_225 = arith.constant 5 : index
    %c4_226 = arith.constant 4 : index
    %310 = memref.load %arg0[%c5_225, %c4_226] : memref<8x8xi32, #tpu.memory_space<smem>>
    %311 = arith.index_cast %310 : i32 to index
    %c0_227 = arith.constant 0 : index
    %312 = vector.load %arg1[%311, %c0_227] : memref<128x128xf32, #tpu.memory_space<vmem>>, vector<1x128xf32>
    %c5_228 = arith.constant 5 : index
    %c0_229 = arith.constant 0 : index
    %313 = vector.load %arg5[%c5_228, %c0_229] : memref<8x128xf32, #tpu.memory_space<vmem>>, vector<1x128xf32>
    tpu.vector_store %arg5[%c5_228, %c0_229], %312 {strides = array<i32>} : memref<8x128xf32, #tpu.memory_space<vmem>>, vector<1x128xf32>,
    %c6_230 = arith.constant 6 : index
    %c4_231 = arith.constant 4 : index
    %314 = memref.load %arg0[%c6_230, %c4_231] : memref<8x8xi32, #tpu.memory_space<smem>>
    %315 = arith.index_cast %314 : i32 to index
    %c0_232 = arith.constant 0 : index
    %316 = vector.load %arg1[%315, %c0_232] : memref<128x128xf32, #tpu.memory_space<vmem>>, vector<1x128xf32>
    %c6_233 = arith.constant 6 : index
    %c0_234 = arith.constant 0 : index
    %317 = vector.load %arg5[%c6_233, %c0_234] : memref<8x128xf32, #tpu.memory_space<vmem>>, vector<1x128xf32>
    tpu.vector_store %arg5[%c6_233, %c0_234], %316 {strides = array<i32>} : memref<8x128xf32, #tpu.memory_space<vmem>>, vector<1x128xf32>,
    %c7_235 = arith.constant 7 : index
    %c4_236 = arith.constant 4 : index
    %318 = memref.load %arg0[%c7_235, %c4_236] : memref<8x8xi32, #tpu.memory_space<smem>>
    %319 = arith.index_cast %318 : i32 to index
    %c0_237 = arith.constant 0 : index
    %320 = vector.load %arg1[%319, %c0_237] : memref<128x128xf32, #tpu.memory_space<vmem>>, vector<1x128xf32>
    %c7_238 = arith.constant 7 : index
    %c0_239 = arith.constant 0 : index
    %321 = vector.load %arg5[%c7_238, %c0_239] : memref<8x128xf32, #tpu.memory_space<vmem>>, vector<1x128xf32>
    tpu.vector_store %arg5[%c7_238, %c0_239], %320 {strides = array<i32>} : memref<8x128xf32, #tpu.memory_space<vmem>>, vector<1x128xf32>,
    %c0_240 = arith.constant 0 : index
    %c0_241 = arith.constant 0 : index
    %322 = vector.load %arg5[%c0_240, %c0_241] : memref<8x128xf32, #tpu.memory_space<vmem>>, vector<8x128xf32>
    %323 = arith.truncf %289 : vector<8x32xf32> to vector<8x32xbf16>
    %cst_242 = arith.constant dense<0.000000e+00> : vector<8x128xf32>
    %324 = tpu.matmul %323, %5, %cst_242 {dimension_numbers = #tpu.dot_dimension_numbers<[1], [0], [0], [1], [0, 0, 1, 1], [], []>} : vector<8x32xbf16>, vector<32x128xbf16>, vector<8x128xf32> -> vector<8x128xf32>
    %325 = arith.truncf %271 : vector<8x32xf32> to vector<8x32xbf16>
    %cst_243 = arith.constant dense<0.000000e+00> : vector<8x128xf32>
    %326 = tpu.matmul %325, %1, %cst_243 {dimension_numbers = #tpu.dot_dimension_numbers<[1], [0], [0], [1], [0, 0, 1, 1], [], []>} : vector<8x32xbf16>, vector<32x128xbf16>, vector<8x128xf32> -> vector<8x128xf32>
    %327 = arith.addf %322, %326 : vector<8x128xf32>
    %328 = math.tanh %327 : vector<8x128xf32>
    %cst_244 = arith.constant 5.000000e-01 : f32
    %329 = vector.broadcast %cst_244 : f32 to vector<8x128xf32>
    %330 = arith.mulf %329, %328 : vector<8x128xf32>
    %cst_245 = arith.constant 5.000000e-01 : f32
    %331 = vector.broadcast %cst_245 : f32 to vector<8x128xf32>
    %332 = arith.addf %330, %331 : vector<8x128xf32>
    %333 = vector.extract_strided_slice %332 {offsets = [0, 0], sizes = [8, 32], strides = [1, 1]} : vector<8x128xf32> to vector<8x32xf32>
    %334 = vector.extract_strided_slice %332 {offsets = [0, 32], sizes = [8, 32], strides = [1, 1]} : vector<8x128xf32> to vector<8x32xf32>
    %335 = vector.extract_strided_slice %328 {offsets = [0, 64], sizes = [8, 32], strides = [1, 1]} : vector<8x128xf32> to vector<8x32xf32>
    %336 = vector.extract_strided_slice %332 {offsets = [0, 96], sizes = [8, 32], strides = [1, 1]} : vector<8x128xf32> to vector<8x32xf32>
    %337 = arith.mulf %334, %269 : vector<8x32xf32>
    %338 = arith.mulf %333, %335 : vector<8x32xf32>
    %339 = arith.addf %337, %338 : vector<8x32xf32>
    %340 = math.tanh %339 : vector<8x32xf32>
    %341 = arith.mulf %336, %340 : vector<8x32xf32>
    %342 = arith.truncf %341 : vector<8x32xf32> to vector<8x32xbf16>
    %cst_246 = arith.constant dense<0.000000e+00> : vector<8x128xf32>
    %343 = tpu.matmul %342, %3, %cst_246 {dimension_numbers = #tpu.dot_dimension_numbers<[1], [0], [0], [1], [0, 0, 1, 1], [], []>} : vector<8x32xbf16>, vector<32x128xbf16>, vector<8x128xf32> -> vector<8x128xf32>
    %344 = arith.addf %343, %324 : vector<8x128xf32>
    %345 = arith.addf %344, %11 : vector<8x128xf32>
    %346 = math.tanh %345 : vector<8x128xf32>
    %cst_247 = arith.constant 5.000000e-01 : f32
    %347 = vector.broadcast %cst_247 : f32 to vector<8x128xf32>
    %348 = arith.mulf %347, %346 : vector<8x128xf32>
    %cst_248 = arith.constant 5.000000e-01 : f32
    %349 = vector.broadcast %cst_248 : f32 to vector<8x128xf32>
    %350 = arith.addf %348, %349 : vector<8x128xf32>
    %351 = vector.extract_strided_slice %350 {offsets = [0, 0], sizes = [8, 32], strides = [1, 1]} : vector<8x128xf32> to vector<8x32xf32>
    %352 = vector.extract_strided_slice %350 {offsets = [0, 32], sizes = [8, 32], strides = [1, 1]} : vector<8x128xf32> to vector<8x32xf32>
    %353 = vector.extract_strided_slice %346 {offsets = [0, 64], sizes = [8, 32], strides = [1, 1]} : vector<8x128xf32> to vector<8x32xf32>
    %354 = vector.extract_strided_slice %350 {offsets = [0, 96], sizes = [8, 32], strides = [1, 1]} : vector<8x128xf32> to vector<8x32xf32>
    %355 = arith.mulf %352, %287 : vector<8x32xf32>
    %356 = arith.mulf %351, %353 : vector<8x32xf32>
    %357 = arith.addf %355, %356 : vector<8x32xf32>
    %358 = math.tanh %357 : vector<8x32xf32>
    %359 = arith.mulf %354, %358 : vector<8x32xf32>
    %c0_249 = arith.constant 0 : index
    %c5_250 = arith.constant 5 : index
    %360 = memref.load %arg0[%c0_249, %c5_250] : memref<8x8xi32, #tpu.memory_space<smem>>
    %361 = arith.index_cast %360 : i32 to index
    %c0_251 = arith.constant 0 : index
    %362 = vector.load %arg1[%361, %c0_251] : memref<128x128xf32, #tpu.memory_space<vmem>>, vector<1x128xf32>
    %c0_252 = arith.constant 0 : index
    %c0_253 = arith.constant 0 : index
    %363 = vector.load %arg5[%c0_252, %c0_253] : memref<8x128xf32, #tpu.memory_space<vmem>>, vector<1x128xf32>
    tpu.vector_store %arg5[%c0_252, %c0_253], %362 {strides = array<i32>} : memref<8x128xf32, #tpu.memory_space<vmem>>, vector<1x128xf32>,
    %c1_254 = arith.constant 1 : index
    %c5_255 = arith.constant 5 : index
    %364 = memref.load %arg0[%c1_254, %c5_255] : memref<8x8xi32, #tpu.memory_space<smem>>
    %365 = arith.index_cast %364 : i32 to index
    %c0_256 = arith.constant 0 : index
    %366 = vector.load %arg1[%365, %c0_256] : memref<128x128xf32, #tpu.memory_space<vmem>>, vector<1x128xf32>
    %c1_257 = arith.constant 1 : index
    %c0_258 = arith.constant 0 : index
    %367 = vector.load %arg5[%c1_257, %c0_258] : memref<8x128xf32, #tpu.memory_space<vmem>>, vector<1x128xf32>
    tpu.vector_store %arg5[%c1_257, %c0_258], %366 {strides = array<i32>} : memref<8x128xf32, #tpu.memory_space<vmem>>, vector<1x128xf32>,
    %c2_259 = arith.constant 2 : index
    %c5_260 = arith.constant 5 : index
    %368 = memref.load %arg0[%c2_259, %c5_260] : memref<8x8xi32, #tpu.memory_space<smem>>
    %369 = arith.index_cast %368 : i32 to index
    %c0_261 = arith.constant 0 : index
    %370 = vector.load %arg1[%369, %c0_261] : memref<128x128xf32, #tpu.memory_space<vmem>>, vector<1x128xf32>
    %c2_262 = arith.constant 2 : index
    %c0_263 = arith.constant 0 : index
    %371 = vector.load %arg5[%c2_262, %c0_263] : memref<8x128xf32, #tpu.memory_space<vmem>>, vector<1x128xf32>
    tpu.vector_store %arg5[%c2_262, %c0_263], %370 {strides = array<i32>} : memref<8x128xf32, #tpu.memory_space<vmem>>, vector<1x128xf32>,
    %c3_264 = arith.constant 3 : index
    %c5_265 = arith.constant 5 : index
    %372 = memref.load %arg0[%c3_264, %c5_265] : memref<8x8xi32, #tpu.memory_space<smem>>
    %373 = arith.index_cast %372 : i32 to index
    %c0_266 = arith.constant 0 : index
    %374 = vector.load %arg1[%373, %c0_266] : memref<128x128xf32, #tpu.memory_space<vmem>>, vector<1x128xf32>
    %c3_267 = arith.constant 3 : index
    %c0_268 = arith.constant 0 : index
    %375 = vector.load %arg5[%c3_267, %c0_268] : memref<8x128xf32, #tpu.memory_space<vmem>>, vector<1x128xf32>
    tpu.vector_store %arg5[%c3_267, %c0_268], %374 {strides = array<i32>} : memref<8x128xf32, #tpu.memory_space<vmem>>, vector<1x128xf32>,
    %c4_269 = arith.constant 4 : index
    %c5_270 = arith.constant 5 : index
    %376 = memref.load %arg0[%c4_269, %c5_270] : memref<8x8xi32, #tpu.memory_space<smem>>
    %377 = arith.index_cast %376 : i32 to index
    %c0_271 = arith.constant 0 : index
    %378 = vector.load %arg1[%377, %c0_271] : memref<128x128xf32, #tpu.memory_space<vmem>>, vector<1x128xf32>
    %c4_272 = arith.constant 4 : index
    %c0_273 = arith.constant 0 : index
    %379 = vector.load %arg5[%c4_272, %c0_273] : memref<8x128xf32, #tpu.memory_space<vmem>>, vector<1x128xf32>
    tpu.vector_store %arg5[%c4_272, %c0_273], %378 {strides = array<i32>} : memref<8x128xf32, #tpu.memory_space<vmem>>, vector<1x128xf32>,
    %c5_274 = arith.constant 5 : index
    %c5_275 = arith.constant 5 : index
    %380 = memref.load %arg0[%c5_274, %c5_275] : memref<8x8xi32, #tpu.memory_space<smem>>
    %381 = arith.index_cast %380 : i32 to index
    %c0_276 = arith.constant 0 : index
    %382 = vector.load %arg1[%381, %c0_276] : memref<128x128xf32, #tpu.memory_space<vmem>>, vector<1x128xf32>
    %c5_277 = arith.constant 5 : index
    %c0_278 = arith.constant 0 : index
    %383 = vector.load %arg5[%c5_277, %c0_278] : memref<8x128xf32, #tpu.memory_space<vmem>>, vector<1x128xf32>
    tpu.vector_store %arg5[%c5_277, %c0_278], %382 {strides = array<i32>} : memref<8x128xf32, #tpu.memory_space<vmem>>, vector<1x128xf32>,
    %c6_279 = arith.constant 6 : index
    %c5_280 = arith.constant 5 : index
    %384 = memref.load %arg0[%c6_279, %c5_280] : memref<8x8xi32, #tpu.memory_space<smem>>
    %385 = arith.index_cast %384 : i32 to index
    %c0_281 = arith.constant 0 : index
    %386 = vector.load %arg1[%385, %c0_281] : memref<128x128xf32, #tpu.memory_space<vmem>>, vector<1x128xf32>
    %c6_282 = arith.constant 6 : index
    %c0_283 = arith.constant 0 : index
    %387 = vector.load %arg5[%c6_282, %c0_283] : memref<8x128xf32, #tpu.memory_space<vmem>>, vector<1x128xf32>
    tpu.vector_store %arg5[%c6_282, %c0_283], %386 {strides = array<i32>} : memref<8x128xf32, #tpu.memory_space<vmem>>, vector<1x128xf32>,
    %c7_284 = arith.constant 7 : index
    %c5_285 = arith.constant 5 : index
    %388 = memref.load %arg0[%c7_284, %c5_285] : memref<8x8xi32, #tpu.memory_space<smem>>
    %389 = arith.index_cast %388 : i32 to index
    %c0_286 = arith.constant 0 : index
    %390 = vector.load %arg1[%389, %c0_286] : memref<128x128xf32, #tpu.memory_space<vmem>>, vector<1x128xf32>
    %c7_287 = arith.constant 7 : index
    %c0_288 = arith.constant 0 : index
    %391 = vector.load %arg5[%c7_287, %c0_288] : memref<8x128xf32, #tpu.memory_space<vmem>>, vector<1x128xf32>
    tpu.vector_store %arg5[%c7_287, %c0_288], %390 {strides = array<i32>} : memref<8x128xf32, #tpu.memory_space<vmem>>, vector<1x128xf32>,
    %c0_289 = arith.constant 0 : index
    %c0_290 = arith.constant 0 : index
    %392 = vector.load %arg5[%c0_289, %c0_290] : memref<8x128xf32, #tpu.memory_space<vmem>>, vector<8x128xf32>
    %393 = arith.truncf %359 : vector<8x32xf32> to vector<8x32xbf16>
    %cst_291 = arith.constant dense<0.000000e+00> : vector<8x128xf32>
    %394 = tpu.matmul %393, %5, %cst_291 {dimension_numbers = #tpu.dot_dimension_numbers<[1], [0], [0], [1], [0, 0, 1, 1], [], []>} : vector<8x32xbf16>, vector<32x128xbf16>, vector<8x128xf32> -> vector<8x128xf32>
    %395 = arith.truncf %341 : vector<8x32xf32> to vector<8x32xbf16>
    %cst_292 = arith.constant dense<0.000000e+00> : vector<8x128xf32>
    %396 = tpu.matmul %395, %1, %cst_292 {dimension_numbers = #tpu.dot_dimension_numbers<[1], [0], [0], [1], [0, 0, 1, 1], [], []>} : vector<8x32xbf16>, vector<32x128xbf16>, vector<8x128xf32> -> vector<8x128xf32>
    %397 = arith.addf %392, %396 : vector<8x128xf32>
    %398 = math.tanh %397 : vector<8x128xf32>
    %cst_293 = arith.constant 5.000000e-01 : f32
    %399 = vector.broadcast %cst_293 : f32 to vector<8x128xf32>
    %400 = arith.mulf %399, %398 : vector<8x128xf32>
    %cst_294 = arith.constant 5.000000e-01 : f32
    %401 = vector.broadcast %cst_294 : f32 to vector<8x128xf32>
    %402 = arith.addf %400, %401 : vector<8x128xf32>
    %403 = vector.extract_strided_slice %402 {offsets = [0, 0], sizes = [8, 32], strides = [1, 1]} : vector<8x128xf32> to vector<8x32xf32>
    %404 = vector.extract_strided_slice %402 {offsets = [0, 32], sizes = [8, 32], strides = [1, 1]} : vector<8x128xf32> to vector<8x32xf32>
    %405 = vector.extract_strided_slice %398 {offsets = [0, 64], sizes = [8, 32], strides = [1, 1]} : vector<8x128xf32> to vector<8x32xf32>
    %406 = vector.extract_strided_slice %402 {offsets = [0, 96], sizes = [8, 32], strides = [1, 1]} : vector<8x128xf32> to vector<8x32xf32>
    %407 = arith.mulf %404, %339 : vector<8x32xf32>
    %408 = arith.mulf %403, %405 : vector<8x32xf32>
    %409 = arith.addf %407, %408 : vector<8x32xf32>
    %410 = math.tanh %409 : vector<8x32xf32>
    %411 = arith.mulf %406, %410 : vector<8x32xf32>
    %412 = arith.truncf %411 : vector<8x32xf32> to vector<8x32xbf16>
    %cst_295 = arith.constant dense<0.000000e+00> : vector<8x128xf32>
    %413 = tpu.matmul %412, %3, %cst_295 {dimension_numbers = #tpu.dot_dimension_numbers<[1], [0], [0], [1], [0, 0, 1, 1], [], []>} : vector<8x32xbf16>, vector<32x128xbf16>, vector<8x128xf32> -> vector<8x128xf32>
    %414 = arith.addf %413, %394 : vector<8x128xf32>
    %415 = arith.addf %414, %11 : vector<8x128xf32>
    %416 = math.tanh %415 : vector<8x128xf32>
    %cst_296 = arith.constant 5.000000e-01 : f32
    %417 = vector.broadcast %cst_296 : f32 to vector<8x128xf32>
    %418 = arith.mulf %417, %416 : vector<8x128xf32>
    %cst_297 = arith.constant 5.000000e-01 : f32
    %419 = vector.broadcast %cst_297 : f32 to vector<8x128xf32>
    %420 = arith.addf %418, %419 : vector<8x128xf32>
    %421 = vector.extract_strided_slice %420 {offsets = [0, 0], sizes = [8, 32], strides = [1, 1]} : vector<8x128xf32> to vector<8x32xf32>
    %422 = vector.extract_strided_slice %420 {offsets = [0, 32], sizes = [8, 32], strides = [1, 1]} : vector<8x128xf32> to vector<8x32xf32>
    %423 = vector.extract_strided_slice %416 {offsets = [0, 64], sizes = [8, 32], strides = [1, 1]} : vector<8x128xf32> to vector<8x32xf32>
    %424 = vector.extract_strided_slice %420 {offsets = [0, 96], sizes = [8, 32], strides = [1, 1]} : vector<8x128xf32> to vector<8x32xf32>
    %425 = arith.mulf %422, %357 : vector<8x32xf32>
    %426 = arith.mulf %421, %423 : vector<8x32xf32>
    %427 = arith.addf %425, %426 : vector<8x32xf32>
    %428 = math.tanh %427 : vector<8x32xf32>
    %429 = arith.mulf %424, %428 : vector<8x32xf32>
    %c0_298 = arith.constant 0 : index
    %c6_299 = arith.constant 6 : index
    %430 = memref.load %arg0[%c0_298, %c6_299] : memref<8x8xi32, #tpu.memory_space<smem>>
    %431 = arith.index_cast %430 : i32 to index
    %c0_300 = arith.constant 0 : index
    %432 = vector.load %arg1[%431, %c0_300] : memref<128x128xf32, #tpu.memory_space<vmem>>, vector<1x128xf32>
    %c0_301 = arith.constant 0 : index
    %c0_302 = arith.constant 0 : index
    %433 = vector.load %arg5[%c0_301, %c0_302] : memref<8x128xf32, #tpu.memory_space<vmem>>, vector<1x128xf32>
    tpu.vector_store %arg5[%c0_301, %c0_302], %432 {strides = array<i32>} : memref<8x128xf32, #tpu.memory_space<vmem>>, vector<1x128xf32>,
    %c1_303 = arith.constant 1 : index
    %c6_304 = arith.constant 6 : index
    %434 = memref.load %arg0[%c1_303, %c6_304] : memref<8x8xi32, #tpu.memory_space<smem>>
    %435 = arith.index_cast %434 : i32 to index
    %c0_305 = arith.constant 0 : index
    %436 = vector.load %arg1[%435, %c0_305] : memref<128x128xf32, #tpu.memory_space<vmem>>, vector<1x128xf32>
    %c1_306 = arith.constant 1 : index
    %c0_307 = arith.constant 0 : index
    %437 = vector.load %arg5[%c1_306, %c0_307] : memref<8x128xf32, #tpu.memory_space<vmem>>, vector<1x128xf32>
    tpu.vector_store %arg5[%c1_306, %c0_307], %436 {strides = array<i32>} : memref<8x128xf32, #tpu.memory_space<vmem>>, vector<1x128xf32>,
    %c2_308 = arith.constant 2 : index
    %c6_309 = arith.constant 6 : index
    %438 = memref.load %arg0[%c2_308, %c6_309] : memref<8x8xi32, #tpu.memory_space<smem>>
    %439 = arith.index_cast %438 : i32 to index
    %c0_310 = arith.constant 0 : index
    %440 = vector.load %arg1[%439, %c0_310] : memref<128x128xf32, #tpu.memory_space<vmem>>, vector<1x128xf32>
    %c2_311 = arith.constant 2 : index
    %c0_312 = arith.constant 0 : index
    %441 = vector.load %arg5[%c2_311, %c0_312] : memref<8x128xf32, #tpu.memory_space<vmem>>, vector<1x128xf32>
    tpu.vector_store %arg5[%c2_311, %c0_312], %440 {strides = array<i32>} : memref<8x128xf32, #tpu.memory_space<vmem>>, vector<1x128xf32>,
    %c3_313 = arith.constant 3 : index
    %c6_314 = arith.constant 6 : index
    %442 = memref.load %arg0[%c3_313, %c6_314] : memref<8x8xi32, #tpu.memory_space<smem>>
    %443 = arith.index_cast %442 : i32 to index
    %c0_315 = arith.constant 0 : index
    %444 = vector.load %arg1[%443, %c0_315] : memref<128x128xf32, #tpu.memory_space<vmem>>, vector<1x128xf32>
    %c3_316 = arith.constant 3 : index
    %c0_317 = arith.constant 0 : index
    %445 = vector.load %arg5[%c3_316, %c0_317] : memref<8x128xf32, #tpu.memory_space<vmem>>, vector<1x128xf32>
    tpu.vector_store %arg5[%c3_316, %c0_317], %444 {strides = array<i32>} : memref<8x128xf32, #tpu.memory_space<vmem>>, vector<1x128xf32>,
    %c4_318 = arith.constant 4 : index
    %c6_319 = arith.constant 6 : index
    %446 = memref.load %arg0[%c4_318, %c6_319] : memref<8x8xi32, #tpu.memory_space<smem>>
    %447 = arith.index_cast %446 : i32 to index
    %c0_320 = arith.constant 0 : index
    %448 = vector.load %arg1[%447, %c0_320] : memref<128x128xf32, #tpu.memory_space<vmem>>, vector<1x128xf32>
    %c4_321 = arith.constant 4 : index
    %c0_322 = arith.constant 0 : index
    %449 = vector.load %arg5[%c4_321, %c0_322] : memref<8x128xf32, #tpu.memory_space<vmem>>, vector<1x128xf32>
    tpu.vector_store %arg5[%c4_321, %c0_322], %448 {strides = array<i32>} : memref<8x128xf32, #tpu.memory_space<vmem>>, vector<1x128xf32>,
    %c5_323 = arith.constant 5 : index
    %c6_324 = arith.constant 6 : index
    %450 = memref.load %arg0[%c5_323, %c6_324] : memref<8x8xi32, #tpu.memory_space<smem>>
    %451 = arith.index_cast %450 : i32 to index
    %c0_325 = arith.constant 0 : index
    %452 = vector.load %arg1[%451, %c0_325] : memref<128x128xf32, #tpu.memory_space<vmem>>, vector<1x128xf32>
    %c5_326 = arith.constant 5 : index
    %c0_327 = arith.constant 0 : index
    %453 = vector.load %arg5[%c5_326, %c0_327] : memref<8x128xf32, #tpu.memory_space<vmem>>, vector<1x128xf32>
    tpu.vector_store %arg5[%c5_326, %c0_327], %452 {strides = array<i32>} : memref<8x128xf32, #tpu.memory_space<vmem>>, vector<1x128xf32>,
    %c6_328 = arith.constant 6 : index
    %c6_329 = arith.constant 6 : index
    %454 = memref.load %arg0[%c6_328, %c6_329] : memref<8x8xi32, #tpu.memory_space<smem>>
    %455 = arith.index_cast %454 : i32 to index
    %c0_330 = arith.constant 0 : index
    %456 = vector.load %arg1[%455, %c0_330] : memref<128x128xf32, #tpu.memory_space<vmem>>, vector<1x128xf32>
    %c6_331 = arith.constant 6 : index
    %c0_332 = arith.constant 0 : index
    %457 = vector.load %arg5[%c6_331, %c0_332] : memref<8x128xf32, #tpu.memory_space<vmem>>, vector<1x128xf32>
    tpu.vector_store %arg5[%c6_331, %c0_332], %456 {strides = array<i32>} : memref<8x128xf32, #tpu.memory_space<vmem>>, vector<1x128xf32>,
    %c7_333 = arith.constant 7 : index
    %c6_334 = arith.constant 6 : index
    %458 = memref.load %arg0[%c7_333, %c6_334] : memref<8x8xi32, #tpu.memory_space<smem>>
    %459 = arith.index_cast %458 : i32 to index
    %c0_335 = arith.constant 0 : index
    %460 = vector.load %arg1[%459, %c0_335] : memref<128x128xf32, #tpu.memory_space<vmem>>, vector<1x128xf32>
    %c7_336 = arith.constant 7 : index
    %c0_337 = arith.constant 0 : index
    %461 = vector.load %arg5[%c7_336, %c0_337] : memref<8x128xf32, #tpu.memory_space<vmem>>, vector<1x128xf32>
    tpu.vector_store %arg5[%c7_336, %c0_337], %460 {strides = array<i32>} : memref<8x128xf32, #tpu.memory_space<vmem>>, vector<1x128xf32>,
    %c0_338 = arith.constant 0 : index
    %c0_339 = arith.constant 0 : index
    %462 = vector.load %arg5[%c0_338, %c0_339] : memref<8x128xf32, #tpu.memory_space<vmem>>, vector<8x128xf32>
    %463 = arith.truncf %429 : vector<8x32xf32> to vector<8x32xbf16>
    %cst_340 = arith.constant dense<0.000000e+00> : vector<8x128xf32>
    %464 = tpu.matmul %463, %5, %cst_340 {dimension_numbers = #tpu.dot_dimension_numbers<[1], [0], [0], [1], [0, 0, 1, 1], [], []>} : vector<8x32xbf16>, vector<32x128xbf16>, vector<8x128xf32> -> vector<8x128xf32>
    %465 = arith.truncf %411 : vector<8x32xf32> to vector<8x32xbf16>
    %cst_341 = arith.constant dense<0.000000e+00> : vector<8x128xf32>
    %466 = tpu.matmul %465, %1, %cst_341 {dimension_numbers = #tpu.dot_dimension_numbers<[1], [0], [0], [1], [0, 0, 1, 1], [], []>} : vector<8x32xbf16>, vector<32x128xbf16>, vector<8x128xf32> -> vector<8x128xf32>
    %467 = arith.addf %462, %466 : vector<8x128xf32>
    %468 = math.tanh %467 : vector<8x128xf32>
    %cst_342 = arith.constant 5.000000e-01 : f32
    %469 = vector.broadcast %cst_342 : f32 to vector<8x128xf32>
    %470 = arith.mulf %469, %468 : vector<8x128xf32>
    %cst_343 = arith.constant 5.000000e-01 : f32
    %471 = vector.broadcast %cst_343 : f32 to vector<8x128xf32>
    %472 = arith.addf %470, %471 : vector<8x128xf32>
    %473 = vector.extract_strided_slice %472 {offsets = [0, 0], sizes = [8, 32], strides = [1, 1]} : vector<8x128xf32> to vector<8x32xf32>
    %474 = vector.extract_strided_slice %472 {offsets = [0, 32], sizes = [8, 32], strides = [1, 1]} : vector<8x128xf32> to vector<8x32xf32>
    %475 = vector.extract_strided_slice %468 {offsets = [0, 64], sizes = [8, 32], strides = [1, 1]} : vector<8x128xf32> to vector<8x32xf32>
    %476 = vector.extract_strided_slice %472 {offsets = [0, 96], sizes = [8, 32], strides = [1, 1]} : vector<8x128xf32> to vector<8x32xf32>
    %477 = arith.mulf %474, %409 : vector<8x32xf32>
    %478 = arith.mulf %473, %475 : vector<8x32xf32>
    %479 = arith.addf %477, %478 : vector<8x32xf32>
    %480 = math.tanh %479 : vector<8x32xf32>
    %481 = arith.mulf %476, %480 : vector<8x32xf32>
    %482 = arith.truncf %481 : vector<8x32xf32> to vector<8x32xbf16>
    %cst_344 = arith.constant dense<0.000000e+00> : vector<8x128xf32>
    %483 = tpu.matmul %482, %3, %cst_344 {dimension_numbers = #tpu.dot_dimension_numbers<[1], [0], [0], [1], [0, 0, 1, 1], [], []>} : vector<8x32xbf16>, vector<32x128xbf16>, vector<8x128xf32> -> vector<8x128xf32>
    %484 = arith.addf %483, %464 : vector<8x128xf32>
    %485 = arith.addf %484, %11 : vector<8x128xf32>
    %486 = math.tanh %485 : vector<8x128xf32>
    %cst_345 = arith.constant 5.000000e-01 : f32
    %487 = vector.broadcast %cst_345 : f32 to vector<8x128xf32>
    %488 = arith.mulf %487, %486 : vector<8x128xf32>
    %cst_346 = arith.constant 5.000000e-01 : f32
    %489 = vector.broadcast %cst_346 : f32 to vector<8x128xf32>
    %490 = arith.addf %488, %489 : vector<8x128xf32>
    %491 = vector.extract_strided_slice %490 {offsets = [0, 0], sizes = [8, 32], strides = [1, 1]} : vector<8x128xf32> to vector<8x32xf32>
    %492 = vector.extract_strided_slice %490 {offsets = [0, 32], sizes = [8, 32], strides = [1, 1]} : vector<8x128xf32> to vector<8x32xf32>
    %493 = vector.extract_strided_slice %486 {offsets = [0, 64], sizes = [8, 32], strides = [1, 1]} : vector<8x128xf32> to vector<8x32xf32>
    %494 = vector.extract_strided_slice %490 {offsets = [0, 96], sizes = [8, 32], strides = [1, 1]} : vector<8x128xf32> to vector<8x32xf32>
    %495 = arith.mulf %492, %427 : vector<8x32xf32>
    %496 = arith.mulf %491, %493 : vector<8x32xf32>
    %497 = arith.addf %495, %496 : vector<8x32xf32>
    %498 = math.tanh %497 : vector<8x32xf32>
    %499 = arith.mulf %494, %498 : vector<8x32xf32>
    %c0_347 = arith.constant 0 : index
    %c7_348 = arith.constant 7 : index
    %500 = memref.load %arg0[%c0_347, %c7_348] : memref<8x8xi32, #tpu.memory_space<smem>>
    %501 = arith.index_cast %500 : i32 to index
    %c0_349 = arith.constant 0 : index
    %502 = vector.load %arg1[%501, %c0_349] : memref<128x128xf32, #tpu.memory_space<vmem>>, vector<1x128xf32>
    %c0_350 = arith.constant 0 : index
    %c0_351 = arith.constant 0 : index
    %503 = vector.load %arg5[%c0_350, %c0_351] : memref<8x128xf32, #tpu.memory_space<vmem>>, vector<1x128xf32>
    tpu.vector_store %arg5[%c0_350, %c0_351], %502 {strides = array<i32>} : memref<8x128xf32, #tpu.memory_space<vmem>>, vector<1x128xf32>,
    %c1_352 = arith.constant 1 : index
    %c7_353 = arith.constant 7 : index
    %504 = memref.load %arg0[%c1_352, %c7_353] : memref<8x8xi32, #tpu.memory_space<smem>>
    %505 = arith.index_cast %504 : i32 to index
    %c0_354 = arith.constant 0 : index
    %506 = vector.load %arg1[%505, %c0_354] : memref<128x128xf32, #tpu.memory_space<vmem>>, vector<1x128xf32>
    %c1_355 = arith.constant 1 : index
    %c0_356 = arith.constant 0 : index
    %507 = vector.load %arg5[%c1_355, %c0_356] : memref<8x128xf32, #tpu.memory_space<vmem>>, vector<1x128xf32>
    tpu.vector_store %arg5[%c1_355, %c0_356], %506 {strides = array<i32>} : memref<8x128xf32, #tpu.memory_space<vmem>>, vector<1x128xf32>,
    %c2_357 = arith.constant 2 : index
    %c7_358 = arith.constant 7 : index
    %508 = memref.load %arg0[%c2_357, %c7_358] : memref<8x8xi32, #tpu.memory_space<smem>>
    %509 = arith.index_cast %508 : i32 to index
    %c0_359 = arith.constant 0 : index
    %510 = vector.load %arg1[%509, %c0_359] : memref<128x128xf32, #tpu.memory_space<vmem>>, vector<1x128xf32>
    %c2_360 = arith.constant 2 : index
    %c0_361 = arith.constant 0 : index
    %511 = vector.load %arg5[%c2_360, %c0_361] : memref<8x128xf32, #tpu.memory_space<vmem>>, vector<1x128xf32>
    tpu.vector_store %arg5[%c2_360, %c0_361], %510 {strides = array<i32>} : memref<8x128xf32, #tpu.memory_space<vmem>>, vector<1x128xf32>,
    %c3_362 = arith.constant 3 : index
    %c7_363 = arith.constant 7 : index
    %512 = memref.load %arg0[%c3_362, %c7_363] : memref<8x8xi32, #tpu.memory_space<smem>>
    %513 = arith.index_cast %512 : i32 to index
    %c0_364 = arith.constant 0 : index
    %514 = vector.load %arg1[%513, %c0_364] : memref<128x128xf32, #tpu.memory_space<vmem>>, vector<1x128xf32>
    %c3_365 = arith.constant 3 : index
    %c0_366 = arith.constant 0 : index
    %515 = vector.load %arg5[%c3_365, %c0_366] : memref<8x128xf32, #tpu.memory_space<vmem>>, vector<1x128xf32>
    tpu.vector_store %arg5[%c3_365, %c0_366], %514 {strides = array<i32>} : memref<8x128xf32, #tpu.memory_space<vmem>>, vector<1x128xf32>,
    %c4_367 = arith.constant 4 : index
    %c7_368 = arith.constant 7 : index
    %516 = memref.load %arg0[%c4_367, %c7_368] : memref<8x8xi32, #tpu.memory_space<smem>>
    %517 = arith.index_cast %516 : i32 to index
    %c0_369 = arith.constant 0 : index
    %518 = vector.load %arg1[%517, %c0_369] : memref<128x128xf32, #tpu.memory_space<vmem>>, vector<1x128xf32>
    %c4_370 = arith.constant 4 : index
    %c0_371 = arith.constant 0 : index
    %519 = vector.load %arg5[%c4_370, %c0_371] : memref<8x128xf32, #tpu.memory_space<vmem>>, vector<1x128xf32>
    tpu.vector_store %arg5[%c4_370, %c0_371], %518 {strides = array<i32>} : memref<8x128xf32, #tpu.memory_space<vmem>>, vector<1x128xf32>,
    %c5_372 = arith.constant 5 : index
    %c7_373 = arith.constant 7 : index
    %520 = memref.load %arg0[%c5_372, %c7_373] : memref<8x8xi32, #tpu.memory_space<smem>>
    %521 = arith.index_cast %520 : i32 to index
    %c0_374 = arith.constant 0 : index
    %522 = vector.load %arg1[%521, %c0_374] : memref<128x128xf32, #tpu.memory_space<vmem>>, vector<1x128xf32>
    %c5_375 = arith.constant 5 : index
    %c0_376 = arith.constant 0 : index
    %523 = vector.load %arg5[%c5_375, %c0_376] : memref<8x128xf32, #tpu.memory_space<vmem>>, vector<1x128xf32>
    tpu.vector_store %arg5[%c5_375, %c0_376], %522 {strides = array<i32>} : memref<8x128xf32, #tpu.memory_space<vmem>>, vector<1x128xf32>,
    %c6_377 = arith.constant 6 : index
    %c7_378 = arith.constant 7 : index
    %524 = memref.load %arg0[%c6_377, %c7_378] : memref<8x8xi32, #tpu.memory_space<smem>>
    %525 = arith.index_cast %524 : i32 to index
    %c0_379 = arith.constant 0 : index
    %526 = vector.load %arg1[%525, %c0_379] : memref<128x128xf32, #tpu.memory_space<vmem>>, vector<1x128xf32>
    %c6_380 = arith.constant 6 : index
    %c0_381 = arith.constant 0 : index
    %527 = vector.load %arg5[%c6_380, %c0_381] : memref<8x128xf32, #tpu.memory_space<vmem>>, vector<1x128xf32>
    tpu.vector_store %arg5[%c6_380, %c0_381], %526 {strides = array<i32>} : memref<8x128xf32, #tpu.memory_space<vmem>>, vector<1x128xf32>,
    %c7_382 = arith.constant 7 : index
    %c7_383 = arith.constant 7 : index
    %528 = memref.load %arg0[%c7_382, %c7_383] : memref<8x8xi32, #tpu.memory_space<smem>>
    %529 = arith.index_cast %528 : i32 to index
    %c0_384 = arith.constant 0 : index
    %530 = vector.load %arg1[%529, %c0_384] : memref<128x128xf32, #tpu.memory_space<vmem>>, vector<1x128xf32>
    %c7_385 = arith.constant 7 : index
    %c0_386 = arith.constant 0 : index
    %531 = vector.load %arg5[%c7_385, %c0_386] : memref<8x128xf32, #tpu.memory_space<vmem>>, vector<1x128xf32>
    tpu.vector_store %arg5[%c7_385, %c0_386], %530 {strides = array<i32>} : memref<8x128xf32, #tpu.memory_space<vmem>>, vector<1x128xf32>,
    %c0_387 = arith.constant 0 : index
    %c0_388 = arith.constant 0 : index
    %532 = vector.load %arg5[%c0_387, %c0_388] : memref<8x128xf32, #tpu.memory_space<vmem>>, vector<8x128xf32>
    %533 = arith.truncf %499 : vector<8x32xf32> to vector<8x32xbf16>
    %cst_389 = arith.constant dense<0.000000e+00> : vector<8x128xf32>
    %534 = tpu.matmul %533, %5, %cst_389 {dimension_numbers = #tpu.dot_dimension_numbers<[1], [0], [0], [1], [0, 0, 1, 1], [], []>} : vector<8x32xbf16>, vector<32x128xbf16>, vector<8x128xf32> -> vector<8x128xf32>
    %535 = arith.truncf %481 : vector<8x32xf32> to vector<8x32xbf16>
    %cst_390 = arith.constant dense<0.000000e+00> : vector<8x128xf32>
    %536 = tpu.matmul %535, %1, %cst_390 {dimension_numbers = #tpu.dot_dimension_numbers<[1], [0], [0], [1], [0, 0, 1, 1], [], []>} : vector<8x32xbf16>, vector<32x128xbf16>, vector<8x128xf32> -> vector<8x128xf32>
    %537 = arith.addf %532, %536 : vector<8x128xf32>
    %538 = math.tanh %537 : vector<8x128xf32>
    %cst_391 = arith.constant 5.000000e-01 : f32
    %539 = vector.broadcast %cst_391 : f32 to vector<8x128xf32>
    %540 = arith.mulf %539, %538 : vector<8x128xf32>
    %cst_392 = arith.constant 5.000000e-01 : f32
    %541 = vector.broadcast %cst_392 : f32 to vector<8x128xf32>
    %542 = arith.addf %540, %541 : vector<8x128xf32>
    %543 = vector.extract_strided_slice %542 {offsets = [0, 0], sizes = [8, 32], strides = [1, 1]} : vector<8x128xf32> to vector<8x32xf32>
    %544 = vector.extract_strided_slice %542 {offsets = [0, 32], sizes = [8, 32], strides = [1, 1]} : vector<8x128xf32> to vector<8x32xf32>
    %545 = vector.extract_strided_slice %538 {offsets = [0, 64], sizes = [8, 32], strides = [1, 1]} : vector<8x128xf32> to vector<8x32xf32>
    %546 = vector.extract_strided_slice %542 {offsets = [0, 96], sizes = [8, 32], strides = [1, 1]} : vector<8x128xf32> to vector<8x32xf32>
    %547 = arith.mulf %544, %479 : vector<8x32xf32>
    %548 = arith.mulf %543, %545 : vector<8x32xf32>
    %549 = arith.addf %547, %548 : vector<8x32xf32>
    %550 = math.tanh %549 : vector<8x32xf32>
    %551 = arith.mulf %546, %550 : vector<8x32xf32>
    %552 = arith.truncf %551 : vector<8x32xf32> to vector<8x32xbf16>
    %cst_393 = arith.constant dense<0.000000e+00> : vector<8x128xf32>
    %553 = tpu.matmul %552, %3, %cst_393 {dimension_numbers = #tpu.dot_dimension_numbers<[1], [0], [0], [1], [0, 0, 1, 1], [], []>} : vector<8x32xbf16>, vector<32x128xbf16>, vector<8x128xf32> -> vector<8x128xf32>
    %554 = arith.addf %553, %534 : vector<8x128xf32>
    %555 = arith.addf %554, %11 : vector<8x128xf32>
    %556 = math.tanh %555 : vector<8x128xf32>
    %cst_394 = arith.constant 5.000000e-01 : f32
    %557 = vector.broadcast %cst_394 : f32 to vector<8x128xf32>
    %558 = arith.mulf %557, %556 : vector<8x128xf32>
    %cst_395 = arith.constant 5.000000e-01 : f32
    %559 = vector.broadcast %cst_395 : f32 to vector<8x128xf32>
    %560 = arith.addf %558, %559 : vector<8x128xf32>
    %561 = vector.extract_strided_slice %560 {offsets = [0, 0], sizes = [8, 32], strides = [1, 1]} : vector<8x128xf32> to vector<8x32xf32>
    %562 = vector.extract_strided_slice %560 {offsets = [0, 32], sizes = [8, 32], strides = [1, 1]} : vector<8x128xf32> to vector<8x32xf32>
    %563 = vector.extract_strided_slice %556 {offsets = [0, 64], sizes = [8, 32], strides = [1, 1]} : vector<8x128xf32> to vector<8x32xf32>
    %564 = vector.extract_strided_slice %560 {offsets = [0, 96], sizes = [8, 32], strides = [1, 1]} : vector<8x128xf32> to vector<8x32xf32>
    %565 = arith.mulf %562, %497 : vector<8x32xf32>
    %566 = arith.mulf %561, %563 : vector<8x32xf32>
    %567 = arith.addf %565, %566 : vector<8x32xf32>
    %568 = math.tanh %567 : vector<8x32xf32>
    %569 = arith.mulf %564, %568 : vector<8x32xf32>
    %570 = arith.truncf %569 : vector<8x32xf32> to vector<8x32xbf16>
    %cst_396 = arith.constant dense<0.000000e+00> : vector<8x128xf32>
    %571 = tpu.matmul %570, %7, %cst_396 {dimension_numbers = #tpu.dot_dimension_numbers<[1], [0], [0], [1], [0, 0, 1, 1], [], []>} : vector<8x32xbf16>, vector<32x128xbf16>, vector<8x128xf32> -> vector<8x128xf32>
    %572 = arith.addf %571, %14 : vector<8x128xf32>
    %c0_397 = arith.constant 0 : index
    %c0_398 = arith.constant 0 : index
    %573 = vector.load %arg4[%c0_397, %c0_398] : memref<8x128xf32, #tpu.memory_space<vmem>>, vector<8x128xf32>
    tpu.vector_store %arg4[%c0_397, %c0_398], %572 {strides = array<i32>} : memref<8x128xf32, #tpu.memory_space<vmem>>, vector<8x128xf32>,
    return
  }
}

</mosaic_0001>

<llo_original>
// kernel: emotion_rnn_forward.1
$region0: #{emotion_rnn_forward.1}
  #allocation0 [shape = 'u32[]', space=smem, size = 0x4, offset = 0x4, fixed_abs, tag = 'smem constant byte address 0x4 - core index']
  #allocation1 [shape = 'u32[144,128]{1,0:T(1,128)}', space=vmem, size = 0x12000, scoped, tag = 'internal scratch']
  #allocation2 [shape = 'f32[8,128]{1,0:T(8,128)}', space=vmem, size = 0x1000, scoped, tag = 'scratch operand']
  #allocation3 [shape = 's32[1]{0}', space=sflag, size = 0x4, scoped, tag = 'scoped memory for emotion_rnn_forward.1']
  #allocation4 [shape = 'u8[4096]{0}', space=smem, size = 0x1000, scoped, tag = 'prefetched SMEM operand 0']
  %s0 = inlined_call_operand.vmem [shape: s32[8,8], index: 0, kind: input, shape index: {}]
  %s1 = inlined_call_operand.hbm [shape: f32[128,128], index: 1, kind: input, shape index: {}]
  %s2 = inlined_call_operand.hbm [shape: bf16[4,32,128], index: 2, kind: input, shape index: {}]
  %s3 = inlined_call_operand.vmem [shape: f32[2,128], index: 3, kind: input, shape index: {}]
  %s4 = inlined_call_operand.vmem [shape: f32[8,128], index: 4, kind: output, shape index: {}]
  %s5 = sld [smem:[#allocation0]]
  $region30: #{emotion_rnn_forward.1} parent=0
    _
  %s7 = ssub.s32 1, %s5
  %s8 = scalar_select 0, %s7, %s5
  %s9 = sshll.u32 %s0, 4
  %s10 = int_to_ptr.vmem [resolvable:$true] %s9
  %12 = dma.vmem_to_smem %s10, 128, [#allocation4], [#allocation3]
  %13 = dma.done [#allocation3], 128
  %14 = sfence
  $region1: #{emotion_rnn_forward.1} parent=0
    #allocation5 [shape = 'u8[65536]{0}', space=vmem, size = 0x10000, scoped, tag = 'input window, operand 1, single buffered']
    #allocation6 [shape = 's32[1]{0}', space=sflag, size = 0x4, scoped, tag = 'scoped memory for emotion_rnn_forward.1']
    #allocation7 [shape = 'u8[32768]{0}', space=vmem, size = 0x8000, scoped, tag = 'input window, operand 2, single buffered']
    #allocation8 [shape = 's32[1]{0}', space=sflag, size = 0x4, scoped, tag = 'scoped memory for emotion_rnn_forward.1']
    %15 = vsyncpa [#allocation6], 0
    %16 = vsyncpa [#allocation8], 0
    // Predicated region
    $region2: #{emotion_rnn_forward.1} parent=1 // pred_check
      _
    $region3: #{emotion_rnn_forward.1} parent=1 // pred_check_branch
      %18 = sbr.rel (0) target = $region5
    $region4: #{emotion_rnn_forward.1} parent=1 // pred_region
      %s20 = ssub.s32 2048, 2048
      %21 = vsyncadd [#allocation6], %s20
      %s22 = sshll.u32 [#allocation5], 4
      %s23 = int_to_ptr.vmem [resolvable:$true] %s22
      %28 = dma.hbm_to_vmem [thread:$0]  %s1, 2048, %s23, [#allocation6], 128, 128, 8
    $region5: #{emotion_rnn_forward.1} parent=1 // pred_fallthru
      _
    // Predicated region
    $region6: #{emotion_rnn_forward.1} parent=1 // pred_check
      _
    $region7: #{emotion_rnn_forward.1} parent=1 // pred_check_branch
      %30 = sbr.rel (0) target = $region9
    $region8: #{emotion_rnn_forward.1} parent=1 // pred_region
      %s32 = ssub.s32 1024, 1024
      %33 = vsyncadd [#allocation8], %s32
      %s34 = sshll.u32 [#allocation7], 4
      %s35 = int_to_ptr.vmem [resolvable:$true] %s34
      %40 = dma.hbm_to_vmem [thread:$0]  %s2, 1024, %s35, [#allocation8], 64, 64, 4
    $region9: #{emotion_rnn_forward.1} parent=1 // pred_fallthru
      _
    // Predicated region
    $region10: #{emotion_rnn_forward.1} parent=1 // pred_check
      _
    $region11: #{emotion_rnn_forward.1} parent=1 // pred_check_branch
      %42 = sbr.rel (0) target = $region13
    $region12: #{emotion_rnn_forward.1} parent=1 // pred_region
      _
    $region13: #{emotion_rnn_forward.1} parent=1 // pred_fallthru
      _
    // Predicated region
    $region14: #{emotion_rnn_forward.1} parent=1 // pred_check
      _
    $region15: #{emotion_rnn_forward.1} parent=1 // pred_check_branch
      %44 = sbr.rel (0) target = $region17
    $region16: #{emotion_rnn_forward.1} parent=1 // pred_region
      %45 = dma.done [#allocation6], 2048
    $region17: #{emotion_rnn_forward.1} parent=1 // pred_fallthru
      _
    // Predicated region
    $region18: #{emotion_rnn_forward.1} parent=1 // pred_check
      _
    $region19: #{emotion_rnn_forward.1} parent=1 // pred_check_branch
      %47 = sbr.rel (0) target = $region21
    $region20: #{emotion_rnn_forward.1} parent=1 // pred_region
      %48 = dma.done [#allocation8], 1024
    $region21: #{emotion_rnn_forward.1} parent=1 // pred_fallthru
      _
    %v50 = vld [vmem:[#allocation7] sm:$0xf]
    %v51 = vld [vmem:[#allocation7 + $0x4] sm:$0xf]
    %v52 = vld [vmem:[#allocation7 + $0x8] sm:$0xf]
    %v53 = vld [vmem:[#allocation7 + $0xc] sm:$0xf]
    %s54 = scalar_lea.vmem [#allocation7], 16
    %v55 = vld [vmem:[%s54] sm:$0xf]
    %v56 = vld [vmem:[%s54 + $0x4] sm:$0xf]
    %v57 = vld [vmem:[%s54 + $0x8] sm:$0xf]
    %v58 = vld [vmem:[%s54 + $0xc] sm:$0xf]
    %s59 = scalar_lea.vmem [#allocation7], 32
    %v60 = vld [vmem:[%s59] sm:$0xf]
    %v61 = vld [vmem:[%s59 + $0x4] sm:$0xf]
    %v62 = vld [vmem:[%s59 + $0x8] sm:$0xf]
    %v63 = vld [vmem:[%s59 + $0xc] sm:$0xf]
    %s64 = scalar_lea.vmem [#allocation7], 48
    %v65 = vld [vmem:[%s64] sm:$0xf]
    %v66 = vld [vmem:[%s64 + $0x4] sm:$0xf]
    %v67 = vld [vmem:[%s64 + $0x8] sm:$0xf]
    %v68 = vld [vmem:[%s64 + $0xc] sm:$0xf]
    %v69 = vld [vmem:[%s3] sm:$0x3]
    %v70 = vlaneseq
    %v71 = vshrl.u32 %v70, 7
    %v72 = vsub.s32 0, %v71
    %v73 = vrot.slane %v69, %v72
    %v74 = vlaneseq
    %v75 = vshrl.u32 %v74, 7
    %v76 = vsub.s32 1, %v75
    %v77 = vrot.slane %v69, %v76
    %s78 = sld [smem:[#allocation4]]
    %s79 = scalar_lea.vmem [#allocation5], %s78
    %v80 = vld [vmem:[%s79] sm:$0x1]
    %81 = vst [vmem:[#allocation2] sm:$0x1] %v80
    %s82 = sld [smem:[#allocation4 + $0x80]]
    %s83 = scalar_lea.vmem [#allocation5], %s82
    %v84 = vld [vmem:[%s83] sm:$0x1]
    %85 = vst [vmem:[#allocation2 + $0x1] sm:$0x1] %v84
    %s86 = sld [smem:[#allocation4 + $0x100]]
    %s87 = scalar_lea.vmem [#allocation5], %s86
    %v88 = vld [vmem:[%s87] sm:$0x1]
    %89 = vst [vmem:[#allocation2 + $0x2] sm:$0x1] %v88
    %s90 = sld [smem:[#allocation4 + $0x180]]
    %s91 = scalar_lea.vmem [#allocation5], %s90
    %v92 = vld [vmem:[%s91] sm:$0x1]
    %93 = vst [vmem:[#allocation2 + $0x3] sm:$0x1] %v92
    %s94 = sld [smem:[#allocation4 + $0x200]]
    %s95 = scalar_lea.vmem [#allocation5], %s94
    %v96 = vld [vmem:[%s95] sm:$0x1]
    %97 = vst [vmem:[#allocation2 + $0x4] sm:$0x1] %v96
    %s98 = sld [smem:[#allocation4 + $0x280]]
    %s99 = scalar_lea.vmem [#allocation5], %s98
    %v100 = vld [vmem:[%s99] sm:$0x1]
    %101 = vst [vmem:[#allocation2 + $0x5] sm:$0x1] %v100
    %s102 = sld [smem:[#allocation4 + $0x300]]
    %s103 = scalar_lea.vmem [#allocation5], %s102
    %v104 = vld [vmem:[%s103] sm:$0x1]
    %105 = vst [vmem:[#allocation2 + $0x6] sm:$0x1] %v104
    %s106 = sld [smem:[#allocation4 + $0x380]]
    %s107 = scalar_lea.vmem [#allocation5], %s106
    %v108 = vld [vmem:[%s107] sm:$0x1]
    %109 = vst [vmem:[#allocation2 + $0x7] sm:$0x1] %v108
    %v110 = vld [vmem:[#allocation2] sm:$0xff]
    %v111 = vtanh.pop %v110
    %v112 = vmul.f32 %v111, 0.5
    %v113 = vadd.f32 %v112, 0.5
    %v114 = vmul.f32 %v113, 0.0
    %116 = vrot.lane.b32.xlu0 %v111, 64
    %v117 = vpop.permute.xlu0 %116
    %v119 = vmul.f32 %v113, %v117
    %121 = vrot.lane.b32.xlu0 %v119, 32
    %v122 = vpop.permute.xlu0 %121
    %v124 = vadd.f32 %v114, %v122
    %v125 = vtanh.pop %v124
    %127 = vrot.lane.b32.xlu0 %v125, 64
    %v128 = vpop.permute.xlu0 %127
    %v130 = vmul.f32 %v113, %v128
    %v131 = vpack.c.bf16 %v130, %v130
    %133 = vrot.lane.b32.xlu0 %v131, 32
    %v134 = vpop.permute.xlu0 %133
    %v139 = vunpack.c.l.b16 %v55
    %v140 = vunpack.c.l.b16 %v56
    %v141 = vunpack.c.l.b16 %v57
    %v142 = vunpack.c.l.b16 %v58
    %v143 = vpack.c.b16 %v140, %v139
    %v144 = vpack.c.b16 %v142, %v141
    %vm147 = vcmask 261120
    %v149 = vsel %vm147, %v134, 0
    %151 = vmatprep.subr.bf16.mxu0 0
    %152 = vmatpush1.bf16.msra.mxu0 0
    %153 = vmatprep.subr.bf16.mxu0 0
    %154 = vmatpush1.bf16.msra.mxu0 0
    %155 = vmatprep.subr.bf16.mxu0 0
    %156 = vmatpush1.bf16.msra.mxu0 0
    %157 = vmatprep.subr.bf16.mxu0 0
    %158 = vmatpush1.bf16.msra.mxu0 0
    %159 = vmatprep.subr.bf16.mxu0 0
    %160 = vmatpush1.bf16.msra.mxu0 0
    %161 = vmatprep.subr.bf16.mxu0 0
    %162 = vmatpush1.bf16.msra.mxu0 0
    %163 = vmatprep.subr.bf16.mxu0 0
    %164 = vmatpush1.bf16.msra.mxu0 %v144
    %165 = vmatprep.subr.bf16.mxu0 0
    %166 = vmatpush1.bf16.msra.mxu0 %v143
    %167 = vmatprep.subr.bf16.mxu0 0
    %168 = vmatpush2.bf16.msra.mxu0 0
    %169 = vmatprep.subr.bf16.mxu0 0
    %170 = vmatpush2.bf16.msra.mxu0 0
    %171 = vmatprep.subr.bf16.mxu0 0
    %172 = vmatpush2.bf16.msra.mxu0 0
    %173 = vmatprep.subr.bf16.mxu0 0
    %174 = vmatpush2.bf16.msra.mxu0 0
    %175 = vmatprep.subr.bf16.mxu0 0
    %176 = vmatpush2.bf16.msra.mxu0 0
    %177 = vmatprep.subr.bf16.mxu0 0
    %178 = vmatpush2.bf16.msra.mxu0 0
    %179 = vmatprep.subr.bf16.mxu0 0
    %180 = vmatpush2.bf16.msra.mxu0 0
    %181 = vmatprep.subr.bf16.mxu0 0
    %182 = vmatpush2.bf16.msra.mxu0 0
    %183 = vmatprep.mubr.bf16.mxu0 0
    %184 = vmatmul.mubr.bf16.gmra.mxu0 %v149
    %v185 = vpop.f32.mrf.mxu0
    %v186 = vadd.f32 %v73, %v185
    %v187 = vpop.f32.mrf.mxu0
    %v188 = vpop.f32.mrf.mxu0
    %v189 = vpop.f32.mrf.mxu0
    %190 = vdwg.mxu0
    %v191 = vtanh.pop %v186
    %v192 = vmul.f32 %v191, 0.5
    %v193 = vadd.f32 %v192, 0.5
    %v194 = vmul.f32 %v193, 0.0
    %196 = vrot.lane.b32.xlu0 %v191, 64
    %v197 = vpop.permute.xlu0 %196
    %v199 = vmul.f32 %v193, %v197
    %201 = vrot.lane.b32.xlu0 %v199, 32
    %v202 = vpop.permute.xlu0 %201
    %v204 = vadd.f32 %v194, %v202
    %v205 = vtanh.pop %v204
    %207 = vrot.lane.b32.xlu0 %v205, 64
    %v208 = vpop.permute.xlu0 %207
    %v210 = vmul.f32 %v193, %v208
    %s211 = sld [smem:[#allocation4 + $0x1]]
    %s212 = scalar_lea.vmem [#allocation5], %s211
    %v213 = vld [vmem:[%s212] sm:$0x1]
    %214 = vst [vmem:[#allocation2] sm:$0x1] %v213
    %s215 = sld [smem:[#allocation4 + $0x81]]
    %s216 = scalar_lea.vmem [#allocation5], %s215
    %v217 = vld [vmem:[%s216] sm:$0x1]
    %218 = vst [vmem:[#allocation2 + $0x1] sm:$0x1] %v217
    %s219 = sld [smem:[#allocation4 + $0x101]]
    %s220 = scalar_lea.vmem [#allocation5], %s219
    %v221 = vld [vmem:[%s220] sm:$0x1]
    %222 = vst [vmem:[#allocation2 + $0x2] sm:$0x1] %v221
    %s223 = sld [smem:[#allocation4 + $0x181]]
    %s224 = scalar_lea.vmem [#allocation5], %s223
    %v225 = vld [vmem:[%s224] sm:$0x1]
    %226 = vst [vmem:[#allocation2 + $0x3] sm:$0x1] %v225
    %s227 = sld [smem:[#allocation4 + $0x201]]
    %s228 = scalar_lea.vmem [#allocation5], %s227
    %v229 = vld [vmem:[%s228] sm:$0x1]
    %230 = vst [vmem:[#allocation2 + $0x4] sm:$0x1] %v229
    %s231 = sld [smem:[#allocation4 + $0x281]]
    %s232 = scalar_lea.vmem [#allocation5], %s231
    %v233 = vld [vmem:[%s232] sm:$0x1]
    %234 = vst [vmem:[#allocation2 + $0x5] sm:$0x1] %v233
    %s235 = sld [smem:[#allocation4 + $0x301]]
    %s236 = scalar_lea.vmem [#allocation5], %s235
    %v237 = vld [vmem:[%s236] sm:$0x1]
    %238 = vst [vmem:[#allocation2 + $0x6] sm:$0x1] %v237
    %s239 = sld [smem:[#allocation4 + $0x381]]
    %s240 = scalar_lea.vmem [#allocation5], %s239
    %v241 = vld [vmem:[%s240] sm:$0x1]
    %242 = vst [vmem:[#allocation2 + $0x7] sm:$0x1] %v241
    %v243 = vld [vmem:[#allocation2] sm:$0xff]
    %v244 = vpack.c.bf16 %v210, %v210
    %246 = vrot.lane.b32.xlu0 %v244, 32
    %v247 = vpop.permute.xlu0 %246
    %v252 = vunpack.c.l.b16 %v60
    %v253 = vunpack.c.l.b16 %v61
    %v254 = vunpack.c.l.b16 %v62
    %v255 = vunpack.c.l.b16 %v63
    %v256 = vpack.c.b16 %v253, %v252
    %v257 = vpack.c.b16 %v255, %v254
    %v261 = vsel %vm147, %v247, 0
    %263 = vmatprep.subr.bf16.mxu0 0
    %264 = vmatpush1.bf16.msra.mxu0 0
    %265 = vmatprep.subr.bf16.mxu0 0
    %266 = vmatpush1.bf16.msra.mxu0 0
    %267 = vmatprep.subr.bf16.mxu0 0
    %268 = vmatpush1.bf16.msra.mxu0 0
    %269 = vmatprep.subr.bf16.mxu0 0
    %270 = vmatpush1.bf16.msra.mxu0 0
    %271 = vmatprep.subr.bf16.mxu0 0
    %272 = vmatpush1.bf16.msra.mxu0 0
    %273 = vmatprep.subr.bf16.mxu0 0
    %274 = vmatpush1.bf16.msra.mxu0 0
    %275 = vmatprep.subr.bf16.mxu0 0
    %276 = vmatpush1.bf16.msra.mxu0 %v257
    %277 = vmatprep.subr.bf16.mxu0 0
    %278 = vmatpush1.bf16.msra.mxu0 %v256
    %279 = vmatprep.subr.bf16.mxu0 0
    %280 = vmatpush2.bf16.msra.mxu0 0
    %281 = vmatprep.subr.bf16.mxu0 0
    %282 = vmatpush2.bf16.msra.mxu0 0
    %283 = vmatprep.subr.bf16.mxu0 0
    %284 = vmatpush2.bf16.msra.mxu0 0
    %285 = vmatprep.subr.bf16.mxu0 0
    %286 = vmatpush2.bf16.msra.mxu0 0
    %287 = vmatprep.subr.bf16.mxu0 0
    %288 = vmatpush2.bf16.msra.mxu0 0
    %289 = vmatprep.subr.bf16.mxu0 0
    %290 = vmatpush2.bf16.msra.mxu0 0
    %291 = vmatprep.subr.bf16.mxu0 0
    %292 = vmatpush2.bf16.msra.mxu0 0
    %293 = vmatprep.subr.bf16.mxu0 0
    %294 = vmatpush2.bf16.msra.mxu0 0
    %295 = vmatprep.mubr.bf16.mxu0 0
    %296 = vmatmul.mubr.bf16.gmra.mxu0 %v261
    %v297 = vpop.f32.mrf.mxu0
    %v298 = vadd.f32 0.0, %v297
    %v299 = vpop.f32.mrf.mxu0
    %v300 = vpop.f32.mrf.mxu0
    %v301 = vpop.f32.mrf.mxu0
    %302 = vdwg.mxu0
    %v307 = vunpack.c.l.b16 %v50
    %v308 = vunpack.c.l.b16 %v51
    %v309 = vunpack.c.l.b16 %v52
    %v310 = vunpack.c.l.b16 %v53
    %v311 = vpack.c.b16 %v308, %v307
    %v312 = vpack.c.b16 %v310, %v309
    %315 = vmatprep.subr.bf16.mxu0 0
    %316 = vmatpush1.bf16.msra.mxu0 0
    %317 = vmatprep.subr.bf16.mxu0 0
    %318 = vmatpush1.bf16.msra.mxu0 0
    %319 = vmatprep.subr.bf16.mxu0 0
    %320 = vmatpush1.bf16.msra.mxu0 0
    %321 = vmatprep.subr.bf16.mxu0 0
    %322 = vmatpush1.bf16.msra.mxu0 0
    %323 = vmatprep.subr.bf16.mxu0 0
    %324 = vmatpush1.bf16.msra.mxu0 0
    %325 = vmatprep.subr.bf16.mxu0 0
    %326 = vmatpush1.bf16.msra.mxu0 0
    %327 = vmatprep.subr.bf16.mxu0 0
    %328 = vmatpush1.bf16.msra.mxu0 %v312
    %329 = vmatprep.subr.bf16.mxu0 0
    %330 = vmatpush1.bf16.msra.mxu0 %v311
    %331 = vmatprep.subr.bf16.mxu0 0
    %332 = vmatpush2.bf16.msra.mxu0 0
    %333 = vmatprep.subr.bf16.mxu0 0
    %334 = vmatpush2.bf16.msra.mxu0 0
    %335 = vmatprep.subr.bf16.mxu0 0
    %336 = vmatpush2.bf16.msra.mxu0 0
    %337 = vmatprep.subr.bf16.mxu0 0
    %338 = vmatpush2.bf16.msra.mxu0 0
    %339 = vmatprep.subr.bf16.mxu0 0
    %340 = vmatpush2.bf16.msra.mxu0 0
    %341 = vmatprep.subr.bf16.mxu0 0
    %342 = vmatpush2.bf16.msra.mxu0 0
    %343 = vmatprep.subr.bf16.mxu0 0
    %344 = vmatpush2.bf16.msra.mxu0 0
    %345 = vmatprep.subr.bf16.mxu0 0
    %346 = vmatpush2.bf16.msra.mxu0 0
    %347 = vmatprep.mubr.bf16.mxu0 0
    %348 = vmatmul.mubr.bf16.gmra.mxu0 %v149
    %v349 = vpop.f32.mrf.mxu0
    %v350 = vadd.f32 0.0, %v349
    %v351 = vpop.f32.mrf.mxu0
    %v352 = vpop.f32.mrf.mxu0
    %v353 = vpop.f32.mrf.mxu0
    %354 = vdwg.mxu0
    %v355 = vadd.f32 %v243, %v350
    %v356 = vtanh.pop %v355
    %v357 = vmul.f32 %v356, 0.5
    %v358 = vadd.f32 %v357, 0.5
    %v359 = vmul.f32 %v358, %v124
    %361 = vrot.lane.b32.xlu0 %v356, 64
    %v362 = vpop.permute.xlu0 %361
    %v364 = vmul.f32 %v358, %v362
    %366 = vrot.lane.b32.xlu0 %v364, 32
    %v367 = vpop.permute.xlu0 %366
    %v369 = vadd.f32 %v359, %v367
    %v370 = vtanh.pop %v369
    %372 = vrot.lane.b32.xlu0 %v370, 64
    %v373 = vpop.permute.xlu0 %372
    %v375 = vmul.f32 %v358, %v373
    %v376 = vpack.c.bf16 %v375, %v375
    %378 = vrot.lane.b32.xlu0 %v376, 32
    %v379 = vpop.permute.xlu0 %378
    %v381 = vsel %vm147, %v379, 0
    %383 = vmatprep.subr.bf16.mxu0 0
    %384 = vmatpush1.bf16.msra.mxu0 0
    %385 = vmatprep.subr.bf16.mxu0 0
    %386 = vmatpush1.bf16.msra.mxu0 0
    %387 = vmatprep.subr.bf16.mxu0 0
    %388 = vmatpush1.bf16.msra.mxu0 0
    %389 = vmatprep.subr.bf16.mxu0 0
    %390 = vmatpush1.bf16.msra.mxu0 0
    %391 = vmatprep.subr.bf16.mxu0 0
    %392 = vmatpush1.bf16.msra.mxu0 0
    %393 = vmatprep.subr.bf16.mxu0 0
    %394 = vmatpush1.bf16.msra.mxu0 0
    %395 = vmatprep.subr.bf16.mxu0 0
    %396 = vmatpush1.bf16.msra.mxu0 %v144
    %397 = vmatprep.subr.bf16.mxu0 0
    %398 = vmatpush1.bf16.msra.mxu0 %v143
    %399 = vmatprep.subr.bf16.mxu0 0
    %400 = vmatpush2.bf16.msra.mxu0 0
    %401 = vmatprep.subr.bf16.mxu0 0
    %402 = vmatpush2.bf16.msra.mxu0 0
    %403 = vmatprep.subr.bf16.mxu0 0
    %404 = vmatpush2.bf16.msra.mxu0 0
    %405 = vmatprep.subr.bf16.mxu0 0
    %406 = vmatpush2.bf16.msra.mxu0 0
    %407 = vmatprep.subr.bf16.mxu0 0
    %408 = vmatpush2.bf16.msra.mxu0 0
    %409 = vmatprep.subr.bf16.mxu0 0
    %410 = vmatpush2.bf16.msra.mxu0 0
    %411 = vmatprep.subr.bf16.mxu0 0
    %412 = vmatpush2.bf16.msra.mxu0 0
    %413 = vmatprep.subr.bf16.mxu0 0
    %414 = vmatpush2.bf16.msra.mxu0 0
    %415 = vmatprep.mubr.bf16.mxu0 0
    %416 = vmatmul.mubr.bf16.gmra.mxu0 %v381
    %v417 = vpop.f32.mrf.mxu0
    %v418 = vadd.f32 %v298, %v417
    %v419 = vpop.f32.mrf.mxu0
    %v420 = vpop.f32.mrf.mxu0
    %v421 = vpop.f32.mrf.mxu0
    %422 = vdwg.mxu0
    %v423 = vadd.f32 %v418, %v73
    %v424 = vtanh.pop %v423
    %v425 = vmul.f32 %v424, 0.5
    %v426 = vadd.f32 %v425, 0.5
    %v427 = vmul.f32 %v426, %v204
    %429 = vrot.lane.b32.xlu0 %v424, 64
    %v430 = vpop.permute.xlu0 %429
    %v432 = vmul.f32 %v426, %v430
    %434 = vrot.lane.b32.xlu0 %v432, 32
    %v435 = vpop.permute.xlu0 %434
    %v437 = vadd.f32 %v427, %v435
    %v438 = vtanh.pop %v437
    %440 = vrot.lane.b32.xlu0 %v438, 64
    %v441 = vpop.permute.xlu0 %440
    %v443 = vmul.f32 %v426, %v441
    %s444 = sld [smem:[#allocation4 + $0x2]]
    %s445 = scalar_lea.vmem [#allocation5], %s444
    %v446 = vld [vmem:[%s445] sm:$0x1]
    %447 = vst [vmem:[#allocation2] sm:$0x1] %v446
    %s448 = sld [smem:[#allocation4 + $0x82]]
    %s449 = scalar_lea.vmem [#allocation5], %s448
    %v450 = vld [vmem:[%s449] sm:$0x1]
    %451 = vst [vmem:[#allocation2 + $0x1] sm:$0x1] %v450
    %s452 = sld [smem:[#allocation4 + $0x102]]
    %s453 = scalar_lea.vmem [#allocation5], %s452
    %v454 = vld [vmem:[%s453] sm:$0x1]
    %455 = vst [vmem:[#allocation2 + $0x2] sm:$0x1] %v454
    %s456 = sld [smem:[#allocation4 + $0x182]]
    %s457 = scalar_lea.vmem [#allocation5], %s456
    %v458 = vld [vmem:[%s457] sm:$0x1]
    %459 = vst [vmem:[#allocation2 + $0x3] sm:$0x1] %v458
    %s460 = sld [smem:[#allocation4 + $0x202]]
    %s461 = scalar_lea.vmem [#allocation5], %s460
    %v462 = vld [vmem:[%s461] sm:$0x1]
    %463 = vst [vmem:[#allocation2 + $0x4] sm:$0x1] %v462
    %s464 = sld [smem:[#allocation4 + $0x282]]
    %s465 = scalar_lea.vmem [#allocation5], %s464
    %v466 = vld [vmem:[%s465] sm:$0x1]
    %467 = vst [vmem:[#allocation2 + $0x5] sm:$0x1] %v466
    %s468 = sld [smem:[#allocation4 + $0x302]]
    %s469 = scalar_lea.vmem [#allocation5], %s468
    %v470 = vld [vmem:[%s469] sm:$0x1]
    %471 = vst [vmem:[#allocation2 + $0x6] sm:$0x1] %v470
    %s472 = sld [smem:[#allocation4 + $0x382]]
    %s473 = scalar_lea.vmem [#allocation5], %s472
    %v474 = vld [vmem:[%s473] sm:$0x1]
    %475 = vst [vmem:[#allocation2 + $0x7] sm:$0x1] %v474
    %v476 = vld [vmem:[#allocation2] sm:$0xff]
    %v477 = vpack.c.bf16 %v443, %v443
    %479 = vrot.lane.b32.xlu0 %v477, 32
    %v480 = vpop.permute.xlu0 %479
    %v482 = vsel %vm147, %v480, 0
    %484 = vmatprep.subr.bf16.mxu0 0
    %485 = vmatpush1.bf16.msra.mxu0 0
    %486 = vmatprep.subr.bf16.mxu0 0
    %487 = vmatpush1.bf16.msra.mxu0 0
    %488 = vmatprep.subr.bf16.mxu0 0
    %489 = vmatpush1.bf16.msra.mxu0 0
    %490 = vmatprep.subr.bf16.mxu0 0
    %491 = vmatpush1.bf16.msra.mxu0 0
    %492 = vmatprep.subr.bf16.mxu0 0
    %493 = vmatpush1.bf16.msra.mxu0 0
    %494 = vmatprep.subr.bf16.mxu0 0
    %495 = vmatpush1.bf16.msra.mxu0 0
    %496 = vmatprep.subr.bf16.mxu0 0
    %497 = vmatpush1.bf16.msra.mxu0 %v257
    %498 = vmatprep.subr.bf16.mxu0 0
    %499 = vmatpush1.bf16.msra.mxu0 %v256
    %500 = vmatprep.subr.bf16.mxu0 0
    %501 = vmatpush2.bf16.msra.mxu0 0
    %502 = vmatprep.subr.bf16.mxu0 0
    %503 = vmatpush2.bf16.msra.mxu0 0
    %504 = vmatprep.subr.bf16.mxu0 0
    %505 = vmatpush2.bf16.msra.mxu0 0
    %506 = vmatprep.subr.bf16.mxu0 0
    %507 = vmatpush2.bf16.msra.mxu0 0
    %508 = vmatprep.subr.bf16.mxu0 0
    %509 = vmatpush2.bf16.msra.mxu0 0
    %510 = vmatprep.subr.bf16.mxu0 0
    %511 = vmatpush2.bf16.msra.mxu0 0
    %512 = vmatprep.subr.bf16.mxu0 0
    %513 = vmatpush2.bf16.msra.mxu0 0
    %514 = vmatprep.subr.bf16.mxu0 0
    %515 = vmatpush2.bf16.msra.mxu0 0
    %516 = vmatprep.mubr.bf16.mxu0 0
    %517 = vmatmul.mubr.bf16.gmra.mxu0 %v482
    %v518 = vpop.f32.mrf.mxu0
    %v519 = vadd.f32 0.0, %v518
    %v520 = vpop.f32.mrf.mxu0
    %v521 = vpop.f32.mrf.mxu0
    %v522 = vpop.f32.mrf.mxu0
    %523 = vdwg.mxu0
    %524 = vmatprep.subr.bf16.mxu0 0
    %525 = vmatpush1.bf16.msra.mxu0 0
    %526 = vmatprep.subr.bf16.mxu0 0
    %527 = vmatpush1.bf16.msra.mxu0 0
    %528 = vmatprep.subr.bf16.mxu0 0
    %529 = vmatpush1.bf16.msra.mxu0 0
    %530 = vmatprep.subr.bf16.mxu0 0
    %531 = vmatpush1.bf16.msra.mxu0 0
    %532 = vmatprep.subr.bf16.mxu0 0
    %533 = vmatpush1.bf16.msra.mxu0 0
    %534 = vmatprep.subr.bf16.mxu0 0
    %535 = vmatpush1.bf16.msra.mxu0 0
    %536 = vmatprep.subr.bf16.mxu0 0
    %537 = vmatpush1.bf16.msra.mxu0 %v312
    %538 = vmatprep.subr.bf16.mxu0 0
    %539 = vmatpush1.bf16.msra.mxu0 %v311
    %540 = vmatprep.subr.bf16.mxu0 0
    %541 = vmatpush2.bf16.msra.mxu0 0
    %542 = vmatprep.subr.bf16.mxu0 0
    %543 = vmatpush2.bf16.msra.mxu0 0
    %544 = vmatprep.subr.bf16.mxu0 0
    %545 = vmatpush2.bf16.msra.mxu0 0
    %546 = vmatprep.subr.bf16.mxu0 0
    %547 = vmatpush2.bf16.msra.mxu0 0
    %548 = vmatprep.subr.bf16.mxu0 0
    %549 = vmatpush2.bf16.msra.mxu0 0
    %550 = vmatprep.subr.bf16.mxu0 0
    %551 = vmatpush2.bf16.msra.mxu0 0
    %552 = vmatprep.subr.bf16.mxu0 0
    %553 = vmatpush2.bf16.msra.mxu0 0
    %554 = vmatprep.subr.bf16.mxu0 0
    %555 = vmatpush2.bf16.msra.mxu0 0
    %556 = vmatprep.mubr.bf16.mxu0 0
    %557 = vmatmul.mubr.bf16.gmra.mxu0 %v381
    %v558 = vpop.f32.mrf.mxu0
    %v559 = vadd.f32 0.0, %v558
    %v560 = vpop.f32.mrf.mxu0
    %v561 = vpop.f32.mrf.mxu0
    %v562 = vpop.f32.mrf.mxu0
    %563 = vdwg.mxu0
    %v564 = vadd.f32 %v476, %v559
    %v565 = vtanh.pop %v564
    %v566 = vmul.f32 %v565, 0.5
    %v567 = vadd.f32 %v566, 0.5
    %v568 = vmul.f32 %v567, %v369
    %570 = vrot.lane.b32.xlu0 %v565, 64
    %v571 = vpop.permute.xlu0 %570
    %v573 = vmul.f32 %v567, %v571
    %575 = vrot.lane.b32.xlu0 %v573, 32
    %v576 = vpop.permute.xlu0 %575
    %v578 = vadd.f32 %v568, %v576
    %v579 = vtanh.pop %v578
    %581 = vrot.lane.b32.xlu0 %v579, 64
    %v582 = vpop.permute.xlu0 %581
    %v584 = vmul.f32 %v567, %v582
    %v585 = vpack.c.bf16 %v584, %v584
    %587 = vrot.lane.b32.xlu0 %v585, 32
    %v588 = vpop.permute.xlu0 %587
    %v590 = vsel %vm147, %v588, 0
    %592 = vmatprep.subr.bf16.mxu0 0
    %593 = vmatpush1.bf16.msra.mxu0 0
    %594 = vmatprep.subr.bf16.mxu0 0
    %595 = vmatpush1.bf16.msra.mxu0 0
    %596 = vmatprep.subr.bf16.mxu0 0
    %597 = vmatpush1.bf16.msra.mxu0 0
    %598 = vmatprep.subr.bf16.mxu0 0
    %599 = vmatpush1.bf16.msra.mxu0 0
    %600 = vmatprep.subr.bf16.mxu0 0
    %601 = vmatpush1.bf16.msra.mxu0 0
    %602 = vmatprep.subr.bf16.mxu0 0
    %603 = vmatpush1.bf16.msra.mxu0 0
    %604 = vmatprep.subr.bf16.mxu0 0
    %605 = vmatpush1.bf16.msra.mxu0 %v144
    %606 = vmatprep.subr.bf16.mxu0 0
    %607 = vmatpush1.bf16.msra.mxu0 %v143
    %608 = vmatprep.subr.bf16.mxu0 0
    %609 = vmatpush2.bf16.msra.mxu0 0
    %610 = vmatprep.subr.bf16.mxu0 0
    %611 = vmatpush2.bf16.msra.mxu0 0
    %612 = vmatprep.subr.bf16.mxu0 0
    %613 = vmatpush2.bf16.msra.mxu0 0
    %614 = vmatprep.subr.bf16.mxu0 0
    %615 = vmatpush2.bf16.msra.mxu0 0
    %616 = vmatprep.subr.bf16.mxu0 0
    %617 = vmatpush2.bf16.msra.mxu0 0
    %618 = vmatprep.subr.bf16.mxu0 0
    %619 = vmatpush2.bf16.msra.mxu0 0
    %620 = vmatprep.subr.bf16.mxu0 0
    %621 = vmatpush2.bf16.msra.mxu0 0
    %622 = vmatprep.subr.bf16.mxu0 0
    %623 = vmatpush2.bf16.msra.mxu0 0
    %624 = vmatprep.mubr.bf16.mxu0 0
    %625 = vmatmul.mubr.bf16.gmra.mxu0 %v590
    %v626 = vpop.f32.mrf.mxu0
    %v627 = vadd.f32 %v519, %v626
    %v628 = vpop.f32.mrf.mxu0
    %v629 = vpop.f32.mrf.mxu0
    %v630 = vpop.f32.mrf.mxu0
    %631 = vdwg.mxu0
    %v632 = vadd.f32 %v627, %v73
    %v633 = vtanh.pop %v632
    %v634 = vmul.f32 %v633, 0.5
    %v635 = vadd.f32 %v634, 0.5
    %v636 = vmul.f32 %v635, %v437
    %638 = vrot.lane.b32.xlu0 %v633, 64
    %v639 = vpop.permute.xlu0 %638
    %v641 = vmul.f32 %v635, %v639
    %643 = vrot.lane.b32.xlu0 %v641, 32
    %v644 = vpop.permute.xlu0 %643
    %v646 = vadd.f32 %v636, %v644
    %v647 = vtanh.pop %v646
    %649 = vrot.lane.b32.xlu0 %v647, 64
    %v650 = vpop.permute.xlu0 %649
    %v652 = vmul.f32 %v635, %v650
    %s653 = sld [smem:[#allocation4 + $0x3]]
    %s654 = scalar_lea.vmem [#allocation5], %s653
    %v655 = vld [vmem:[%s654] sm:$0x1]
    %656 = vst [vmem:[#allocation2] sm:$0x1] %v655
    %s657 = sld [smem:[#allocation4 + $0x83]]
    %s658 = scalar_lea.vmem [#allocation5], %s657
    %v659 = vld [vmem:[%s658] sm:$0x1]
    %660 = vst [vmem:[#allocation2 + $0x1] sm:$0x1] %v659
    %s661 = sld [smem:[#allocation4 + $0x103]]
    %s662 = scalar_lea.vmem [#allocation5], %s661
    %v663 = vld [vmem:[%s662] sm:$0x1]
    %664 = vst [vmem:[#allocation2 + $0x2] sm:$0x1] %v663
    %s665 = sld [smem:[#allocation4 + $0x183]]
    %s666 = scalar_lea.vmem [#allocation5], %s665
    %v667 = vld [vmem:[%s666] sm:$0x1]
    %668 = vst [vmem:[#allocation2 + $0x3] sm:$0x1] %v667
    %s669 = sld [smem:[#allocation4 + $0x203]]
    %s670 = scalar_lea.vmem [#allocation5], %s669
    %v671 = vld [vmem:[%s670] sm:$0x1]
    %672 = vst [vmem:[#allocation2 + $0x4] sm:$0x1] %v671
    %s673 = sld [smem:[#allocation4 + $0x283]]
    %s674 = scalar_lea.vmem [#allocation5], %s673
    %v675 = vld [vmem:[%s674] sm:$0x1]
    %676 = vst [vmem:[#allocation2 + $0x5] sm:$0x1] %v675
    %s677 = sld [smem:[#allocation4 + $0x303]]
    %s678 = scalar_lea.vmem [#allocation5], %s677
    %v679 = vld [vmem:[%s678] sm:$0x1]
    %680 = vst [vmem:[#allocation2 + $0x6] sm:$0x1] %v679
    %s681 = sld [smem:[#allocation4 + $0x383]]
    %s682 = scalar_lea.vmem [#allocation5], %s681
    %v683 = vld [vmem:[%s682] sm:$0x1]
    %684 = vst [vmem:[#allocation2 + $0x7] sm:$0x1] %v683
    %v685 = vld [vmem:[#allocation2] sm:$0xff]
    %v686 = vpack.c.bf16 %v652, %v652
    %688 = vrot.lane.b32.xlu0 %v686, 32
    %v689 = vpop.permute.xlu0 %688
    %v691 = vsel %vm147, %v689, 0
    %693 = vmatprep.subr.bf16.mxu0 0
    %694 = vmatpush1.bf16.msra.mxu0 0
    %695 = vmatprep.subr.bf16.mxu0 0
    %696 = vmatpush1.bf16.msra.mxu0 0
    %697 = vmatprep.subr.bf16.mxu0 0
    %698 = vmatpush1.bf16.msra.mxu0 0
    %699 = vmatprep.subr.bf16.mxu0 0
    %700 = vmatpush1.bf16.msra.mxu0 0
    %701 = vmatprep.subr.bf16.mxu0 0
    %702 = vmatpush1.bf16.msra.mxu0 0
    %703 = vmatprep.subr.bf16.mxu0 0
    %704 = vmatpush1.bf16.msra.mxu0 0
    %705 = vmatprep.subr.bf16.mxu0 0
    %706 = vmatpush1.bf16.msra.mxu0 %v257
    %707 = vmatprep.subr.bf16.mxu0 0
    %708 = vmatpush1.bf16.msra.mxu0 %v256
    %709 = vmatprep.subr.bf16.mxu0 0
    %710 = vmatpush2.bf16.msra.mxu0 0
    %711 = vmatprep.subr.bf16.mxu0 0
    %712 = vmatpush2.bf16.msra.mxu0 0
    %713 = vmatprep.subr.bf16.mxu0 0
    %714 = vmatpush2.bf16.msra.mxu0 0
    %715 = vmatprep.subr.bf16.mxu0 0
    %716 = vmatpush2.bf16.msra.mxu0 0
    %717 = vmatprep.subr.bf16.mxu0 0
    %718 = vmatpush2.bf16.msra.mxu0 0
    %719 = vmatprep.subr.bf16.mxu0 0
    %720 = vmatpush2.bf16.msra.mxu0 0
    %721 = vmatprep.subr.bf16.mxu0 0
    %722 = vmatpush2.bf16.msra.mxu0 0
    %723 = vmatprep.subr.bf16.mxu0 0
    %724 = vmatpush2.bf16.msra.mxu0 0
    %725 = vmatprep.mubr.bf16.mxu0 0
    %726 = vmatmul.mubr.bf16.gmra.mxu0 %v691
    %v727 = vpop.f32.mrf.mxu0
    %v728 = vadd.f32 0.0, %v727
    %v729 = vpop.f32.mrf.mxu0
    %v730 = vpop.f32.mrf.mxu0
    %v731 = vpop.f32.mrf.mxu0
    %732 = vdwg.mxu0
    %733 = vmatprep.subr.bf16.mxu0 0
    %734 = vmatpush1.bf16.msra.mxu0 0
    %735 = vmatprep.subr.bf16.mxu0 0
    %736 = vmatpush1.bf16.msra.mxu0 0
    %737 = vmatprep.subr.bf16.mxu0 0
    %738 = vmatpush1.bf16.msra.mxu0 0
    %739 = vmatprep.subr.bf16.mxu0 0
    %740 = vmatpush1.bf16.msra.mxu0 0
    %741 = vmatprep.subr.bf16.mxu0 0
    %742 = vmatpush1.bf16.msra.mxu0 0
    %743 = vmatprep.subr.bf16.mxu0 0
    %744 = vmatpush1.bf16.msra.mxu0 0
    %745 = vmatprep.subr.bf16.mxu0 0
    %746 = vmatpush1.bf16.msra.mxu0 %v312
    %747 = vmatprep.subr.bf16.mxu0 0
    %748 = vmatpush1.bf16.msra.mxu0 %v311
    %749 = vmatprep.subr.bf16.mxu0 0
    %750 = vmatpush2.bf16.msra.mxu0 0
    %751 = vmatprep.subr.bf16.mxu0 0
    %752 = vmatpush2.bf16.msra.mxu0 0
    %753 = vmatprep.subr.bf16.mxu0 0
    %754 = vmatpush2.bf16.msra.mxu0 0
    %755 = vmatprep.subr.bf16.mxu0 0
    %756 = vmatpush2.bf16.msra.mxu0 0
    %757 = vmatprep.subr.bf16.mxu0 0
    %758 = vmatpush2.bf16.msra.mxu0 0
    %759 = vmatprep.subr.bf16.mxu0 0
    %760 = vmatpush2.bf16.msra.mxu0 0
    %761 = vmatprep.subr.bf16.mxu0 0
    %762 = vmatpush2.bf16.msra.mxu0 0
    %763 = vmatprep.subr.bf16.mxu0 0
    %764 = vmatpush2.bf16.msra.mxu0 0
    %765 = vmatprep.mubr.bf16.mxu0 0
    %766 = vmatmul.mubr.bf16.gmra.mxu0 %v590
    %v767 = vpop.f32.mrf.mxu0
    %v768 = vadd.f32 0.0, %v767
    %v769 = vpop.f32.mrf.mxu0
    %v770 = vpop.f32.mrf.mxu0
    %v771 = vpop.f32.mrf.mxu0
    %772 = vdwg.mxu0
    %v773 = vadd.f32 %v685, %v768
    %v774 = vtanh.pop %v773
    %v775 = vmul.f32 %v774, 0.5
    %v776 = vadd.f32 %v775, 0.5
    %v777 = vmul.f32 %v776, %v578
    %779 = vrot.lane.b32.xlu0 %v774, 64
    %v780 = vpop.permute.xlu0 %779
    %v782 = vmul.f32 %v776, %v780
    %784 = vrot.lane.b32.xlu0 %v782, 32
    %v785 = vpop.permute.xlu0 %784
    %v787 = vadd.f32 %v777, %v785
    %v788 = vtanh.pop %v787
    %790 = vrot.lane.b32.xlu0 %v788, 64
    %v791 = vpop.permute.xlu0 %790
    %v793 = vmul.f32 %v776, %v791
    %v794 = vpack.c.bf16 %v793, %v793
    %796 = vrot.lane.b32.xlu0 %v794, 32
    %v797 = vpop.permute.xlu0 %796
    %v799 = vsel %vm147, %v797, 0
    %801 = vmatprep.subr.bf16.mxu0 0
    %802 = vmatpush1.bf16.msra.mxu0 0
    %803 = vmatprep.subr.bf16.mxu0 0
    %804 = vmatpush1.bf16.msra.mxu0 0
    %805 = vmatprep.subr.bf16.mxu0 0
    %806 = vmatpush1.bf16.msra.mxu0 0
    %807 = vmatprep.subr.bf16.mxu0 0
    %808 = vmatpush1.bf16.msra.mxu0 0
    %809 = vmatprep.subr.bf16.mxu0 0
    %810 = vmatpush1.bf16.msra.mxu0 0
    %811 = vmatprep.subr.bf16.mxu0 0
    %812 = vmatpush1.bf16.msra.mxu0 0
    %813 = vmatprep.subr.bf16.mxu0 0
    %814 = vmatpush1.bf16.msra.mxu0 %v144
    %815 = vmatprep.subr.bf16.mxu0 0
    %816 = vmatpush1.bf16.msra.mxu0 %v143
    %817 = vmatprep.subr.bf16.mxu0 0
    %818 = vmatpush2.bf16.msra.mxu0 0
    %819 = vmatprep.subr.bf16.mxu0 0
    %820 = vmatpush2.bf16.msra.mxu0 0
    %821 = vmatprep.subr.bf16.mxu0 0
    %822 = vmatpush2.bf16.msra.mxu0 0
    %823 = vmatprep.subr.bf16.mxu0 0
    %824 = vmatpush2.bf16.msra.mxu0 0
    %825 = vmatprep.subr.bf16.mxu0 0
    %826 = vmatpush2.bf16.msra.mxu0 0
    %827 = vmatprep.subr.bf16.mxu0 0
    %828 = vmatpush2.bf16.msra.mxu0 0
    %829 = vmatprep.subr.bf16.mxu0 0
    %830 = vmatpush2.bf16.msra.mxu0 0
    %831 = vmatprep.subr.bf16.mxu0 0
    %832 = vmatpush2.bf16.msra.mxu0 0
    %833 = vmatprep.mubr.bf16.mxu0 0
    %834 = vmatmul.mubr.bf16.gmra.mxu0 %v799
    %v835 = vpop.f32.mrf.mxu0
    %v836 = vadd.f32 %v728, %v835
    %v837 = vpop.f32.mrf.mxu0
    %v838 = vpop.f32.mrf.mxu0
    %v839 = vpop.f32.mrf.mxu0
    %840 = vdwg.mxu0
    %v841 = vadd.f32 %v836, %v73
    %v842 = vtanh.pop %v841
    %v843 = vmul.f32 %v842, 0.5
    %v844 = vadd.f32 %v843, 0.5
    %v845 = vmul.f32 %v844, %v646
    %847 = vrot.lane.b32.xlu0 %v842, 64
    %v848 = vpop.permute.xlu0 %847
    %v850 = vmul.f32 %v844, %v848
    %852 = vrot.lane.b32.xlu0 %v850, 32
    %v853 = vpop.permute.xlu0 %852
    %v855 = vadd.f32 %v845, %v853
    %v856 = vtanh.pop %v855
    %858 = vrot.lane.b32.xlu0 %v856, 64
    %v859 = vpop.permute.xlu0 %858
    %v861 = vmul.f32 %v844, %v859
    %s862 = sld [smem:[#allocation4 + $0x4]]
    %s863 = scalar_lea.vmem [#allocation5], %s862
    %v864 = vld [vmem:[%s863] sm:$0x1]
    %865 = vst [vmem:[#allocation2] sm:$0x1] %v864
    %s866 = sld [smem:[#allocation4 + $0x84]]
    %s867 = scalar_lea.vmem [#allocation5], %s866
    %v868 = vld [vmem:[%s867] sm:$0x1]
    %869 = vst [vmem:[#allocation2 + $0x1] sm:$0x1] %v868
    %s870 = sld [smem:[#allocation4 + $0x104]]
    %s871 = scalar_lea.vmem [#allocation5], %s870
    %v872 = vld [vmem:[%s871] sm:$0x1]
    %873 = vst [vmem:[#allocation2 + $0x2] sm:$0x1] %v872
    %s874 = sld [smem:[#allocation4 + $0x184]]
    %s875 = scalar_lea.vmem [#allocation5], %s874
    %v876 = vld [vmem:[%s875] sm:$0x1]
    %877 = vst [vmem:[#allocation2 + $0x3] sm:$0x1] %v876
    %s878 = sld [smem:[#allocation4 + $0x204]]
    %s879 = scalar_lea.vmem [#allocation5], %s878
    %v880 = vld [vmem:[%s879] sm:$0x1]
    %881 = vst [vmem:[#allocation2 + $0x4] sm:$0x1] %v880
    %s882 = sld [smem:[#allocation4 + $0x284]]
    %s883 = scalar_lea.vmem [#allocation5], %s882
    %v884 = vld [vmem:[%s883] sm:$0x1]
    %885 = vst [vmem:[#allocation2 + $0x5] sm:$0x1] %v884
    %s886 = sld [smem:[#allocation4 + $0x304]]
    %s887 = scalar_lea.vmem [#allocation5], %s886
    %v888 = vld [vmem:[%s887] sm:$0x1]
    %889 = vst [vmem:[#allocation2 + $0x6] sm:$0x1] %v888
    %s890 = sld [smem:[#allocation4 + $0x384]]
    %s891 = scalar_lea.vmem [#allocation5], %s890
    %v892 = vld [vmem:[%s891] sm:$0x1]
    %893 = vst [vmem:[#allocation2 + $0x7] sm:$0x1] %v892
    %v894 = vld [vmem:[#allocation2] sm:$0xff]
    %v895 = vpack.c.bf16 %v861, %v861
    %897 = vrot.lane.b32.xlu0 %v895, 32
    %v898 = vpop.permute.xlu0 %897
    %v900 = vsel %vm147, %v898, 0
    %902 = vmatprep.subr.bf16.mxu0 0
    %903 = vmatpush1.bf16.msra.mxu0 0
    %904 = vmatprep.subr.bf16.mxu0 0
    %905 = vmatpush1.bf16.msra.mxu0 0
    %906 = vmatprep.subr.bf16.mxu0 0
    %907 = vmatpush1.bf16.msra.mxu0 0
    %908 = vmatprep.subr.bf16.mxu0 0
    %909 = vmatpush1.bf16.msra.mxu0 0
    %910 = vmatprep.subr.bf16.mxu0 0
    %911 = vmatpush1.bf16.msra.mxu0 0
    %912 = vmatprep.subr.bf16.mxu0 0
    %913 = vmatpush1.bf16.msra.mxu0 0
    %914 = vmatprep.subr.bf16.mxu0 0
    %915 = vmatpush1.bf16.msra.mxu0 %v257
    %916 = vmatprep.subr.bf16.mxu0 0
    %917 = vmatpush1.bf16.msra.mxu0 %v256
    %918 = vmatprep.subr.bf16.mxu0 0
    %919 = vmatpush2.bf16.msra.mxu0 0
    %920 = vmatprep.subr.bf16.mxu0 0
    %921 = vmatpush2.bf16.msra.mxu0 0
    %922 = vmatprep.subr.bf16.mxu0 0
    %923 = vmatpush2.bf16.msra.mxu0 0
    %924 = vmatprep.subr.bf16.mxu0 0
    %925 = vmatpush2.bf16.msra.mxu0 0
    %926 = vmatprep.subr.bf16.mxu0 0
    %927 = vmatpush2.bf16.msra.mxu0 0
    %928 = vmatprep.subr.bf16.mxu0 0
    %929 = vmatpush2.bf16.msra.mxu0 0
    %930 = vmatprep.subr.bf16.mxu0 0
    %931 = vmatpush2.bf16.msra.mxu0 0
    %932 = vmatprep.subr.bf16.mxu0 0
    %933 = vmatpush2.bf16.msra.mxu0 0
    %934 = vmatprep.mubr.bf16.mxu0 0
    %935 = vmatmul.mubr.bf16.gmra.mxu0 %v900
    %v936 = vpop.f32.mrf.mxu0
    %v937 = vadd.f32 0.0, %v936
    %v938 = vpop.f32.mrf.mxu0
    %v939 = vpop.f32.mrf.mxu0
    %v940 = vpop.f32.mrf.mxu0
    %941 = vdwg.mxu0
    %942 = vmatprep.subr.bf16.mxu0 0
    %943 = vmatpush1.bf16.msra.mxu0 0
    %944 = vmatprep.subr.bf16.mxu0 0
    %945 = vmatpush1.bf16.msra.mxu0 0
    %946 = vmatprep.subr.bf16.mxu0 0
    %947 = vmatpush1.bf16.msra.mxu0 0
    %948 = vmatprep.subr.bf16.mxu0 0
    %949 = vmatpush1.bf16.msra.mxu0 0
    %950 = vmatprep.subr.bf16.mxu0 0
    %951 = vmatpush1.bf16.msra.mxu0 0
    %952 = vmatprep.subr.bf16.mxu0 0
    %953 = vmatpush1.bf16.msra.mxu0 0
    %954 = vmatprep.subr.bf16.mxu0 0
    %955 = vmatpush1.bf16.msra.mxu0 %v312
    %956 = vmatprep.subr.bf16.mxu0 0
    %957 = vmatpush1.bf16.msra.mxu0 %v311
    %958 = vmatprep.subr.bf16.mxu0 0
    %959 = vmatpush2.bf16.msra.mxu0 0
    %960 = vmatprep.subr.bf16.mxu0 0
    %961 = vmatpush2.bf16.msra.mxu0 0
    %962 = vmatprep.subr.bf16.mxu0 0
    %963 = vmatpush2.bf16.msra.mxu0 0
    %964 = vmatprep.subr.bf16.mxu0 0
    %965 = vmatpush2.bf16.msra.mxu0 0
    %966 = vmatprep.subr.bf16.mxu0 0
    %967 = vmatpush2.bf16.msra.mxu0 0
    %968 = vmatprep.subr.bf16.mxu0 0
    %969 = vmatpush2.bf16.msra.mxu0 0
    %970 = vmatprep.subr.bf16.mxu0 0
    %971 = vmatpush2.bf16.msra.mxu0 0
    %972 = vmatprep.subr.bf16.mxu0 0
    %973 = vmatpush2.bf16.msra.mxu0 0
    %974 = vmatprep.mubr.bf16.mxu0 0
    %975 = vmatmul.mubr.bf16.gmra.mxu0 %v799
    %v976 = vpop.f32.mrf.mxu0
    %v977 = vadd.f32 0.0, %v976
    %v978 = vpop.f32.mrf.mxu0
    %v979 = vpop.f32.mrf.mxu0
    %v980 = vpop.f32.mrf.mxu0
    %981 = vdwg.mxu0
    %v982 = vadd.f32 %v894, %v977
    %v983 = vtanh.pop %v982
    %v984 = vmul.f32 %v983, 0.5
    %v985 = vadd.f32 %v984, 0.5
    %v986 = vmul.f32 %v985, %v787
    %988 = vrot.lane.b32.xlu0 %v983, 64
    %v989 = vpop.permute.xlu0 %988
    %v991 = vmul.f32 %v985, %v989
    %993 = vrot.lane.b32.xlu0 %v991, 32
    %v994 = vpop.permute.xlu0 %993
    %v996 = vadd.f32 %v986, %v994
    %v997 = vtanh.pop %v996
    %999 = vrot.lane.b32.xlu0 %v997, 64
    %v1000 = vpop.permute.xlu0 %999
    %v1002 = vmul.f32 %v985, %v1000
    %v1003 = vpack.c.bf16 %v1002, %v1002
    %1005 = vrot.lane.b32.xlu0 %v1003, 32
    %v1006 = vpop.permute.xlu0 %1005
    %v1008 = vsel %vm147, %v1006, 0
    %1010 = vmatprep.subr.bf16.mxu0 0
    %1011 = vmatpush1.bf16.msra.mxu0 0
    %1012 = vmatprep.subr.bf16.mxu0 0
    %1013 = vmatpush1.bf16.msra.mxu0 0
    %1014 = vmatprep.subr.bf16.mxu0 0
    %1015 = vmatpush1.bf16.msra.mxu0 0
    %1016 = vmatprep.subr.bf16.mxu0 0
    %1017 = vmatpush1.bf16.msra.mxu0 0
    %1018 = vmatprep.subr.bf16.mxu0 0
    %1019 = vmatpush1.bf16.msra.mxu0 0
    %1020 = vmatprep.subr.bf16.mxu0 0
    %1021 = vmatpush1.bf16.msra.mxu0 0
    %1022 = vmatprep.subr.bf16.mxu0 0
    %1023 = vmatpush1.bf16.msra.mxu0 %v144
    %1024 = vmatprep.subr.bf16.mxu0 0
    %1025 = vmatpush1.bf16.msra.mxu0 %v143
    %1026 = vmatprep.subr.bf16.mxu0 0
    %1027 = vmatpush2.bf16.msra.mxu0 0
    %1028 = vmatprep.subr.bf16.mxu0 0
    %1029 = vmatpush2.bf16.msra.mxu0 0
    %1030 = vmatprep.subr.bf16.mxu0 0
    %1031 = vmatpush2.bf16.msra.mxu0 0
    %1032 = vmatprep.subr.bf16.mxu0 0
    %1033 = vmatpush2.bf16.msra.mxu0 0
    %1034 = vmatprep.subr.bf16.mxu0 0
    %1035 = vmatpush2.bf16.msra.mxu0 0
    %1036 = vmatprep.subr.bf16.mxu0 0
    %1037 = vmatpush2.bf16.msra.mxu0 0
    %1038 = vmatprep.subr.bf16.mxu0 0
    %1039 = vmatpush2.bf16.msra.mxu0 0
    %1040 = vmatprep.subr.bf16.mxu0 0
    %1041 = vmatpush2.bf16.msra.mxu0 0
    %1042 = vmatprep.mubr.bf16.mxu0 0
    %1043 = vmatmul.mubr.bf16.gmra.mxu0 %v1008
    %v1044 = vpop.f32.mrf.mxu0
    %v1045 = vadd.f32 %v937, %v1044
    %v1046 = vpop.f32.mrf.mxu0
    %v1047 = vpop.f32.mrf.mxu0
    %v1048 = vpop.f32.mrf.mxu0
    %1049 = vdwg.mxu0
    %v1050 = vadd.f32 %v1045, %v73
    %v1051 = vtanh.pop %v1050
    %v1052 = vmul.f32 %v1051, 0.5
    %v1053 = vadd.f32 %v1052, 0.5
    %v1054 = vmul.f32 %v1053, %v855
    %1056 = vrot.lane.b32.xlu0 %v1051, 64
    %v1057 = vpop.permute.xlu0 %1056
    %v1059 = vmul.f32 %v1053, %v1057
    %1061 = vrot.lane.b32.xlu0 %v1059, 32
    %v1062 = vpop.permute.xlu0 %1061
    %v1064 = vadd.f32 %v1054, %v1062
    %v1065 = vtanh.pop %v1064
    %1067 = vrot.lane.b32.xlu0 %v1065, 64
    %v1068 = vpop.permute.xlu0 %1067
    %v1070 = vmul.f32 %v1053, %v1068
    %s1071 = sld [smem:[#allocation4 + $0x5]]
    %s1072 = scalar_lea.vmem [#allocation5], %s1071
    %v1073 = vld [vmem:[%s1072] sm:$0x1]
    %1074 = vst [vmem:[#allocation2] sm:$0x1] %v1073
    %s1075 = sld [smem:[#allocation4 + $0x85]]
    %s1076 = scalar_lea.vmem [#allocation5], %s1075
    %v1077 = vld [vmem:[%s1076] sm:$0x1]
    %1078 = vst [vmem:[#allocation2 + $0x1] sm:$0x1] %v1077
    %s1079 = sld [smem:[#allocation4 + $0x105]]
    %s1080 = scalar_lea.vmem [#allocation5], %s1079
    %v1081 = vld [vmem:[%s1080] sm:$0x1]
    %1082 = vst [vmem:[#allocation2 + $0x2] sm:$0x1] %v1081
    %s1083 = sld [smem:[#allocation4 + $0x185]]
    %s1084 = scalar_lea.vmem [#allocation5], %s1083
    %v1085 = vld [vmem:[%s1084] sm:$0x1]
    %1086 = vst [vmem:[#allocation2 + $0x3] sm:$0x1] %v1085
    %s1087 = sld [smem:[#allocation4 + $0x205]]
    %s1088 = scalar_lea.vmem [#allocation5], %s1087
    %v1089 = vld [vmem:[%s1088] sm:$0x1]
    %1090 = vst [vmem:[#allocation2 + $0x4] sm:$0x1] %v1089
    %s1091 = sld [smem:[#allocation4 + $0x285]]
    %s1092 = scalar_lea.vmem [#allocation5], %s1091
    %v1093 = vld [vmem:[%s1092] sm:$0x1]
    %1094 = vst [vmem:[#allocation2 + $0x5] sm:$0x1] %v1093
    %s1095 = sld [smem:[#allocation4 + $0x305]]
    %s1096 = scalar_lea.vmem [#allocation5], %s1095
    %v1097 = vld [vmem:[%s1096] sm:$0x1]
    %1098 = vst [vmem:[#allocation2 + $0x6] sm:$0x1] %v1097
    %s1099 = sld [smem:[#allocation4 + $0x385]]
    %s1100 = scalar_lea.vmem [#allocation5], %s1099
    %v1101 = vld [vmem:[%s1100] sm:$0x1]
    %1102 = vst [vmem:[#allocation2 + $0x7] sm:$0x1] %v1101
    %v1103 = vld [vmem:[#allocation2] sm:$0xff]
    %v1104 = vpack.c.bf16 %v1070, %v1070
    %1106 = vrot.lane.b32.xlu0 %v1104, 32
    %v1107 = vpop.permute.xlu0 %1106
    %v1109 = vsel %vm147, %v1107, 0
    %1111 = vmatprep.subr.bf16.mxu0 0
    %1112 = vmatpush1.bf16.msra.mxu0 0
    %1113 = vmatprep.subr.bf16.mxu0 0
    %1114 = vmatpush1.bf16.msra.mxu0 0
    %1115 = vmatprep.subr.bf16.mxu0 0
    %1116 = vmatpush1.bf16.msra.mxu0 0
    %1117 = vmatprep.subr.bf16.mxu0 0
    %1118 = vmatpush1.bf16.msra.mxu0 0
    %1119 = vmatprep.subr.bf16.mxu0 0
    %1120 = vmatpush1.bf16.msra.mxu0 0
    %1121 = vmatprep.subr.bf16.mxu0 0
    %1122 = vmatpush1.bf16.msra.mxu0 0
    %1123 = vmatprep.subr.bf16.mxu0 0
    %1124 = vmatpush1.bf16.msra.mxu0 %v257
    %1125 = vmatprep.subr.bf16.mxu0 0
    %1126 = vmatpush1.bf16.msra.mxu0 %v256
    %1127 = vmatprep.subr.bf16.mxu0 0
    %1128 = vmatpush2.bf16.msra.mxu0 0
    %1129 = vmatprep.subr.bf16.mxu0 0
    %1130 = vmatpush2.bf16.msra.mxu0 0
    %1131 = vmatprep.subr.bf16.mxu0 0
    %1132 = vmatpush2.bf16.msra.mxu0 0
    %1133 = vmatprep.subr.bf16.mxu0 0
    %1134 = vmatpush2.bf16.msra.mxu0 0
    %1135 = vmatprep.subr.bf16.mxu0 0
    %1136 = vmatpush2.bf16.msra.mxu0 0
    %1137 = vmatprep.subr.bf16.mxu0 0
    %1138 = vmatpush2.bf16.msra.mxu0 0
    %1139 = vmatprep.subr.bf16.mxu0 0
    %1140 = vmatpush2.bf16.msra.mxu0 0
    %1141 = vmatprep.subr.bf16.mxu0 0
    %1142 = vmatpush2.bf16.msra.mxu0 0
    %1143 = vmatprep.mubr.bf16.mxu0 0
    %1144 = vmatmul.mubr.bf16.gmra.mxu0 %v1109
    %v1145 = vpop.f32.mrf.mxu0
    %v1146 = vadd.f32 0.0, %v1145
    %v1147 = vpop.f32.mrf.mxu0
    %v1148 = vpop.f32.mrf.mxu0
    %v1149 = vpop.f32.mrf.mxu0
    %1150 = vdwg.mxu0
    %1151 = vmatprep.subr.bf16.mxu0 0
    %1152 = vmatpush1.bf16.msra.mxu0 0
    %1153 = vmatprep.subr.bf16.mxu0 0
    %1154 = vmatpush1.bf16.msra.mxu0 0
    %1155 = vmatprep.subr.bf16.mxu0 0
    %1156 = vmatpush1.bf16.msra.mxu0 0
    %1157 = vmatprep.subr.bf16.mxu0 0
    %1158 = vmatpush1.bf16.msra.mxu0 0
    %1159 = vmatprep.subr.bf16.mxu0 0
    %1160 = vmatpush1.bf16.msra.mxu0 0
    %1161 = vmatprep.subr.bf16.mxu0 0
    %1162 = vmatpush1.bf16.msra.mxu0 0
    %1163 = vmatprep.subr.bf16.mxu0 0
    %1164 = vmatpush1.bf16.msra.mxu0 %v312
    %1165 = vmatprep.subr.bf16.mxu0 0
    %1166 = vmatpush1.bf16.msra.mxu0 %v311
    %1167 = vmatprep.subr.bf16.mxu0 0
    %1168 = vmatpush2.bf16.msra.mxu0 0
    %1169 = vmatprep.subr.bf16.mxu0 0
    %1170 = vmatpush2.bf16.msra.mxu0 0
    %1171 = vmatprep.subr.bf16.mxu0 0
    %1172 = vmatpush2.bf16.msra.mxu0 0
    %1173 = vmatprep.subr.bf16.mxu0 0
    %1174 = vmatpush2.bf16.msra.mxu0 0
    %1175 = vmatprep.subr.bf16.mxu0 0
    %1176 = vmatpush2.bf16.msra.mxu0 0
    %1177 = vmatprep.subr.bf16.mxu0 0
    %1178 = vmatpush2.bf16.msra.mxu0 0
    %1179 = vmatprep.subr.bf16.mxu0 0
    %1180 = vmatpush2.bf16.msra.mxu0 0
    %1181 = vmatprep.subr.bf16.mxu0 0
    %1182 = vmatpush2.bf16.msra.mxu0 0
    %1183 = vmatprep.mubr.bf16.mxu0 0
    %1184 = vmatmul.mubr.bf16.gmra.mxu0 %v1008
    %v1185 = vpop.f32.mrf.mxu0
    %v1186 = vadd.f32 0.0, %v1185
    %v1187 = vpop.f32.mrf.mxu0
    %v1188 = vpop.f32.mrf.mxu0
    %v1189 = vpop.f32.mrf.mxu0
    %1190 = vdwg.mxu0
    %v1191 = vadd.f32 %v1103, %v1186
    %v1192 = vtanh.pop %v1191
    %v1193 = vmul.f32 %v1192, 0.5
    %v1194 = vadd.f32 %v1193, 0.5
    %v1195 = vmul.f32 %v1194, %v996
    %1197 = vrot.lane.b32.xlu0 %v1192, 64
    %v1198 = vpop.permute.xlu0 %1197
    %v1200 = vmul.f32 %v1194, %v1198
    %1202 = vrot.lane.b32.xlu0 %v1200, 32
    %v1203 = vpop.permute.xlu0 %1202
    %v1205 = vadd.f32 %v1195, %v1203
    %v1206 = vtanh.pop %v1205
    %1208 = vrot.lane.b32.xlu0 %v1206, 64
    %v1209 = vpop.permute.xlu0 %1208
    %v1211 = vmul.f32 %v1194, %v1209
    %v1212 = vpack.c.bf16 %v1211, %v1211
    %1214 = vrot.lane.b32.xlu0 %v1212, 32
    %v1215 = vpop.permute.xlu0 %1214
    %v1217 = vsel %vm147, %v1215, 0
    %1219 = vmatprep.subr.bf16.mxu0 0
    %1220 = vmatpush1.bf16.msra.mxu0 0
    %1221 = vmatprep.subr.bf16.mxu0 0
    %1222 = vmatpush1.bf16.msra.mxu0 0
    %1223 = vmatprep.subr.bf16.mxu0 0
    %1224 = vmatpush1.bf16.msra.mxu0 0
    %1225 = vmatprep.subr.bf16.mxu0 0
    %1226 = vmatpush1.bf16.msra.mxu0 0
    %1227 = vmatprep.subr.bf16.mxu0 0
    %1228 = vmatpush1.bf16.msra.mxu0 0
    %1229 = vmatprep.subr.bf16.mxu0 0
    %1230 = vmatpush1.bf16.msra.mxu0 0
    %1231 = vmatprep.subr.bf16.mxu0 0
    %1232 = vmatpush1.bf16.msra.mxu0 %v144
    %1233 = vmatprep.subr.bf16.mxu0 0
    %1234 = vmatpush1.bf16.msra.mxu0 %v143
    %1235 = vmatprep.subr.bf16.mxu0 0
    %1236 = vmatpush2.bf16.msra.mxu0 0
    %1237 = vmatprep.subr.bf16.mxu0 0
    %1238 = vmatpush2.bf16.msra.mxu0 0
    %1239 = vmatprep.subr.bf16.mxu0 0
    %1240 = vmatpush2.bf16.msra.mxu0 0
    %1241 = vmatprep.subr.bf16.mxu0 0
    %1242 = vmatpush2.bf16.msra.mxu0 0
    %1243 = vmatprep.subr.bf16.mxu0 0
    %1244 = vmatpush2.bf16.msra.mxu0 0
    %1245 = vmatprep.subr.bf16.mxu0 0
    %1246 = vmatpush2.bf16.msra.mxu0 0
    %1247 = vmatprep.subr.bf16.mxu0 0
    %1248 = vmatpush2.bf16.msra.mxu0 0
    %1249 = vmatprep.subr.bf16.mxu0 0
    %1250 = vmatpush2.bf16.msra.mxu0 0
    %1251 = vmatprep.mubr.bf16.mxu0 0
    %1252 = vmatmul.mubr.bf16.gmra.mxu0 %v1217
    %v1253 = vpop.f32.mrf.mxu0
    %v1254 = vadd.f32 %v1146, %v1253
    %v1255 = vpop.f32.mrf.mxu0
    %v1256 = vpop.f32.mrf.mxu0
    %v1257 = vpop.f32.mrf.mxu0
    %1258 = vdwg.mxu0
    %v1259 = vadd.f32 %v1254, %v73
    %v1260 = vtanh.pop %v1259
    %v1261 = vmul.f32 %v1260, 0.5
    %v1262 = vadd.f32 %v1261, 0.5
    %v1263 = vmul.f32 %v1262, %v1064
    %1265 = vrot.lane.b32.xlu0 %v1260, 64
    %v1266 = vpop.permute.xlu0 %1265
    %v1268 = vmul.f32 %v1262, %v1266
    %1270 = vrot.lane.b32.xlu0 %v1268, 32
    %v1271 = vpop.permute.xlu0 %1270
    %v1273 = vadd.f32 %v1263, %v1271
    %v1274 = vtanh.pop %v1273
    %1276 = vrot.lane.b32.xlu0 %v1274, 64
    %v1277 = vpop.permute.xlu0 %1276
    %v1279 = vmul.f32 %v1262, %v1277
    %s1280 = sld [smem:[#allocation4 + $0x6]]
    %s1281 = scalar_lea.vmem [#allocation5], %s1280
    %v1282 = vld [vmem:[%s1281] sm:$0x1]
    %1283 = vst [vmem:[#allocation2] sm:$0x1] %v1282
    %s1284 = sld [smem:[#allocation4 + $0x86]]
    %s1285 = scalar_lea.vmem [#allocation5], %s1284
    %v1286 = vld [vmem:[%s1285] sm:$0x1]
    %1287 = vst [vmem:[#allocation2 + $0x1] sm:$0x1] %v1286
    %s1288 = sld [smem:[#allocation4 + $0x106]]
    %s1289 = scalar_lea.vmem [#allocation5], %s1288
    %v1290 = vld [vmem:[%s1289] sm:$0x1]
    %1291 = vst [vmem:[#allocation2 + $0x2] sm:$0x1] %v1290
    %s1292 = sld [smem:[#allocation4 + $0x186]]
    %s1293 = scalar_lea.vmem [#allocation5], %s1292
    %v1294 = vld [vmem:[%s1293] sm:$0x1]
    %1295 = vst [vmem:[#allocation2 + $0x3] sm:$0x1] %v1294
    %s1296 = sld [smem:[#allocation4 + $0x206]]
    %s1297 = scalar_lea.vmem [#allocation5], %s1296
    %v1298 = vld [vmem:[%s1297] sm:$0x1]
    %1299 = vst [vmem:[#allocation2 + $0x4] sm:$0x1] %v1298
    %s1300 = sld [smem:[#allocation4 + $0x286]]
    %s1301 = scalar_lea.vmem [#allocation5], %s1300
    %v1302 = vld [vmem:[%s1301] sm:$0x1]
    %1303 = vst [vmem:[#allocation2 + $0x5] sm:$0x1] %v1302
    %s1304 = sld [smem:[#allocation4 + $0x306]]
    %s1305 = scalar_lea.vmem [#allocation5], %s1304
    %v1306 = vld [vmem:[%s1305] sm:$0x1]
    %1307 = vst [vmem:[#allocation2 + $0x6] sm:$0x1] %v1306
    %s1308 = sld [smem:[#allocation4 + $0x386]]
    %s1309 = scalar_lea.vmem [#allocation5], %s1308
    %v1310 = vld [vmem:[%s1309] sm:$0x1]
    %1311 = vst [vmem:[#allocation2 + $0x7] sm:$0x1] %v1310
    %v1312 = vld [vmem:[#allocation2] sm:$0xff]
    %v1313 = vpack.c.bf16 %v1279, %v1279
    %1315 = vrot.lane.b32.xlu0 %v1313, 32
    %v1316 = vpop.permute.xlu0 %1315
    %v1318 = vsel %vm147, %v1316, 0
    %1320 = vmatprep.subr.bf16.mxu0 0
    %1321 = vmatpush1.bf16.msra.mxu0 0
    %1322 = vmatprep.subr.bf16.mxu0 0
    %1323 = vmatpush1.bf16.msra.mxu0 0
    %1324 = vmatprep.subr.bf16.mxu0 0
    %1325 = vmatpush1.bf16.msra.mxu0 0
    %1326 = vmatprep.subr.bf16.mxu0 0
    %1327 = vmatpush1.bf16.msra.mxu0 0
    %1328 = vmatprep.subr.bf16.mxu0 0
    %1329 = vmatpush1.bf16.msra.mxu0 0
    %1330 = vmatprep.subr.bf16.mxu0 0
    %1331 = vmatpush1.bf16.msra.mxu0 0
    %1332 = vmatprep.subr.bf16.mxu0 0
    %1333 = vmatpush1.bf16.msra.mxu0 %v257
    %1334 = vmatprep.subr.bf16.mxu0 0
    %1335 = vmatpush1.bf16.msra.mxu0 %v256
    %1336 = vmatprep.subr.bf16.mxu0 0
    %1337 = vmatpush2.bf16.msra.mxu0 0
    %1338 = vmatprep.subr.bf16.mxu0 0
    %1339 = vmatpush2.bf16.msra.mxu0 0
    %1340 = vmatprep.subr.bf16.mxu0 0
    %1341 = vmatpush2.bf16.msra.mxu0 0
    %1342 = vmatprep.subr.bf16.mxu0 0
    %1343 = vmatpush2.bf16.msra.mxu0 0
    %1344 = vmatprep.subr.bf16.mxu0 0
    %1345 = vmatpush2.bf16.msra.mxu0 0
    %1346 = vmatprep.subr.bf16.mxu0 0
    %1347 = vmatpush2.bf16.msra.mxu0 0
    %1348 = vmatprep.subr.bf16.mxu0 0
    %1349 = vmatpush2.bf16.msra.mxu0 0
    %1350 = vmatprep.subr.bf16.mxu0 0
    %1351 = vmatpush2.bf16.msra.mxu0 0
    %1352 = vmatprep.mubr.bf16.mxu0 0
    %1353 = vmatmul.mubr.bf16.gmra.mxu0 %v1318
    %v1354 = vpop.f32.mrf.mxu0
    %v1355 = vadd.f32 0.0, %v1354
    %v1356 = vpop.f32.mrf.mxu0
    %v1357 = vpop.f32.mrf.mxu0
    %v1358 = vpop.f32.mrf.mxu0
    %1359 = vdwg.mxu0
    %1360 = vmatprep.subr.bf16.mxu0 0
    %1361 = vmatpush1.bf16.msra.mxu0 0
    %1362 = vmatprep.subr.bf16.mxu0 0
    %1363 = vmatpush1.bf16.msra.mxu0 0
    %1364 = vmatprep.subr.bf16.mxu0 0
    %1365 = vmatpush1.bf16.msra.mxu0 0
    %1366 = vmatprep.subr.bf16.mxu0 0
    %1367 = vmatpush1.bf16.msra.mxu0 0
    %1368 = vmatprep.subr.bf16.mxu0 0
    %1369 = vmatpush1.bf16.msra.mxu0 0
    %1370 = vmatprep.subr.bf16.mxu0 0
    %1371 = vmatpush1.bf16.msra.mxu0 0
    %1372 = vmatprep.subr.bf16.mxu0 0
    %1373 = vmatpush1.bf16.msra.mxu0 %v312
    %1374 = vmatprep.subr.bf16.mxu0 0
    %1375 = vmatpush1.bf16.msra.mxu0 %v311
    %1376 = vmatprep.subr.bf16.mxu0 0
    %1377 = vmatpush2.bf16.msra.mxu0 0
    %1378 = vmatprep.subr.bf16.mxu0 0
    %1379 = vmatpush2.bf16.msra.mxu0 0
    %1380 = vmatprep.subr.bf16.mxu0 0
    %1381 = vmatpush2.bf16.msra.mxu0 0
    %1382 = vmatprep.subr.bf16.mxu0 0
    %1383 = vmatpush2.bf16.msra.mxu0 0
    %1384 = vmatprep.subr.bf16.mxu0 0
    %1385 = vmatpush2.bf16.msra.mxu0 0
    %1386 = vmatprep.subr.bf16.mxu0 0
    %1387 = vmatpush2.bf16.msra.mxu0 0
    %1388 = vmatprep.subr.bf16.mxu0 0
    %1389 = vmatpush2.bf16.msra.mxu0 0
    %1390 = vmatprep.subr.bf16.mxu0 0
    %1391 = vmatpush2.bf16.msra.mxu0 0
    %1392 = vmatprep.mubr.bf16.mxu0 0
    %1393 = vmatmul.mubr.bf16.gmra.mxu0 %v1217
    %v1394 = vpop.f32.mrf.mxu0
    %v1395 = vadd.f32 0.0, %v1394
    %v1396 = vpop.f32.mrf.mxu0
    %v1397 = vpop.f32.mrf.mxu0
    %v1398 = vpop.f32.mrf.mxu0
    %1399 = vdwg.mxu0
    %v1400 = vadd.f32 %v1312, %v1395
    %v1401 = vtanh.pop %v1400
    %v1402 = vmul.f32 %v1401, 0.5
    %v1403 = vadd.f32 %v1402, 0.5
    %v1404 = vmul.f32 %v1403, %v1205
    %1406 = vrot.lane.b32.xlu0 %v1401, 64
    %v1407 = vpop.permute.xlu0 %1406
    %v1409 = vmul.f32 %v1403, %v1407
    %1411 = vrot.lane.b32.xlu0 %v1409, 32
    %v1412 = vpop.permute.xlu0 %1411
    %v1414 = vadd.f32 %v1404, %v1412
    %v1415 = vtanh.pop %v1414
    %1417 = vrot.lane.b32.xlu0 %v1415, 64
    %v1418 = vpop.permute.xlu0 %1417
    %v1420 = vmul.f32 %v1403, %v1418
    %v1421 = vpack.c.bf16 %v1420, %v1420
    %1423 = vrot.lane.b32.xlu0 %v1421, 32
    %v1424 = vpop.permute.xlu0 %1423
    %v1426 = vsel %vm147, %v1424, 0
    %1428 = vmatprep.subr.bf16.mxu0 0
    %1429 = vmatpush1.bf16.msra.mxu0 0
    %1430 = vmatprep.subr.bf16.mxu0 0
    %1431 = vmatpush1.bf16.msra.mxu0 0
    %1432 = vmatprep.subr.bf16.mxu0 0
    %1433 = vmatpush1.bf16.msra.mxu0 0
    %1434 = vmatprep.subr.bf16.mxu0 0
    %1435 = vmatpush1.bf16.msra.mxu0 0
    %1436 = vmatprep.subr.bf16.mxu0 0
    %1437 = vmatpush1.bf16.msra.mxu0 0
    %1438 = vmatprep.subr.bf16.mxu0 0
    %1439 = vmatpush1.bf16.msra.mxu0 0
    %1440 = vmatprep.subr.bf16.mxu0 0
    %1441 = vmatpush1.bf16.msra.mxu0 %v144
    %1442 = vmatprep.subr.bf16.mxu0 0
    %1443 = vmatpush1.bf16.msra.mxu0 %v143
    %1444 = vmatprep.subr.bf16.mxu0 0
    %1445 = vmatpush2.bf16.msra.mxu0 0
    %1446 = vmatprep.subr.bf16.mxu0 0
    %1447 = vmatpush2.bf16.msra.mxu0 0
    %1448 = vmatprep.subr.bf16.mxu0 0
    %1449 = vmatpush2.bf16.msra.mxu0 0
    %1450 = vmatprep.subr.bf16.mxu0 0
    %1451 = vmatpush2.bf16.msra.mxu0 0
    %1452 = vmatprep.subr.bf16.mxu0 0
    %1453 = vmatpush2.bf16.msra.mxu0 0
    %1454 = vmatprep.subr.bf16.mxu0 0
    %1455 = vmatpush2.bf16.msra.mxu0 0
    %1456 = vmatprep.subr.bf16.mxu0 0
    %1457 = vmatpush2.bf16.msra.mxu0 0
    %1458 = vmatprep.subr.bf16.mxu0 0
    %1459 = vmatpush2.bf16.msra.mxu0 0
    %1460 = vmatprep.mubr.bf16.mxu0 0
    %1461 = vmatmul.mubr.bf16.gmra.mxu0 %v1426
    %v1462 = vpop.f32.mrf.mxu0
    %v1463 = vadd.f32 %v1355, %v1462
    %v1464 = vpop.f32.mrf.mxu0
    %v1465 = vpop.f32.mrf.mxu0
    %v1466 = vpop.f32.mrf.mxu0
    %1467 = vdwg.mxu0
    %v1468 = vadd.f32 %v1463, %v73
    %v1469 = vtanh.pop %v1468
    %v1470 = vmul.f32 %v1469, 0.5
    %v1471 = vadd.f32 %v1470, 0.5
    %v1472 = vmul.f32 %v1471, %v1273
    %1474 = vrot.lane.b32.xlu0 %v1469, 64
    %v1475 = vpop.permute.xlu0 %1474
    %v1477 = vmul.f32 %v1471, %v1475
    %1479 = vrot.lane.b32.xlu0 %v1477, 32
    %v1480 = vpop.permute.xlu0 %1479
    %v1482 = vadd.f32 %v1472, %v1480
    %v1483 = vtanh.pop %v1482
    %1485 = vrot.lane.b32.xlu0 %v1483, 64
    %v1486 = vpop.permute.xlu0 %1485
    %v1488 = vmul.f32 %v1471, %v1486
    %s1489 = sld [smem:[#allocation4 + $0x7]]
    %s1490 = scalar_lea.vmem [#allocation5], %s1489
    %v1491 = vld [vmem:[%s1490] sm:$0x1]
    %1492 = vst [vmem:[#allocation2] sm:$0x1] %v1491
    %s1493 = sld [smem:[#allocation4 + $0x87]]
    %s1494 = scalar_lea.vmem [#allocation5], %s1493
    %v1495 = vld [vmem:[%s1494] sm:$0x1]
    %1496 = vst [vmem:[#allocation2 + $0x1] sm:$0x1] %v1495
    %s1497 = sld [smem:[#allocation4 + $0x107]]
    %s1498 = scalar_lea.vmem [#allocation5], %s1497
    %v1499 = vld [vmem:[%s1498] sm:$0x1]
    %1500 = vst [vmem:[#allocation2 + $0x2] sm:$0x1] %v1499
    %s1501 = sld [smem:[#allocation4 + $0x187]]
    %s1502 = scalar_lea.vmem [#allocation5], %s1501
    %v1503 = vld [vmem:[%s1502] sm:$0x1]
    %1504 = vst [vmem:[#allocation2 + $0x3] sm:$0x1] %v1503
    %s1505 = sld [smem:[#allocation4 + $0x207]]
    %s1506 = scalar_lea.vmem [#allocation5], %s1505
    %v1507 = vld [vmem:[%s1506] sm:$0x1]
    %1508 = vst [vmem:[#allocation2 + $0x4] sm:$0x1] %v1507
    %s1509 = sld [smem:[#allocation4 + $0x287]]
    %s1510 = scalar_lea.vmem [#allocation5], %s1509
    %v1511 = vld [vmem:[%s1510] sm:$0x1]
    %1512 = vst [vmem:[#allocation2 + $0x5] sm:$0x1] %v1511
    %s1513 = sld [smem:[#allocation4 + $0x307]]
    %s1514 = scalar_lea.vmem [#allocation5], %s1513
    %v1515 = vld [vmem:[%s1514] sm:$0x1]
    %1516 = vst [vmem:[#allocation2 + $0x6] sm:$0x1] %v1515
    %s1517 = sld [smem:[#allocation4 + $0x387]]
    %s1518 = scalar_lea.vmem [#allocation5], %s1517
    %v1519 = vld [vmem:[%s1518] sm:$0x1]
    %1520 = vst [vmem:[#allocation2 + $0x7] sm:$0x1] %v1519
    %v1521 = vld [vmem:[#allocation2] sm:$0xff]
    %v1522 = vpack.c.bf16 %v1488, %v1488
    %1524 = vrot.lane.b32.xlu0 %v1522, 32
    %v1525 = vpop.permute.xlu0 %1524
    %v1527 = vsel %vm147, %v1525, 0
    %1529 = vmatprep.subr.bf16.mxu0 0
    %1530 = vmatpush1.bf16.msra.mxu0 0
    %1531 = vmatprep.subr.bf16.mxu0 0
    %1532 = vmatpush1.bf16.msra.mxu0 0
    %1533 = vmatprep.subr.bf16.mxu0 0
    %1534 = vmatpush1.bf16.msra.mxu0 0
    %1535 = vmatprep.subr.bf16.mxu0 0
    %1536 = vmatpush1.bf16.msra.mxu0 0
    %1537 = vmatprep.subr.bf16.mxu0 0
    %1538 = vmatpush1.bf16.msra.mxu0 0
    %1539 = vmatprep.subr.bf16.mxu0 0
    %1540 = vmatpush1.bf16.msra.mxu0 0
    %1541 = vmatprep.subr.bf16.mxu0 0
    %1542 = vmatpush1.bf16.msra.mxu0 %v257
    %1543 = vmatprep.subr.bf16.mxu0 0
    %1544 = vmatpush1.bf16.msra.mxu0 %v256
    %1545 = vmatprep.subr.bf16.mxu0 0
    %1546 = vmatpush2.bf16.msra.mxu0 0
    %1547 = vmatprep.subr.bf16.mxu0 0
    %1548 = vmatpush2.bf16.msra.mxu0 0
    %1549 = vmatprep.subr.bf16.mxu0 0
    %1550 = vmatpush2.bf16.msra.mxu0 0
    %1551 = vmatprep.subr.bf16.mxu0 0
    %1552 = vmatpush2.bf16.msra.mxu0 0
    %1553 = vmatprep.subr.bf16.mxu0 0
    %1554 = vmatpush2.bf16.msra.mxu0 0
    %1555 = vmatprep.subr.bf16.mxu0 0
    %1556 = vmatpush2.bf16.msra.mxu0 0
    %1557 = vmatprep.subr.bf16.mxu0 0
    %1558 = vmatpush2.bf16.msra.mxu0 0
    %1559 = vmatprep.subr.bf16.mxu0 0
    %1560 = vmatpush2.bf16.msra.mxu0 0
    %1561 = vmatprep.mubr.bf16.mxu0 0
    %1562 = vmatmul.mubr.bf16.gmra.mxu0 %v1527
    %v1563 = vpop.f32.mrf.mxu0
    %v1564 = vadd.f32 0.0, %v1563
    %v1565 = vpop.f32.mrf.mxu0
    %v1566 = vpop.f32.mrf.mxu0
    %v1567 = vpop.f32.mrf.mxu0
    %1568 = vdwg.mxu0
    %1569 = vmatprep.subr.bf16.mxu0 0
    %1570 = vmatpush1.bf16.msra.mxu0 0
    %1571 = vmatprep.subr.bf16.mxu0 0
    %1572 = vmatpush1.bf16.msra.mxu0 0
    %1573 = vmatprep.subr.bf16.mxu0 0
    %1574 = vmatpush1.bf16.msra.mxu0 0
    %1575 = vmatprep.subr.bf16.mxu0 0
    %1576 = vmatpush1.bf16.msra.mxu0 0
    %1577 = vmatprep.subr.bf16.mxu0 0
    %1578 = vmatpush1.bf16.msra.mxu0 0
    %1579 = vmatprep.subr.bf16.mxu0 0
    %1580 = vmatpush1.bf16.msra.mxu0 0
    %1581 = vmatprep.subr.bf16.mxu0 0
    %1582 = vmatpush1.bf16.msra.mxu0 %v312
    %1583 = vmatprep.subr.bf16.mxu0 0
    %1584 = vmatpush1.bf16.msra.mxu0 %v311
    %1585 = vmatprep.subr.bf16.mxu0 0
    %1586 = vmatpush2.bf16.msra.mxu0 0
    %1587 = vmatprep.subr.bf16.mxu0 0
    %1588 = vmatpush2.bf16.msra.mxu0 0
    %1589 = vmatprep.subr.bf16.mxu0 0
    %1590 = vmatpush2.bf16.msra.mxu0 0
    %1591 = vmatprep.subr.bf16.mxu0 0
    %1592 = vmatpush2.bf16.msra.mxu0 0
    %1593 = vmatprep.subr.bf16.mxu0 0
    %1594 = vmatpush2.bf16.msra.mxu0 0
    %1595 = vmatprep.subr.bf16.mxu0 0
    %1596 = vmatpush2.bf16.msra.mxu0 0
    %1597 = vmatprep.subr.bf16.mxu0 0
    %1598 = vmatpush2.bf16.msra.mxu0 0
    %1599 = vmatprep.subr.bf16.mxu0 0
    %1600 = vmatpush2.bf16.msra.mxu0 0
    %1601 = vmatprep.mubr.bf16.mxu0 0
    %1602 = vmatmul.mubr.bf16.gmra.mxu0 %v1426
    %v1603 = vpop.f32.mrf.mxu0
    %v1604 = vadd.f32 0.0, %v1603
    %v1605 = vpop.f32.mrf.mxu0
    %v1606 = vpop.f32.mrf.mxu0
    %v1607 = vpop.f32.mrf.mxu0
    %1608 = vdwg.mxu0
    %v1609 = vadd.f32 %v1521, %v1604
    %v1610 = vtanh.pop %v1609
    %v1611 = vmul.f32 %v1610, 0.5
    %v1612 = vadd.f32 %v1611, 0.5
    %v1613 = vmul.f32 %v1612, %v1414
    %1615 = vrot.lane.b32.xlu0 %v1610, 64
    %v1616 = vpop.permute.xlu0 %1615
    %v1618 = vmul.f32 %v1612, %v1616
    %1620 = vrot.lane.b32.xlu0 %v1618, 32
    %v1621 = vpop.permute.xlu0 %1620
    %v1623 = vadd.f32 %v1613, %v1621
    %v1624 = vtanh.pop %v1623
    %1626 = vrot.lane.b32.xlu0 %v1624, 64
    %v1627 = vpop.permute.xlu0 %1626
    %v1629 = vmul.f32 %v1612, %v1627
    %v1630 = vpack.c.bf16 %v1629, %v1629
    %1632 = vrot.lane.b32.xlu0 %v1630, 32
    %v1633 = vpop.permute.xlu0 %1632
    %v1635 = vsel %vm147, %v1633, 0
    %1637 = vmatprep.subr.bf16.mxu0 0
    %1638 = vmatpush1.bf16.msra.mxu0 0
    %1639 = vmatprep.subr.bf16.mxu0 0
    %1640 = vmatpush1.bf16.msra.mxu0 0
    %1641 = vmatprep.subr.bf16.mxu0 0
    %1642 = vmatpush1.bf16.msra.mxu0 0
    %1643 = vmatprep.subr.bf16.mxu0 0
    %1644 = vmatpush1.bf16.msra.mxu0 0
    %1645 = vmatprep.subr.bf16.mxu0 0
    %1646 = vmatpush1.bf16.msra.mxu0 0
    %1647 = vmatprep.subr.bf16.mxu0 0
    %1648 = vmatpush1.bf16.msra.mxu0 0
    %1649 = vmatprep.subr.bf16.mxu0 0
    %1650 = vmatpush1.bf16.msra.mxu0 %v144
    %1651 = vmatprep.subr.bf16.mxu0 0
    %1652 = vmatpush1.bf16.msra.mxu0 %v143
    %1653 = vmatprep.subr.bf16.mxu0 0
    %1654 = vmatpush2.bf16.msra.mxu0 0
    %1655 = vmatprep.subr.bf16.mxu0 0
    %1656 = vmatpush2.bf16.msra.mxu0 0
    %1657 = vmatprep.subr.bf16.mxu0 0
    %1658 = vmatpush2.bf16.msra.mxu0 0
    %1659 = vmatprep.subr.bf16.mxu0 0
    %1660 = vmatpush2.bf16.msra.mxu0 0
    %1661 = vmatprep.subr.bf16.mxu0 0
    %1662 = vmatpush2.bf16.msra.mxu0 0
    %1663 = vmatprep.subr.bf16.mxu0 0
    %1664 = vmatpush2.bf16.msra.mxu0 0
    %1665 = vmatprep.subr.bf16.mxu0 0
    %1666 = vmatpush2.bf16.msra.mxu0 0
    %1667 = vmatprep.subr.bf16.mxu0 0
    %1668 = vmatpush2.bf16.msra.mxu0 0
    %1669 = vmatprep.mubr.bf16.mxu0 0
    %1670 = vmatmul.mubr.bf16.gmra.mxu0 %v1635
    %v1671 = vpop.f32.mrf.mxu0
    %v1672 = vadd.f32 %v1564, %v1671
    %v1673 = vpop.f32.mrf.mxu0
    %v1674 = vpop.f32.mrf.mxu0
    %v1675 = vpop.f32.mrf.mxu0
    %1676 = vdwg.mxu0
    %v1677 = vadd.f32 %v1672, %v73
    %v1678 = vtanh.pop %v1677
    %v1679 = vmul.f32 %v1678, 0.5
    %v1680 = vadd.f32 %v1679, 0.5
    %v1681 = vmul.f32 %v1680, %v1482
    %1683 = vrot.lane.b32.xlu0 %v1678, 64
    %v1684 = vpop.permute.xlu0 %1683
    %v1686 = vmul.f32 %v1680, %v1684
    %1688 = vrot.lane.b32.xlu0 %v1686, 32
    %v1689 = vpop.permute.xlu0 %1688
    %v1691 = vadd.f32 %v1681, %v1689
    %v1692 = vtanh.pop %v1691
    %1694 = vrot.lane.b32.xlu0 %v1692, 64
    %v1695 = vpop.permute.xlu0 %1694
    %v1697 = vmul.f32 %v1680, %v1695
    %v1698 = vpack.c.bf16 %v1697, %v1697
    %1700 = vrot.lane.b32.xlu0 %v1698, 32
    %v1701 = vpop.permute.xlu0 %1700
    %v1706 = vunpack.c.l.b16 %v65
    %v1707 = vunpack.c.l.b16 %v66
    %v1708 = vunpack.c.l.b16 %v67
    %v1709 = vunpack.c.l.b16 %v68
    %v1710 = vpack.c.b16 %v1707, %v1706
    %v1711 = vpack.c.b16 %v1709, %v1708
    %v1715 = vsel %vm147, %v1701, 0
    %1717 = vmatprep.subr.bf16.mxu0 0
    %1718 = vmatpush1.bf16.msra.mxu0 0
    %1719 = vmatprep.subr.bf16.mxu0 0
    %1720 = vmatpush1.bf16.msra.mxu0 0
    %1721 = vmatprep.subr.bf16.mxu0 0
    %1722 = vmatpush1.bf16.msra.mxu0 0
    %1723 = vmatprep.subr.bf16.mxu0 0
    %1724 = vmatpush1.bf16.msra.mxu0 0
    %1725 = vmatprep.subr.bf16.mxu0 0
    %1726 = vmatpush1.bf16.msra.mxu0 0
    %1727 = vmatprep.subr.bf16.mxu0 0
    %1728 = vmatpush1.bf16.msra.mxu0 0
    %1729 = vmatprep.subr.bf16.mxu0 0
    %1730 = vmatpush1.bf16.msra.mxu0 %v1711
    %1731 = vmatprep.subr.bf16.mxu0 0
    %1732 = vmatpush1.bf16.msra.mxu0 %v1710
    %1733 = vmatprep.subr.bf16.mxu0 0
    %1734 = vmatpush2.bf16.msra.mxu0 0
    %1735 = vmatprep.subr.bf16.mxu0 0
    %1736 = vmatpush2.bf16.msra.mxu0 0
    %1737 = vmatprep.subr.bf16.mxu0 0
    %1738 = vmatpush2.bf16.msra.mxu0 0
    %1739 = vmatprep.subr.bf16.mxu0 0
    %1740 = vmatpush2.bf16.msra.mxu0 0
    %1741 = vmatprep.subr.bf16.mxu0 0
    %1742 = vmatpush2.bf16.msra.mxu0 0
    %1743 = vmatprep.subr.bf16.mxu0 0
    %1744 = vmatpush2.bf16.msra.mxu0 0
    %1745 = vmatprep.subr.bf16.mxu0 0
    %1746 = vmatpush2.bf16.msra.mxu0 0
    %1747 = vmatprep.subr.bf16.mxu0 0
    %1748 = vmatpush2.bf16.msra.mxu0 0
    %1749 = vmatprep.mubr.bf16.mxu0 0
    %1750 = vmatmul.mubr.bf16.gmra.mxu0 %v1715
    %v1751 = vpop.f32.mrf.mxu0
    %v1752 = vadd.f32 %v77, %v1751
    %v1753 = vpop.f32.mrf.mxu0
    %v1754 = vpop.f32.mrf.mxu0
    %v1755 = vpop.f32.mrf.mxu0
    %1756 = vdwg.mxu0
    %1757 = vst [vmem:[%s4] sm:$0xff] %v1752
    // Predicated region
    $region22: #{emotion_rnn_forward.1} parent=1 // pred_check
      _
    $region23: #{emotion_rnn_forward.1} parent=1 // pred_check_branch
      %1759 = sbr.rel (0) target = $region25
    $region24: #{emotion_rnn_forward.1} parent=1 // pred_region
      _
    $region25: #{emotion_rnn_forward.1} parent=1 // pred_fallthru
      _
    // Predicated region
    $region26: #{emotion_rnn_forward.1} parent=1 // pred_check
      _
    $region27: #{emotion_rnn_forward.1} parent=1 // pred_check_branch
      %1761 = sbr.rel (0) target = $region29
    $region28: #{emotion_rnn_forward.1} parent=1 // pred_region
      _
    $region29: #{emotion_rnn_forward.1} parent=1 // pred_fallthru
      _
    %1762 = vsyncpa [#allocation6], 1
    %1763 = vsyncpa [#allocation8], 1

</llo_original>
